<compile_context>
chip_gen: v7x
topology: tpu7x:2x2x1
jax: 0.10.0
libtpu: 0.0.40
codegen_flags: <defaults>
</compile_context>

<pallas_src>
import math

import jax
import jax.numpy as jnp
from jax import lax
from jax.experimental import pallas as pl
from jax.experimental.pallas import tpu as pltpu

# ---- synthetic model configuration (downscaled) -----------------------------
VOCAB = 512
MAX_LEN = 16          # tokenizer max_length (downscaled from 128)
HIDDEN = 32
FFN = 64
NUM_HEADS = 4
HEAD_DIM = HIDDEN // NUM_HEADS
NUM_LAYERS = 2
LN_EPS = 1e-12
CLS_ID = 1
PAD_ID = 0


# ---- in-kernel helpers -------------------------------------------------------
def _layernorm(x, gamma, beta):
    mu = jnp.mean(x, axis=-1, keepdims=True)
    var = jnp.mean((x - mu) ** 2, axis=-1, keepdims=True)
    return (x - mu) * lax.rsqrt(var + LN_EPS) * gamma + beta


def _gelu(x):
    # TODO(synk): tanh-approx GELU; HF checkpoint may use exact erf GELU.
    c = math.sqrt(2.0 / math.pi)
    return 0.5 * x * (1.0 + jnp.tanh(c * (x + 0.044715 * x * x * x)))


# ---- fused Pallas kernel -----------------------------------------------------
def fused_judge_kernel(x_ref, bias_ref,
                       eg_ref, eb_ref,
                       wqkv_ref, bqkv_ref, wo_ref, bo_ref, ln1g_ref, ln1b_ref,
                       w1_ref, b1_ref, w2_ref, b2_ref, ln2g_ref, ln2b_ref,
                       wp_ref, bp_ref, wc_ref, bc_ref,
                       o_ref):
    S, H = MAX_LEN, HIDDEN
    bias = bias_ref[0]                                      # (1, S) additive key mask
    scale = 1.0 / math.sqrt(HEAD_DIM)

    # embedding LayerNorm (prologue, folded into the fused kernel)
    x = _layernorm(x_ref[0], eg_ref[...], eb_ref[...])      # (S, H) float32

    # statically unrolled layer loop; all layer weights are resident in VMEM
    for li in range(NUM_LAYERS):
        # fused QKV projection: one (S,H)x(H,3H) matmul instead of three
        qkv = (jnp.dot(x, wqkv_ref[li], preferred_element_type=jnp.float32)
               + bqkv_ref[li])                              # (S, 3H)

        wo = wo_ref[li]                                     # (H, H)
        # accumulate attention output projection per head: no transposes, no concat
        attn = jnp.broadcast_to(bo_ref[li], (S, H)).astype(jnp.float32)
        for h in range(NUM_HEADS):                          # static unroll (4 heads)
            lo = h * HEAD_DIM
            qh = qkv[:, lo:lo + HEAD_DIM]                   # (S, HD)
            kh = qkv[:, H + lo:H + lo + HEAD_DIM]           # (S, HD)
            vh = qkv[:, 2 * H + lo:2 * H + lo + HEAD_DIM]   # (S, HD)

            # q @ k^T via contraction dims (no explicit XLU transpose)
            s = lax.dot_general(qh, kh, (((1,), (1,)), ((), ())),
                                preferred_element_type=jnp.float32)
            s = s * scale + bias                            # (S, S)
            m = jnp.max(s, axis=-1, keepdims=True)
            p = jnp.exp(s - m)
            p = p * pl.reciprocal(jnp.sum(p, axis=-1, keepdims=True), approx=True)

            ctx = jnp.dot(p, vh, preferred_element_type=jnp.float32)     # (S, HD)
            attn = attn + jnp.dot(ctx, wo[lo:lo + HEAD_DIM, :],
                                  preferred_element_type=jnp.float32)    # (S, H)

        h1 = _layernorm(x + attn, ln1g_ref[li], ln1b_ref[li])
        ff = _gelu(jnp.dot(h1, w1_ref[li], preferred_element_type=jnp.float32)
                   + b1_ref[li])
        ff = jnp.dot(ff, w2_ref[li], preferred_element_type=jnp.float32) + b2_ref[li]
        x = _layernorm(h1 + ff, ln2g_ref[li], ln2b_ref[li])

    # pooler (dense+tanh on [CLS]) + classifier head (epilogue, same kernel)
    pooled = jnp.tanh(jnp.dot(x[0:1, :], wp_ref[...],
                              preferred_element_type=jnp.float32) + bp_ref[...])
    logit = jnp.dot(pooled, wc_ref[...],
                    preferred_element_type=jnp.float32) + bc_ref[...]    # (1, 1)
    o_ref[0] = logit


# ---- pallas_call wrapper -----------------------------------------------------
def run_fused_judge(x, mask_bias, p):
    B, S, H = x.shape
    weights = (p["emb_ln_g"], p["emb_ln_b"],
               p["wqkv"], p["bqkv"], p["wo"], p["bo"], p["ln1_g"], p["ln1_b"],
               p["w1"], p["b1"], p["w2"], p["b2"], p["ln2_g"], p["ln2_b"],
               p["pool_w"], p["pool_b"], p["cls_w"], p["cls_b"])

    def const_spec(w):
        nd = w.ndim
        return pl.BlockSpec(w.shape, lambda b, _nd=nd: (0,) * _nd)

    in_specs = ([pl.BlockSpec((1, S, H), lambda b: (b, 0, 0)),
                 pl.BlockSpec((1, 1, S), lambda b: (b, 0, 0))]
                + [const_spec(w) for w in weights])

    out = pl.pallas_call(
        fused_judge_kernel,
        out_shape=jax.ShapeDtypeStruct((B, 1, 1), jnp.float32),
        grid=(B,),
        in_specs=in_specs,
        out_specs=pl.BlockSpec((1, 1, 1), lambda b: (b, 0, 0)),
        compiler_params=pltpu.CompilerParams(
            dimension_semantics=("parallel",)),   # v7x: one sequence per TensorCore
    )(x, mask_bias, *weights)
    return out


# ---- parameters (deterministic synthetic init, per-layer weights stacked) ----
def init_params(key):
    def dense(k, shape):
        return jax.random.normal(k, shape, jnp.float32) * 0.02

    keys = jax.random.split(key, 8)
    L = NUM_LAYERS
    params = {
        "tok_emb": dense(keys[0], (VOCAB, HIDDEN)),
        "pos_emb": dense(keys[1], (MAX_LEN, HIDDEN)),
        "emb_ln_g": jnp.ones((1, HIDDEN), jnp.float32),
        "emb_ln_b": jnp.zeros((1, HIDDEN), jnp.float32),
        # stacked per-layer weights (layer axis leading); QKV fused to (H, 3H)
        "wqkv": dense(keys[2], (L, HIDDEN, 3 * HIDDEN)),
        "bqkv": jnp.zeros((L, 1, 3 * HIDDEN), jnp.float32),
        "wo": dense(keys[3], (L, HIDDEN, HIDDEN)),
        "bo": jnp.zeros((L, 1, HIDDEN), jnp.float32),
        "ln1_g": jnp.ones((L, 1, HIDDEN), jnp.float32),
        "ln1_b": jnp.zeros((L, 1, HIDDEN), jnp.float32),
        "w1": dense(keys[4], (L, HIDDEN, FFN)),
        "b1": jnp.zeros((L, 1, FFN), jnp.float32),
        "w2": dense(keys[5], (L, FFN, HIDDEN)),
        "b2": jnp.zeros((L, 1, HIDDEN), jnp.float32),
        "ln2_g": jnp.ones((L, 1, HIDDEN), jnp.float32),
        "ln2_b": jnp.zeros((L, 1, HIDDEN), jnp.float32),
        "pool_w": dense(keys[6], (HIDDEN, HIDDEN)),
        "pool_b": jnp.zeros((1, HIDDEN), jnp.float32),
        "cls_w": dense(keys[7], (HIDDEN, 1)),
        "cls_b": jnp.zeros((1, 1), jnp.float32),
    }
    return params


# ---- glue: tokenizer + forward ------------------------------------------------
# TODO(synk): the real HF tokenizer/checkpoint cannot be loaded; this is a
# deterministic synthetic tokenizer with the same pad/truncate semantics.
def simple_tokenize(texts):
    ids, mask = [], []
    for t in texts:
        toks = [CLS_ID] + [(ord(c) * 131 + 7) % (VOCAB - 2) + 2 for c in t]
        toks = toks[:MAX_LEN]
        m = [1] * len(toks)
        toks += [PAD_ID] * (MAX_LEN - len(toks))
        m += [0] * (MAX_LEN - len(m))
        ids.append(toks)
        mask.append(m)
    return jnp.asarray(ids, jnp.int32), jnp.asarray(mask, jnp.int32)


@jax.jit
def _device_forward(params, token_ids, attention_mask):
    tok = jnp.take(params["tok_emb"], token_ids, axis=0)        # (B, S, H) gather glue
    pos = params["pos_emb"][None, :, :]                         # (1, S, H)
    x = (tok + pos).astype(jnp.float32)
    mask_bias = ((attention_mask.astype(jnp.float32) - 1.0) * 1e9)[:, None, :]  # (B,1,S)
    logits = run_fused_judge(x, mask_bias, params)              # (B, 1, 1)
    return logits[:, 0, 0]                                      # squeeze -> (B,)


def lingo_judge_forward(params, question, references, prediction):
    texts = [f"[CLS]\nQuestion: {question}\nAnswer: {a_gt}\nStudent: {prediction}"
             for a_gt in references]
    token_ids, attention_mask = simple_tokenize(texts)          # (B, S) each
    return _device_forward(params, token_ids, attention_mask)


if __name__ == "__main__":
    params = init_params(jax.random.PRNGKey(0))

    question = "Is the traffic light green?"
    references = ["yes, the light is green", "the traffic light ahead is green"]
    prediction = "yes it is green"

    scores = lingo_judge_forward(params, question, references, prediction)
    scores = jax.block_until_ready(scores)
    assert scores.shape == (len(references),)
    assert scores.dtype == jnp.float32
    print("KERNEL_OK")
</pallas_src>

<mosaic_0001>
module attributes {stable_mosaic.version = 11 : i64} {
  func.func @fused_judge_kernel(%arg0: i32, %arg1: memref<1x16x32xf32, #tpu.memory_space<vmem>>, %arg2: memref<1x1x16xf32, #tpu.memory_space<vmem>>, %arg3: memref<1x32xf32, #tpu.memory_space<vmem>>, %arg4: memref<1x32xf32, #tpu.memory_space<vmem>>, %arg5: memref<2x32x96xf32, #tpu.memory_space<vmem>>, %arg6: memref<2x1x96xf32, #tpu.memory_space<vmem>>, %arg7: memref<2x32x32xf32, #tpu.memory_space<vmem>>, %arg8: memref<2x1x32xf32, #tpu.memory_space<vmem>>, %arg9: memref<2x1x32xf32, #tpu.memory_space<vmem>>, %arg10: memref<2x1x32xf32, #tpu.memory_space<vmem>>, %arg11: memref<2x32x64xf32, #tpu.memory_space<vmem>>, %arg12: memref<2x1x64xf32, #tpu.memory_space<vmem>>, %arg13: memref<2x64x32xf32, #tpu.memory_space<vmem>>, %arg14: memref<2x1x32xf32, #tpu.memory_space<vmem>>, %arg15: memref<2x1x32xf32, #tpu.memory_space<vmem>>, %arg16: memref<2x1x32xf32, #tpu.memory_space<vmem>>, %arg17: memref<32x32xf32, #tpu.memory_space<vmem>>, %arg18: memref<1x32xf32, #tpu.memory_space<vmem>>, %arg19: memref<32x1xf32, #tpu.memory_space<vmem>>, %arg20: memref<1x1xf32, #tpu.memory_space<vmem>>, %arg21: memref<1x1x1xf32, #tpu.memory_space<vmem>>) attributes {dimension_semantics = [#tpu.dimension_semantics<parallel>], iteration_bounds = array<i64: 2>, scalar_prefetch = 0 : i64, scratch_operands = 0 : i64, tpu.core_type = #tpu.core_type<tc>, window_params = [{transform_indices = @transform_0, window_bounds = array<i64: 1, 16, 32>}, {transform_indices = @transform_1, window_bounds = array<i64: 1, 1, 16>}, {pipeline_mode = #tpu.pipeline_mode<synchronous>, transform_indices = @transform_2, window_bounds = array<i64: 1, 32>}, {pipeline_mode = #tpu.pipeline_mode<synchronous>, transform_indices = @transform_3, window_bounds = array<i64: 1, 32>}, {pipeline_mode = #tpu.pipeline_mode<synchronous>, transform_indices = @transform_4, window_bounds = array<i64: 2, 32, 96>}, {pipeline_mode = #tpu.pipeline_mode<synchronous>, transform_indices = @transform_5, window_bounds = array<i64: 2, 1, 96>}, {pipeline_mode = #tpu.pipeline_mode<synchronous>, transform_indices = @transform_6, window_bounds = array<i64: 2, 32, 32>}, {pipeline_mode = #tpu.pipeline_mode<synchronous>, transform_indices = @transform_7, window_bounds = array<i64: 2, 1, 32>}, {pipeline_mode = #tpu.pipeline_mode<synchronous>, transform_indices = @transform_8, window_bounds = array<i64: 2, 1, 32>}, {pipeline_mode = #tpu.pipeline_mode<synchronous>, transform_indices = @transform_9, window_bounds = array<i64: 2, 1, 32>}, {pipeline_mode = #tpu.pipeline_mode<synchronous>, transform_indices = @transform_10, window_bounds = array<i64: 2, 32, 64>}, {pipeline_mode = #tpu.pipeline_mode<synchronous>, transform_indices = @transform_11, window_bounds = array<i64: 2, 1, 64>}, {pipeline_mode = #tpu.pipeline_mode<synchronous>, transform_indices = @transform_12, window_bounds = array<i64: 2, 64, 32>}, {pipeline_mode = #tpu.pipeline_mode<synchronous>, transform_indices = @transform_13, window_bounds = array<i64: 2, 1, 32>}, {pipeline_mode = #tpu.pipeline_mode<synchronous>, transform_indices = @transform_14, window_bounds = array<i64: 2, 1, 32>}, {pipeline_mode = #tpu.pipeline_mode<synchronous>, transform_indices = @transform_15, window_bounds = array<i64: 2, 1, 32>}, {pipeline_mode = #tpu.pipeline_mode<synchronous>, transform_indices = @transform_16, window_bounds = array<i64: 32, 32>}, {pipeline_mode = #tpu.pipeline_mode<synchronous>, transform_indices = @transform_17, window_bounds = array<i64: 1, 32>}, {pipeline_mode = #tpu.pipeline_mode<synchronous>, transform_indices = @transform_18, window_bounds = array<i64: 32, 1>}, {pipeline_mode = #tpu.pipeline_mode<synchronous>, transform_indices = @transform_19, window_bounds = array<i64: 1, 1>}, {transform_indices = @transform_20, window_bounds = array<i64: 1, 1, 1>}]} {
    %c0 = arith.constant 0 : index
    %c0_0 = arith.constant 0 : index
    %c0_1 = arith.constant 0 : index
    %0 = vector.load %arg2[%c0, %c0_0, %c0_1] : memref<1x1x16xf32, #tpu.memory_space<vmem>>, vector<1x1x16xf32>
    %1 = vector.shape_cast %0 : vector<1x1x16xf32> to vector<1x16xf32>
    %c0_2 = arith.constant 0 : index
    %c0_3 = arith.constant 0 : index
    %c0_4 = arith.constant 0 : index
    %2 = vector.load %arg1[%c0_2, %c0_3, %c0_4] : memref<1x16x32xf32, #tpu.memory_space<vmem>>, vector<1x16x32xf32>
    %3 = vector.shape_cast %2 : vector<1x16x32xf32> to vector<16x32xf32>
    %c0_5 = arith.constant 0 : index
    %c0_6 = arith.constant 0 : index
    %4 = vector.load %arg3[%c0_5, %c0_6] : memref<1x32xf32, #tpu.memory_space<vmem>>, vector<1x32xf32>
    %c0_7 = arith.constant 0 : index
    %c0_8 = arith.constant 0 : index
    %5 = vector.load %arg4[%c0_7, %c0_8] : memref<1x32xf32, #tpu.memory_space<vmem>>, vector<1x32xf32>
    %cst = arith.constant dense<0.000000e+00> : vector<16xf32>
    %6 = vector.multi_reduction <add>, %3, %cst [1] : vector<16x32xf32> to vector<16xf32>
    %7 = vector.shape_cast %6 : vector<16xf32> to vector<16x1xf32>
    %cst_9 = arith.constant 3.200000e+01 : f32
    %8 = vector.broadcast %cst_9 : f32 to vector<16x1xf32>
    %9 = arith.divf %7, %8 : vector<16x1xf32>
    %10 = vector.broadcast %9 : vector<16x1xf32> to vector<16x32xf32>
    %11 = arith.subf %3, %10 : vector<16x32xf32>
    %12 = arith.mulf %11, %11 : vector<16x32xf32>
    %cst_10 = arith.constant dense<0.000000e+00> : vector<16xf32>
    %13 = vector.multi_reduction <add>, %12, %cst_10 [1] : vector<16x32xf32> to vector<16xf32>
    %14 = vector.shape_cast %13 : vector<16xf32> to vector<16x1xf32>
    %cst_11 = arith.constant 3.200000e+01 : f32
    %15 = vector.broadcast %cst_11 : f32 to vector<16x1xf32>
    %16 = arith.divf %14, %15 : vector<16x1xf32>
    %17 = vector.broadcast %9 : vector<16x1xf32> to vector<16x32xf32>
    %18 = arith.subf %3, %17 : vector<16x32xf32>
    %cst_12 = arith.constant 9.99999996E-13 : f32
    %19 = vector.broadcast %cst_12 : f32 to vector<16x1xf32>
    %20 = arith.addf %16, %19 : vector<16x1xf32>
    %21 = math.rsqrt %20 : vector<16x1xf32>
    %22 = vector.broadcast %21 : vector<16x1xf32> to vector<16x32xf32>
    %23 = arith.mulf %18, %22 : vector<16x32xf32>
    %24 = vector.broadcast %4 : vector<1x32xf32> to vector<16x32xf32>
    %25 = arith.mulf %23, %24 : vector<16x32xf32>
    %26 = vector.broadcast %5 : vector<1x32xf32> to vector<16x32xf32>
    %27 = arith.addf %25, %26 : vector<16x32xf32>
    %c0_13 = arith.constant 0 : index
    %c0_14 = arith.constant 0 : index
    %c0_15 = arith.constant 0 : index
    %28 = vector.load %arg5[%c0_13, %c0_14, %c0_15] : memref<2x32x96xf32, #tpu.memory_space<vmem>>, vector<1x32x96xf32>
    %29 = vector.shape_cast %28 : vector<1x32x96xf32> to vector<32x96xf32>
    %cst_16 = arith.constant dense<0.000000e+00> : vector<16x96xf32>
    %30 = tpu.matmul %27, %29, %cst_16 {dimension_numbers = #tpu.dot_dimension_numbers<[1], [0], [0], [1], [0, 0, 1, 1], [], []>} : vector<16x32xf32>, vector<32x96xf32>, vector<16x96xf32> -> vector<16x96xf32>
    %c0_17 = arith.constant 0 : index
    %c0_18 = arith.constant 0 : index
    %c0_19 = arith.constant 0 : index
    %31 = vector.load %arg6[%c0_17, %c0_18, %c0_19] : memref<2x1x96xf32, #tpu.memory_space<vmem>>, vector<1x1x96xf32>
    %32 = vector.shape_cast %31 : vector<1x1x96xf32> to vector<1x96xf32>
    %33 = vector.broadcast %32 : vector<1x96xf32> to vector<16x96xf32>
    %34 = arith.addf %30, %33 : vector<16x96xf32>
    %c0_20 = arith.constant 0 : index
    %c0_21 = arith.constant 0 : index
    %c0_22 = arith.constant 0 : index
    %35 = vector.load %arg7[%c0_20, %c0_21, %c0_22] : memref<2x32x32xf32, #tpu.memory_space<vmem>>, vector<1x32x32xf32>
    %36 = vector.shape_cast %35 : vector<1x32x32xf32> to vector<32x32xf32>
    %c0_23 = arith.constant 0 : index
    %c0_24 = arith.constant 0 : index
    %c0_25 = arith.constant 0 : index
    %37 = vector.load %arg8[%c0_23, %c0_24, %c0_25] : memref<2x1x32xf32, #tpu.memory_space<vmem>>, vector<1x1x32xf32>
    %38 = vector.shape_cast %37 : vector<1x1x32xf32> to vector<1x32xf32>
    %39 = vector.shape_cast %38 : vector<1x32xf32> to vector<1x32xf32>
    %40 = vector.broadcast %39 : vector<1x32xf32> to vector<16x32xf32>
    %41 = vector.extract_strided_slice %34 {offsets = [0, 0], sizes = [16, 8], strides = [1, 1]} : vector<16x96xf32> to vector<16x8xf32>
    %42 = vector.extract_strided_slice %34 {offsets = [0, 32], sizes = [16, 8], strides = [1, 1]} : vector<16x96xf32> to vector<16x8xf32>
    %43 = vector.extract_strided_slice %34 {offsets = [0, 64], sizes = [16, 8], strides = [1, 1]} : vector<16x96xf32> to vector<16x8xf32>
    %cst_26 = arith.constant dense<0.000000e+00> : vector<16x16xf32>
    %44 = tpu.matmul %41, %42, %cst_26 {dimension_numbers = #tpu.dot_dimension_numbers<[1], [1], [0], [0], [0, 0, 1, 0], [], []>} : vector<16x8xf32>, vector<16x8xf32>, vector<16x16xf32> -> vector<16x16xf32>
    %cst_27 = arith.constant 0.353553385 : f32
    %45 = vector.broadcast %cst_27 : f32 to vector<16x16xf32>
    %46 = arith.mulf %44, %45 : vector<16x16xf32>
    %47 = vector.broadcast %1 : vector<1x16xf32> to vector<16x16xf32>
    %48 = arith.addf %46, %47 : vector<16x16xf32>
    %cst_28 = arith.constant dense<0xFF800000> : vector<16xf32>
    %49 = vector.multi_reduction <maximumf>, %48, %cst_28 [1] : vector<16x16xf32> to vector<16xf32>
    %50 = vector.shape_cast %49 : vector<16xf32> to vector<16x1xf32>
    %51 = vector.broadcast %50 : vector<16x1xf32> to vector<16x16xf32>
    %52 = arith.subf %48, %51 : vector<16x16xf32>
    %53 = math.exp %52 : vector<16x16xf32>
    %cst_29 = arith.constant dense<0.000000e+00> : vector<16xf32>
    %54 = vector.multi_reduction <add>, %53, %cst_29 [1] : vector<16x16xf32> to vector<16xf32>
    %55 = vector.shape_cast %54 : vector<16xf32> to vector<16x1xf32>
    %56 = tpu.reciprocal %55 {approx = true} : vector<16x1xf32> -> vector<16x1xf32>
    %57 = vector.broadcast %56 : vector<16x1xf32> to vector<16x16xf32>
    %58 = arith.mulf %53, %57 : vector<16x16xf32>
    %cst_30 = arith.constant dense<0.000000e+00> : vector<16x8xf32>
    %59 = tpu.matmul %58, %43, %cst_30 {dimension_numbers = #tpu.dot_dimension_numbers<[1], [0], [0], [1], [0, 0, 1, 1], [], []>} : vector<16x16xf32>, vector<16x8xf32>, vector<16x8xf32> -> vector<16x8xf32>
    %60 = vector.extract_strided_slice %36 {offsets = [0, 0], sizes = [8, 32], strides = [1, 1]} : vector<32x32xf32> to vector<8x32xf32>
    %cst_31 = arith.constant dense<0.000000e+00> : vector<16x32xf32>
    %61 = tpu.matmul %59, %60, %cst_31 {dimension_numbers = #tpu.dot_dimension_numbers<[1], [0], [0], [1], [0, 0, 1, 1], [], []>} : vector<16x8xf32>, vector<8x32xf32>, vector<16x32xf32> -> vector<16x32xf32>
    %62 = arith.addf %40, %61 : vector<16x32xf32>
    %63 = vector.extract_strided_slice %34 {offsets = [0, 8], sizes = [16, 8], strides = [1, 1]} : vector<16x96xf32> to vector<16x8xf32>
    %64 = vector.extract_strided_slice %34 {offsets = [0, 40], sizes = [16, 8], strides = [1, 1]} : vector<16x96xf32> to vector<16x8xf32>
    %65 = vector.extract_strided_slice %34 {offsets = [0, 72], sizes = [16, 8], strides = [1, 1]} : vector<16x96xf32> to vector<16x8xf32>
    %cst_32 = arith.constant dense<0.000000e+00> : vector<16x16xf32>
    %66 = tpu.matmul %63, %64, %cst_32 {dimension_numbers = #tpu.dot_dimension_numbers<[1], [1], [0], [0], [0, 0, 1, 0], [], []>} : vector<16x8xf32>, vector<16x8xf32>, vector<16x16xf32> -> vector<16x16xf32>
    %cst_33 = arith.constant 0.353553385 : f32
    %67 = vector.broadcast %cst_33 : f32 to vector<16x16xf32>
    %68 = arith.mulf %66, %67 : vector<16x16xf32>
    %69 = vector.broadcast %1 : vector<1x16xf32> to vector<16x16xf32>
    %70 = arith.addf %68, %69 : vector<16x16xf32>
    %cst_34 = arith.constant dense<0xFF800000> : vector<16xf32>
    %71 = vector.multi_reduction <maximumf>, %70, %cst_34 [1] : vector<16x16xf32> to vector<16xf32>
    %72 = vector.shape_cast %71 : vector<16xf32> to vector<16x1xf32>
    %73 = vector.broadcast %72 : vector<16x1xf32> to vector<16x16xf32>
    %74 = arith.subf %70, %73 : vector<16x16xf32>
    %75 = math.exp %74 : vector<16x16xf32>
    %cst_35 = arith.constant dense<0.000000e+00> : vector<16xf32>
    %76 = vector.multi_reduction <add>, %75, %cst_35 [1] : vector<16x16xf32> to vector<16xf32>
    %77 = vector.shape_cast %76 : vector<16xf32> to vector<16x1xf32>
    %78 = tpu.reciprocal %77 {approx = true} : vector<16x1xf32> -> vector<16x1xf32>
    %79 = vector.broadcast %78 : vector<16x1xf32> to vector<16x16xf32>
    %80 = arith.mulf %75, %79 : vector<16x16xf32>
    %cst_36 = arith.constant dense<0.000000e+00> : vector<16x8xf32>
    %81 = tpu.matmul %80, %65, %cst_36 {dimension_numbers = #tpu.dot_dimension_numbers<[1], [0], [0], [1], [0, 0, 1, 1], [], []>} : vector<16x16xf32>, vector<16x8xf32>, vector<16x8xf32> -> vector<16x8xf32>
    %82 = vector.extract_strided_slice %36 {offsets = [8, 0], sizes = [8, 32], strides = [1, 1]} : vector<32x32xf32> to vector<8x32xf32>
    %cst_37 = arith.constant dense<0.000000e+00> : vector<16x32xf32>
    %83 = tpu.matmul %81, %82, %cst_37 {dimension_numbers = #tpu.dot_dimension_numbers<[1], [0], [0], [1], [0, 0, 1, 1], [], []>} : vector<16x8xf32>, vector<8x32xf32>, vector<16x32xf32> -> vector<16x32xf32>
    %84 = arith.addf %62, %83 : vector<16x32xf32>
    %85 = vector.extract_strided_slice %34 {offsets = [0, 16], sizes = [16, 8], strides = [1, 1]} : vector<16x96xf32> to vector<16x8xf32>
    %86 = vector.extract_strided_slice %34 {offsets = [0, 48], sizes = [16, 8], strides = [1, 1]} : vector<16x96xf32> to vector<16x8xf32>
    %87 = vector.extract_strided_slice %34 {offsets = [0, 80], sizes = [16, 8], strides = [1, 1]} : vector<16x96xf32> to vector<16x8xf32>
    %cst_38 = arith.constant dense<0.000000e+00> : vector<16x16xf32>
    %88 = tpu.matmul %85, %86, %cst_38 {dimension_numbers = #tpu.dot_dimension_numbers<[1], [1], [0], [0], [0, 0, 1, 0], [], []>} : vector<16x8xf32>, vector<16x8xf32>, vector<16x16xf32> -> vector<16x16xf32>
    %cst_39 = arith.constant 0.353553385 : f32
    %89 = vector.broadcast %cst_39 : f32 to vector<16x16xf32>
    %90 = arith.mulf %88, %89 : vector<16x16xf32>
    %91 = vector.broadcast %1 : vector<1x16xf32> to vector<16x16xf32>
    %92 = arith.addf %90, %91 : vector<16x16xf32>
    %cst_40 = arith.constant dense<0xFF800000> : vector<16xf32>
    %93 = vector.multi_reduction <maximumf>, %92, %cst_40 [1] : vector<16x16xf32> to vector<16xf32>
    %94 = vector.shape_cast %93 : vector<16xf32> to vector<16x1xf32>
    %95 = vector.broadcast %94 : vector<16x1xf32> to vector<16x16xf32>
    %96 = arith.subf %92, %95 : vector<16x16xf32>
    %97 = math.exp %96 : vector<16x16xf32>
    %cst_41 = arith.constant dense<0.000000e+00> : vector<16xf32>
    %98 = vector.multi_reduction <add>, %97, %cst_41 [1] : vector<16x16xf32> to vector<16xf32>
    %99 = vector.shape_cast %98 : vector<16xf32> to vector<16x1xf32>
    %100 = tpu.reciprocal %99 {approx = true} : vector<16x1xf32> -> vector<16x1xf32>
    %101 = vector.broadcast %100 : vector<16x1xf32> to vector<16x16xf32>
    %102 = arith.mulf %97, %101 : vector<16x16xf32>
    %cst_42 = arith.constant dense<0.000000e+00> : vector<16x8xf32>
    %103 = tpu.matmul %102, %87, %cst_42 {dimension_numbers = #tpu.dot_dimension_numbers<[1], [0], [0], [1], [0, 0, 1, 1], [], []>} : vector<16x16xf32>, vector<16x8xf32>, vector<16x8xf32> -> vector<16x8xf32>
    %104 = vector.extract_strided_slice %36 {offsets = [16, 0], sizes = [8, 32], strides = [1, 1]} : vector<32x32xf32> to vector<8x32xf32>
    %cst_43 = arith.constant dense<0.000000e+00> : vector<16x32xf32>
    %105 = tpu.matmul %103, %104, %cst_43 {dimension_numbers = #tpu.dot_dimension_numbers<[1], [0], [0], [1], [0, 0, 1, 1], [], []>} : vector<16x8xf32>, vector<8x32xf32>, vector<16x32xf32> -> vector<16x32xf32>
    %106 = arith.addf %84, %105 : vector<16x32xf32>
    %107 = vector.extract_strided_slice %34 {offsets = [0, 24], sizes = [16, 8], strides = [1, 1]} : vector<16x96xf32> to vector<16x8xf32>
    %108 = vector.extract_strided_slice %34 {offsets = [0, 56], sizes = [16, 8], strides = [1, 1]} : vector<16x96xf32> to vector<16x8xf32>
    %109 = vector.extract_strided_slice %34 {offsets = [0, 88], sizes = [16, 8], strides = [1, 1]} : vector<16x96xf32> to vector<16x8xf32>
    %cst_44 = arith.constant dense<0.000000e+00> : vector<16x16xf32>
    %110 = tpu.matmul %107, %108, %cst_44 {dimension_numbers = #tpu.dot_dimension_numbers<[1], [1], [0], [0], [0, 0, 1, 0], [], []>} : vector<16x8xf32>, vector<16x8xf32>, vector<16x16xf32> -> vector<16x16xf32>
    %cst_45 = arith.constant 0.353553385 : f32
    %111 = vector.broadcast %cst_45 : f32 to vector<16x16xf32>
    %112 = arith.mulf %110, %111 : vector<16x16xf32>
    %113 = vector.broadcast %1 : vector<1x16xf32> to vector<16x16xf32>
    %114 = arith.addf %112, %113 : vector<16x16xf32>
    %cst_46 = arith.constant dense<0xFF800000> : vector<16xf32>
    %115 = vector.multi_reduction <maximumf>, %114, %cst_46 [1] : vector<16x16xf32> to vector<16xf32>
    %116 = vector.shape_cast %115 : vector<16xf32> to vector<16x1xf32>
    %117 = vector.broadcast %116 : vector<16x1xf32> to vector<16x16xf32>
    %118 = arith.subf %114, %117 : vector<16x16xf32>
    %119 = math.exp %118 : vector<16x16xf32>
    %cst_47 = arith.constant dense<0.000000e+00> : vector<16xf32>
    %120 = vector.multi_reduction <add>, %119, %cst_47 [1] : vector<16x16xf32> to vector<16xf32>
    %121 = vector.shape_cast %120 : vector<16xf32> to vector<16x1xf32>
    %122 = tpu.reciprocal %121 {approx = true} : vector<16x1xf32> -> vector<16x1xf32>
    %123 = vector.broadcast %122 : vector<16x1xf32> to vector<16x16xf32>
    %124 = arith.mulf %119, %123 : vector<16x16xf32>
    %cst_48 = arith.constant dense<0.000000e+00> : vector<16x8xf32>
    %125 = tpu.matmul %124, %109, %cst_48 {dimension_numbers = #tpu.dot_dimension_numbers<[1], [0], [0], [1], [0, 0, 1, 1], [], []>} : vector<16x16xf32>, vector<16x8xf32>, vector<16x8xf32> -> vector<16x8xf32>
    %126 = vector.extract_strided_slice %36 {offsets = [24, 0], sizes = [8, 32], strides = [1, 1]} : vector<32x32xf32> to vector<8x32xf32>
    %cst_49 = arith.constant dense<0.000000e+00> : vector<16x32xf32>
    %127 = tpu.matmul %125, %126, %cst_49 {dimension_numbers = #tpu.dot_dimension_numbers<[1], [0], [0], [1], [0, 0, 1, 1], [], []>} : vector<16x8xf32>, vector<8x32xf32>, vector<16x32xf32> -> vector<16x32xf32>
    %128 = arith.addf %106, %127 : vector<16x32xf32>
    %129 = arith.addf %27, %128 : vector<16x32xf32>
    %c0_50 = arith.constant 0 : index
    %c0_51 = arith.constant 0 : index
    %c0_52 = arith.constant 0 : index
    %130 = vector.load %arg9[%c0_50, %c0_51, %c0_52] : memref<2x1x32xf32, #tpu.memory_space<vmem>>, vector<1x1x32xf32>
    %131 = vector.shape_cast %130 : vector<1x1x32xf32> to vector<1x32xf32>
    %c0_53 = arith.constant 0 : index
    %c0_54 = arith.constant 0 : index
    %c0_55 = arith.constant 0 : index
    %132 = vector.load %arg10[%c0_53, %c0_54, %c0_55] : memref<2x1x32xf32, #tpu.memory_space<vmem>>, vector<1x1x32xf32>
    %133 = vector.shape_cast %132 : vector<1x1x32xf32> to vector<1x32xf32>
    %cst_56 = arith.constant dense<0.000000e+00> : vector<16xf32>
    %134 = vector.multi_reduction <add>, %129, %cst_56 [1] : vector<16x32xf32> to vector<16xf32>
    %135 = vector.shape_cast %134 : vector<16xf32> to vector<16x1xf32>
    %cst_57 = arith.constant 3.200000e+01 : f32
    %136 = vector.broadcast %cst_57 : f32 to vector<16x1xf32>
    %137 = arith.divf %135, %136 : vector<16x1xf32>
    %138 = vector.broadcast %137 : vector<16x1xf32> to vector<16x32xf32>
    %139 = arith.subf %129, %138 : vector<16x32xf32>
    %140 = arith.mulf %139, %139 : vector<16x32xf32>
    %cst_58 = arith.constant dense<0.000000e+00> : vector<16xf32>
    %141 = vector.multi_reduction <add>, %140, %cst_58 [1] : vector<16x32xf32> to vector<16xf32>
    %142 = vector.shape_cast %141 : vector<16xf32> to vector<16x1xf32>
    %cst_59 = arith.constant 3.200000e+01 : f32
    %143 = vector.broadcast %cst_59 : f32 to vector<16x1xf32>
    %144 = arith.divf %142, %143 : vector<16x1xf32>
    %145 = vector.broadcast %137 : vector<16x1xf32> to vector<16x32xf32>
    %146 = arith.subf %129, %145 : vector<16x32xf32>
    %cst_60 = arith.constant 9.99999996E-13 : f32
    %147 = vector.broadcast %cst_60 : f32 to vector<16x1xf32>
    %148 = arith.addf %144, %147 : vector<16x1xf32>
    %149 = math.rsqrt %148 : vector<16x1xf32>
    %150 = vector.broadcast %149 : vector<16x1xf32> to vector<16x32xf32>
    %151 = arith.mulf %146, %150 : vector<16x32xf32>
    %152 = vector.broadcast %131 : vector<1x32xf32> to vector<16x32xf32>
    %153 = arith.mulf %151, %152 : vector<16x32xf32>
    %154 = vector.broadcast %133 : vector<1x32xf32> to vector<16x32xf32>
    %155 = arith.addf %153, %154 : vector<16x32xf32>
    %c0_61 = arith.constant 0 : index
    %c0_62 = arith.constant 0 : index
    %c0_63 = arith.constant 0 : index
    %156 = vector.load %arg11[%c0_61, %c0_62, %c0_63] : memref<2x32x64xf32, #tpu.memory_space<vmem>>, vector<1x32x64xf32>
    %157 = vector.shape_cast %156 : vector<1x32x64xf32> to vector<32x64xf32>
    %cst_64 = arith.constant dense<0.000000e+00> : vector<16x64xf32>
    %158 = tpu.matmul %155, %157, %cst_64 {dimension_numbers = #tpu.dot_dimension_numbers<[1], [0], [0], [1], [0, 0, 1, 1], [], []>} : vector<16x32xf32>, vector<32x64xf32>, vector<16x64xf32> -> vector<16x64xf32>
    %c0_65 = arith.constant 0 : index
    %c0_66 = arith.constant 0 : index
    %c0_67 = arith.constant 0 : index
    %159 = vector.load %arg12[%c0_65, %c0_66, %c0_67] : memref<2x1x64xf32, #tpu.memory_space<vmem>>, vector<1x1x64xf32>
    %160 = vector.shape_cast %159 : vector<1x1x64xf32> to vector<1x64xf32>
    %161 = vector.broadcast %160 : vector<1x64xf32> to vector<16x64xf32>
    %162 = arith.addf %158, %161 : vector<16x64xf32>
    %cst_68 = arith.constant 5.000000e-01 : f32
    %163 = vector.broadcast %cst_68 : f32 to vector<16x64xf32>
    %164 = arith.mulf %163, %162 : vector<16x64xf32>
    %cst_69 = arith.constant 4.471500e-02 : f32
    %165 = vector.broadcast %cst_69 : f32 to vector<16x64xf32>
    %166 = arith.mulf %165, %162 : vector<16x64xf32>
    %167 = arith.mulf %166, %162 : vector<16x64xf32>
    %168 = arith.mulf %167, %162 : vector<16x64xf32>
    %169 = arith.addf %162, %168 : vector<16x64xf32>
    %cst_70 = arith.constant 0.797884583 : f32
    %170 = vector.broadcast %cst_70 : f32 to vector<16x64xf32>
    %171 = arith.mulf %170, %169 : vector<16x64xf32>
    %172 = math.tanh %171 : vector<16x64xf32>
    %cst_71 = arith.constant 1.000000e+00 : f32
    %173 = vector.broadcast %cst_71 : f32 to vector<16x64xf32>
    %174 = arith.addf %173, %172 : vector<16x64xf32>
    %175 = arith.mulf %164, %174 : vector<16x64xf32>
    %c0_72 = arith.constant 0 : index
    %c0_73 = arith.constant 0 : index
    %c0_74 = arith.constant 0 : index
    %176 = vector.load %arg13[%c0_72, %c0_73, %c0_74] : memref<2x64x32xf32, #tpu.memory_space<vmem>>, vector<1x64x32xf32>
    %177 = vector.shape_cast %176 : vector<1x64x32xf32> to vector<64x32xf32>
    %cst_75 = arith.constant dense<0.000000e+00> : vector<16x32xf32>
    %178 = tpu.matmul %175, %177, %cst_75 {dimension_numbers = #tpu.dot_dimension_numbers<[1], [0], [0], [1], [0, 0, 1, 1], [], []>} : vector<16x64xf32>, vector<64x32xf32>, vector<16x32xf32> -> vector<16x32xf32>
    %c0_76 = arith.constant 0 : index
    %c0_77 = arith.constant 0 : index
    %c0_78 = arith.constant 0 : index
    %179 = vector.load %arg14[%c0_76, %c0_77, %c0_78] : memref<2x1x32xf32, #tpu.memory_space<vmem>>, vector<1x1x32xf32>
    %180 = vector.shape_cast %179 : vector<1x1x32xf32> to vector<1x32xf32>
    %181 = vector.broadcast %180 : vector<1x32xf32> to vector<16x32xf32>
    %182 = arith.addf %178, %181 : vector<16x32xf32>
    %183 = arith.addf %155, %182 : vector<16x32xf32>
    %c0_79 = arith.constant 0 : index
    %c0_80 = arith.constant 0 : index
    %c0_81 = arith.constant 0 : index
    %184 = vector.load %arg15[%c0_79, %c0_80, %c0_81] : memref<2x1x32xf32, #tpu.memory_space<vmem>>, vector<1x1x32xf32>
    %185 = vector.shape_cast %184 : vector<1x1x32xf32> to vector<1x32xf32>
    %c0_82 = arith.constant 0 : index
    %c0_83 = arith.constant 0 : index
    %c0_84 = arith.constant 0 : index
    %186 = vector.load %arg16[%c0_82, %c0_83, %c0_84] : memref<2x1x32xf32, #tpu.memory_space<vmem>>, vector<1x1x32xf32>
    %187 = vector.shape_cast %186 : vector<1x1x32xf32> to vector<1x32xf32>
    %cst_85 = arith.constant dense<0.000000e+00> : vector<16xf32>
    %188 = vector.multi_reduction <add>, %183, %cst_85 [1] : vector<16x32xf32> to vector<16xf32>
    %189 = vector.shape_cast %188 : vector<16xf32> to vector<16x1xf32>
    %cst_86 = arith.constant 3.200000e+01 : f32
    %190 = vector.broadcast %cst_86 : f32 to vector<16x1xf32>
    %191 = arith.divf %189, %190 : vector<16x1xf32>
    %192 = vector.broadcast %191 : vector<16x1xf32> to vector<16x32xf32>
    %193 = arith.subf %183, %192 : vector<16x32xf32>
    %194 = arith.mulf %193, %193 : vector<16x32xf32>
    %cst_87 = arith.constant dense<0.000000e+00> : vector<16xf32>
    %195 = vector.multi_reduction <add>, %194, %cst_87 [1] : vector<16x32xf32> to vector<16xf32>
    %196 = vector.shape_cast %195 : vector<16xf32> to vector<16x1xf32>
    %cst_88 = arith.constant 3.200000e+01 : f32
    %197 = vector.broadcast %cst_88 : f32 to vector<16x1xf32>
    %198 = arith.divf %196, %197 : vector<16x1xf32>
    %199 = vector.broadcast %191 : vector<16x1xf32> to vector<16x32xf32>
    %200 = arith.subf %183, %199 : vector<16x32xf32>
    %cst_89 = arith.constant 9.99999996E-13 : f32
    %201 = vector.broadcast %cst_89 : f32 to vector<16x1xf32>
    %202 = arith.addf %198, %201 : vector<16x1xf32>
    %203 = math.rsqrt %202 : vector<16x1xf32>
    %204 = vector.broadcast %203 : vector<16x1xf32> to vector<16x32xf32>
    %205 = arith.mulf %200, %204 : vector<16x32xf32>
    %206 = vector.broadcast %185 : vector<1x32xf32> to vector<16x32xf32>
    %207 = arith.mulf %205, %206 : vector<16x32xf32>
    %208 = vector.broadcast %187 : vector<1x32xf32> to vector<16x32xf32>
    %209 = arith.addf %207, %208 : vector<16x32xf32>
    %c1 = arith.constant 1 : index
    %c0_90 = arith.constant 0 : index
    %c0_91 = arith.constant 0 : index
    %210 = vector.load %arg5[%c1, %c0_90, %c0_91] : memref<2x32x96xf32, #tpu.memory_space<vmem>>, vector<1x32x96xf32>
    %211 = vector.shape_cast %210 : vector<1x32x96xf32> to vector<32x96xf32>
    %cst_92 = arith.constant dense<0.000000e+00> : vector<16x96xf32>
    %212 = tpu.matmul %209, %211, %cst_92 {dimension_numbers = #tpu.dot_dimension_numbers<[1], [0], [0], [1], [0, 0, 1, 1], [], []>} : vector<16x32xf32>, vector<32x96xf32>, vector<16x96xf32> -> vector<16x96xf32>
    %c1_93 = arith.constant 1 : index
    %c0_94 = arith.constant 0 : index
    %c0_95 = arith.constant 0 : index
    %213 = vector.load %arg6[%c1_93, %c0_94, %c0_95] : memref<2x1x96xf32, #tpu.memory_space<vmem>>, vector<1x1x96xf32>
    %214 = vector.shape_cast %213 : vector<1x1x96xf32> to vector<1x96xf32>
    %215 = vector.broadcast %214 : vector<1x96xf32> to vector<16x96xf32>
    %216 = arith.addf %212, %215 : vector<16x96xf32>
    %c1_96 = arith.constant 1 : index
    %c0_97 = arith.constant 0 : index
    %c0_98 = arith.constant 0 : index
    %217 = vector.load %arg7[%c1_96, %c0_97, %c0_98] : memref<2x32x32xf32, #tpu.memory_space<vmem>>, vector<1x32x32xf32>
    %218 = vector.shape_cast %217 : vector<1x32x32xf32> to vector<32x32xf32>
    %c1_99 = arith.constant 1 : index
    %c0_100 = arith.constant 0 : index
    %c0_101 = arith.constant 0 : index
    %219 = vector.load %arg8[%c1_99, %c0_100, %c0_101] : memref<2x1x32xf32, #tpu.memory_space<vmem>>, vector<1x1x32xf32>
    %220 = vector.shape_cast %219 : vector<1x1x32xf32> to vector<1x32xf32>
    %221 = vector.shape_cast %220 : vector<1x32xf32> to vector<1x32xf32>
    %222 = vector.broadcast %221 : vector<1x32xf32> to vector<16x32xf32>
    %223 = vector.extract_strided_slice %216 {offsets = [0, 0], sizes = [16, 8], strides = [1, 1]} : vector<16x96xf32> to vector<16x8xf32>
    %224 = vector.extract_strided_slice %216 {offsets = [0, 32], sizes = [16, 8], strides = [1, 1]} : vector<16x96xf32> to vector<16x8xf32>
    %225 = vector.extract_strided_slice %216 {offsets = [0, 64], sizes = [16, 8], strides = [1, 1]} : vector<16x96xf32> to vector<16x8xf32>
    %cst_102 = arith.constant dense<0.000000e+00> : vector<16x16xf32>
    %226 = tpu.matmul %223, %224, %cst_102 {dimension_numbers = #tpu.dot_dimension_numbers<[1], [1], [0], [0], [0, 0, 1, 0], [], []>} : vector<16x8xf32>, vector<16x8xf32>, vector<16x16xf32> -> vector<16x16xf32>
    %cst_103 = arith.constant 0.353553385 : f32
    %227 = vector.broadcast %cst_103 : f32 to vector<16x16xf32>
    %228 = arith.mulf %226, %227 : vector<16x16xf32>
    %229 = vector.broadcast %1 : vector<1x16xf32> to vector<16x16xf32>
    %230 = arith.addf %228, %229 : vector<16x16xf32>
    %cst_104 = arith.constant dense<0xFF800000> : vector<16xf32>
    %231 = vector.multi_reduction <maximumf>, %230, %cst_104 [1] : vector<16x16xf32> to vector<16xf32>
    %232 = vector.shape_cast %231 : vector<16xf32> to vector<16x1xf32>
    %233 = vector.broadcast %232 : vector<16x1xf32> to vector<16x16xf32>
    %234 = arith.subf %230, %233 : vector<16x16xf32>
    %235 = math.exp %234 : vector<16x16xf32>
    %cst_105 = arith.constant dense<0.000000e+00> : vector<16xf32>
    %236 = vector.multi_reduction <add>, %235, %cst_105 [1] : vector<16x16xf32> to vector<16xf32>
    %237 = vector.shape_cast %236 : vector<16xf32> to vector<16x1xf32>
    %238 = tpu.reciprocal %237 {approx = true} : vector<16x1xf32> -> vector<16x1xf32>
    %239 = vector.broadcast %238 : vector<16x1xf32> to vector<16x16xf32>
    %240 = arith.mulf %235, %239 : vector<16x16xf32>
    %cst_106 = arith.constant dense<0.000000e+00> : vector<16x8xf32>
    %241 = tpu.matmul %240, %225, %cst_106 {dimension_numbers = #tpu.dot_dimension_numbers<[1], [0], [0], [1], [0, 0, 1, 1], [], []>} : vector<16x16xf32>, vector<16x8xf32>, vector<16x8xf32> -> vector<16x8xf32>
    %242 = vector.extract_strided_slice %218 {offsets = [0, 0], sizes = [8, 32], strides = [1, 1]} : vector<32x32xf32> to vector<8x32xf32>
    %cst_107 = arith.constant dense<0.000000e+00> : vector<16x32xf32>
    %243 = tpu.matmul %241, %242, %cst_107 {dimension_numbers = #tpu.dot_dimension_numbers<[1], [0], [0], [1], [0, 0, 1, 1], [], []>} : vector<16x8xf32>, vector<8x32xf32>, vector<16x32xf32> -> vector<16x32xf32>
    %244 = arith.addf %222, %243 : vector<16x32xf32>
    %245 = vector.extract_strided_slice %216 {offsets = [0, 8], sizes = [16, 8], strides = [1, 1]} : vector<16x96xf32> to vector<16x8xf32>
    %246 = vector.extract_strided_slice %216 {offsets = [0, 40], sizes = [16, 8], strides = [1, 1]} : vector<16x96xf32> to vector<16x8xf32>
    %247 = vector.extract_strided_slice %216 {offsets = [0, 72], sizes = [16, 8], strides = [1, 1]} : vector<16x96xf32> to vector<16x8xf32>
    %cst_108 = arith.constant dense<0.000000e+00> : vector<16x16xf32>
    %248 = tpu.matmul %245, %246, %cst_108 {dimension_numbers = #tpu.dot_dimension_numbers<[1], [1], [0], [0], [0, 0, 1, 0], [], []>} : vector<16x8xf32>, vector<16x8xf32>, vector<16x16xf32> -> vector<16x16xf32>
    %cst_109 = arith.constant 0.353553385 : f32
    %249 = vector.broadcast %cst_109 : f32 to vector<16x16xf32>
    %250 = arith.mulf %248, %249 : vector<16x16xf32>
    %251 = vector.broadcast %1 : vector<1x16xf32> to vector<16x16xf32>
    %252 = arith.addf %250, %251 : vector<16x16xf32>
    %cst_110 = arith.constant dense<0xFF800000> : vector<16xf32>
    %253 = vector.multi_reduction <maximumf>, %252, %cst_110 [1] : vector<16x16xf32> to vector<16xf32>
    %254 = vector.shape_cast %253 : vector<16xf32> to vector<16x1xf32>
    %255 = vector.broadcast %254 : vector<16x1xf32> to vector<16x16xf32>
    %256 = arith.subf %252, %255 : vector<16x16xf32>
    %257 = math.exp %256 : vector<16x16xf32>
    %cst_111 = arith.constant dense<0.000000e+00> : vector<16xf32>
    %258 = vector.multi_reduction <add>, %257, %cst_111 [1] : vector<16x16xf32> to vector<16xf32>
    %259 = vector.shape_cast %258 : vector<16xf32> to vector<16x1xf32>
    %260 = tpu.reciprocal %259 {approx = true} : vector<16x1xf32> -> vector<16x1xf32>
    %261 = vector.broadcast %260 : vector<16x1xf32> to vector<16x16xf32>
    %262 = arith.mulf %257, %261 : vector<16x16xf32>
    %cst_112 = arith.constant dense<0.000000e+00> : vector<16x8xf32>
    %263 = tpu.matmul %262, %247, %cst_112 {dimension_numbers = #tpu.dot_dimension_numbers<[1], [0], [0], [1], [0, 0, 1, 1], [], []>} : vector<16x16xf32>, vector<16x8xf32>, vector<16x8xf32> -> vector<16x8xf32>
    %264 = vector.extract_strided_slice %218 {offsets = [8, 0], sizes = [8, 32], strides = [1, 1]} : vector<32x32xf32> to vector<8x32xf32>
    %cst_113 = arith.constant dense<0.000000e+00> : vector<16x32xf32>
    %265 = tpu.matmul %263, %264, %cst_113 {dimension_numbers = #tpu.dot_dimension_numbers<[1], [0], [0], [1], [0, 0, 1, 1], [], []>} : vector<16x8xf32>, vector<8x32xf32>, vector<16x32xf32> -> vector<16x32xf32>
    %266 = arith.addf %244, %265 : vector<16x32xf32>
    %267 = vector.extract_strided_slice %216 {offsets = [0, 16], sizes = [16, 8], strides = [1, 1]} : vector<16x96xf32> to vector<16x8xf32>
    %268 = vector.extract_strided_slice %216 {offsets = [0, 48], sizes = [16, 8], strides = [1, 1]} : vector<16x96xf32> to vector<16x8xf32>
    %269 = vector.extract_strided_slice %216 {offsets = [0, 80], sizes = [16, 8], strides = [1, 1]} : vector<16x96xf32> to vector<16x8xf32>
    %cst_114 = arith.constant dense<0.000000e+00> : vector<16x16xf32>
    %270 = tpu.matmul %267, %268, %cst_114 {dimension_numbers = #tpu.dot_dimension_numbers<[1], [1], [0], [0], [0, 0, 1, 0], [], []>} : vector<16x8xf32>, vector<16x8xf32>, vector<16x16xf32> -> vector<16x16xf32>
    %cst_115 = arith.constant 0.353553385 : f32
    %271 = vector.broadcast %cst_115 : f32 to vector<16x16xf32>
    %272 = arith.mulf %270, %271 : vector<16x16xf32>
    %273 = vector.broadcast %1 : vector<1x16xf32> to vector<16x16xf32>
    %274 = arith.addf %272, %273 : vector<16x16xf32>
    %cst_116 = arith.constant dense<0xFF800000> : vector<16xf32>
    %275 = vector.multi_reduction <maximumf>, %274, %cst_116 [1] : vector<16x16xf32> to vector<16xf32>
    %276 = vector.shape_cast %275 : vector<16xf32> to vector<16x1xf32>
    %277 = vector.broadcast %276 : vector<16x1xf32> to vector<16x16xf32>
    %278 = arith.subf %274, %277 : vector<16x16xf32>
    %279 = math.exp %278 : vector<16x16xf32>
    %cst_117 = arith.constant dense<0.000000e+00> : vector<16xf32>
    %280 = vector.multi_reduction <add>, %279, %cst_117 [1] : vector<16x16xf32> to vector<16xf32>
    %281 = vector.shape_cast %280 : vector<16xf32> to vector<16x1xf32>
    %282 = tpu.reciprocal %281 {approx = true} : vector<16x1xf32> -> vector<16x1xf32>
    %283 = vector.broadcast %282 : vector<16x1xf32> to vector<16x16xf32>
    %284 = arith.mulf %279, %283 : vector<16x16xf32>
    %cst_118 = arith.constant dense<0.000000e+00> : vector<16x8xf32>
    %285 = tpu.matmul %284, %269, %cst_118 {dimension_numbers = #tpu.dot_dimension_numbers<[1], [0], [0], [1], [0, 0, 1, 1], [], []>} : vector<16x16xf32>, vector<16x8xf32>, vector<16x8xf32> -> vector<16x8xf32>
    %286 = vector.extract_strided_slice %218 {offsets = [16, 0], sizes = [8, 32], strides = [1, 1]} : vector<32x32xf32> to vector<8x32xf32>
    %cst_119 = arith.constant dense<0.000000e+00> : vector<16x32xf32>
    %287 = tpu.matmul %285, %286, %cst_119 {dimension_numbers = #tpu.dot_dimension_numbers<[1], [0], [0], [1], [0, 0, 1, 1], [], []>} : vector<16x8xf32>, vector<8x32xf32>, vector<16x32xf32> -> vector<16x32xf32>
    %288 = arith.addf %266, %287 : vector<16x32xf32>
    %289 = vector.extract_strided_slice %216 {offsets = [0, 24], sizes = [16, 8], strides = [1, 1]} : vector<16x96xf32> to vector<16x8xf32>
    %290 = vector.extract_strided_slice %216 {offsets = [0, 56], sizes = [16, 8], strides = [1, 1]} : vector<16x96xf32> to vector<16x8xf32>
    %291 = vector.extract_strided_slice %216 {offsets = [0, 88], sizes = [16, 8], strides = [1, 1]} : vector<16x96xf32> to vector<16x8xf32>
    %cst_120 = arith.constant dense<0.000000e+00> : vector<16x16xf32>
    %292 = tpu.matmul %289, %290, %cst_120 {dimension_numbers = #tpu.dot_dimension_numbers<[1], [1], [0], [0], [0, 0, 1, 0], [], []>} : vector<16x8xf32>, vector<16x8xf32>, vector<16x16xf32> -> vector<16x16xf32>
    %cst_121 = arith.constant 0.353553385 : f32
    %293 = vector.broadcast %cst_121 : f32 to vector<16x16xf32>
    %294 = arith.mulf %292, %293 : vector<16x16xf32>
    %295 = vector.broadcast %1 : vector<1x16xf32> to vector<16x16xf32>
    %296 = arith.addf %294, %295 : vector<16x16xf32>
    %cst_122 = arith.constant dense<0xFF800000> : vector<16xf32>
    %297 = vector.multi_reduction <maximumf>, %296, %cst_122 [1] : vector<16x16xf32> to vector<16xf32>
    %298 = vector.shape_cast %297 : vector<16xf32> to vector<16x1xf32>
    %299 = vector.broadcast %298 : vector<16x1xf32> to vector<16x16xf32>
    %300 = arith.subf %296, %299 : vector<16x16xf32>
    %301 = math.exp %300 : vector<16x16xf32>
    %cst_123 = arith.constant dense<0.000000e+00> : vector<16xf32>
    %302 = vector.multi_reduction <add>, %301, %cst_123 [1] : vector<16x16xf32> to vector<16xf32>
    %303 = vector.shape_cast %302 : vector<16xf32> to vector<16x1xf32>
    %304 = tpu.reciprocal %303 {approx = true} : vector<16x1xf32> -> vector<16x1xf32>
    %305 = vector.broadcast %304 : vector<16x1xf32> to vector<16x16xf32>
    %306 = arith.mulf %301, %305 : vector<16x16xf32>
    %cst_124 = arith.constant dense<0.000000e+00> : vector<16x8xf32>
    %307 = tpu.matmul %306, %291, %cst_124 {dimension_numbers = #tpu.dot_dimension_numbers<[1], [0], [0], [1], [0, 0, 1, 1], [], []>} : vector<16x16xf32>, vector<16x8xf32>, vector<16x8xf32> -> vector<16x8xf32>
    %308 = vector.extract_strided_slice %218 {offsets = [24, 0], sizes = [8, 32], strides = [1, 1]} : vector<32x32xf32> to vector<8x32xf32>
    %cst_125 = arith.constant dense<0.000000e+00> : vector<16x32xf32>
    %309 = tpu.matmul %307, %308, %cst_125 {dimension_numbers = #tpu.dot_dimension_numbers<[1], [0], [0], [1], [0, 0, 1, 1], [], []>} : vector<16x8xf32>, vector<8x32xf32>, vector<16x32xf32> -> vector<16x32xf32>
    %310 = arith.addf %288, %309 : vector<16x32xf32>
    %311 = arith.addf %209, %310 : vector<16x32xf32>
    %c1_126 = arith.constant 1 : index
    %c0_127 = arith.constant 0 : index
    %c0_128 = arith.constant 0 : index
    %312 = vector.load %arg9[%c1_126, %c0_127, %c0_128] : memref<2x1x32xf32, #tpu.memory_space<vmem>>, vector<1x1x32xf32>
    %313 = vector.shape_cast %312 : vector<1x1x32xf32> to vector<1x32xf32>
    %c1_129 = arith.constant 1 : index
    %c0_130 = arith.constant 0 : index
    %c0_131 = arith.constant 0 : index
    %314 = vector.load %arg10[%c1_129, %c0_130, %c0_131] : memref<2x1x32xf32, #tpu.memory_space<vmem>>, vector<1x1x32xf32>
    %315 = vector.shape_cast %314 : vector<1x1x32xf32> to vector<1x32xf32>
    %cst_132 = arith.constant dense<0.000000e+00> : vector<16xf32>
    %316 = vector.multi_reduction <add>, %311, %cst_132 [1] : vector<16x32xf32> to vector<16xf32>
    %317 = vector.shape_cast %316 : vector<16xf32> to vector<16x1xf32>
    %cst_133 = arith.constant 3.200000e+01 : f32
    %318 = vector.broadcast %cst_133 : f32 to vector<16x1xf32>
    %319 = arith.divf %317, %318 : vector<16x1xf32>
    %320 = vector.broadcast %319 : vector<16x1xf32> to vector<16x32xf32>
    %321 = arith.subf %311, %320 : vector<16x32xf32>
    %322 = arith.mulf %321, %321 : vector<16x32xf32>
    %cst_134 = arith.constant dense<0.000000e+00> : vector<16xf32>
    %323 = vector.multi_reduction <add>, %322, %cst_134 [1] : vector<16x32xf32> to vector<16xf32>
    %324 = vector.shape_cast %323 : vector<16xf32> to vector<16x1xf32>
    %cst_135 = arith.constant 3.200000e+01 : f32
    %325 = vector.broadcast %cst_135 : f32 to vector<16x1xf32>
    %326 = arith.divf %324, %325 : vector<16x1xf32>
    %327 = vector.broadcast %319 : vector<16x1xf32> to vector<16x32xf32>
    %328 = arith.subf %311, %327 : vector<16x32xf32>
    %cst_136 = arith.constant 9.99999996E-13 : f32
    %329 = vector.broadcast %cst_136 : f32 to vector<16x1xf32>
    %330 = arith.addf %326, %329 : vector<16x1xf32>
    %331 = math.rsqrt %330 : vector<16x1xf32>
    %332 = vector.broadcast %331 : vector<16x1xf32> to vector<16x32xf32>
    %333 = arith.mulf %328, %332 : vector<16x32xf32>
    %334 = vector.broadcast %313 : vector<1x32xf32> to vector<16x32xf32>
    %335 = arith.mulf %333, %334 : vector<16x32xf32>
    %336 = vector.broadcast %315 : vector<1x32xf32> to vector<16x32xf32>
    %337 = arith.addf %335, %336 : vector<16x32xf32>
    %c1_137 = arith.constant 1 : index
    %c0_138 = arith.constant 0 : index
    %c0_139 = arith.constant 0 : index
    %338 = vector.load %arg11[%c1_137, %c0_138, %c0_139] : memref<2x32x64xf32, #tpu.memory_space<vmem>>, vector<1x32x64xf32>
    %339 = vector.shape_cast %338 : vector<1x32x64xf32> to vector<32x64xf32>
    %cst_140 = arith.constant dense<0.000000e+00> : vector<16x64xf32>
    %340 = tpu.matmul %337, %339, %cst_140 {dimension_numbers = #tpu.dot_dimension_numbers<[1], [0], [0], [1], [0, 0, 1, 1], [], []>} : vector<16x32xf32>, vector<32x64xf32>, vector<16x64xf32> -> vector<16x64xf32>
    %c1_141 = arith.constant 1 : index
    %c0_142 = arith.constant 0 : index
    %c0_143 = arith.constant 0 : index
    %341 = vector.load %arg12[%c1_141, %c0_142, %c0_143] : memref<2x1x64xf32, #tpu.memory_space<vmem>>, vector<1x1x64xf32>
    %342 = vector.shape_cast %341 : vector<1x1x64xf32> to vector<1x64xf32>
    %343 = vector.broadcast %342 : vector<1x64xf32> to vector<16x64xf32>
    %344 = arith.addf %340, %343 : vector<16x64xf32>
    %cst_144 = arith.constant 5.000000e-01 : f32
    %345 = vector.broadcast %cst_144 : f32 to vector<16x64xf32>
    %346 = arith.mulf %345, %344 : vector<16x64xf32>
    %cst_145 = arith.constant 4.471500e-02 : f32
    %347 = vector.broadcast %cst_145 : f32 to vector<16x64xf32>
    %348 = arith.mulf %347, %344 : vector<16x64xf32>
    %349 = arith.mulf %348, %344 : vector<16x64xf32>
    %350 = arith.mulf %349, %344 : vector<16x64xf32>
    %351 = arith.addf %344, %350 : vector<16x64xf32>
    %cst_146 = arith.constant 0.797884583 : f32
    %352 = vector.broadcast %cst_146 : f32 to vector<16x64xf32>
    %353 = arith.mulf %352, %351 : vector<16x64xf32>
    %354 = math.tanh %353 : vector<16x64xf32>
    %cst_147 = arith.constant 1.000000e+00 : f32
    %355 = vector.broadcast %cst_147 : f32 to vector<16x64xf32>
    %356 = arith.addf %355, %354 : vector<16x64xf32>
    %357 = arith.mulf %346, %356 : vector<16x64xf32>
    %c1_148 = arith.constant 1 : index
    %c0_149 = arith.constant 0 : index
    %c0_150 = arith.constant 0 : index
    %358 = vector.load %arg13[%c1_148, %c0_149, %c0_150] : memref<2x64x32xf32, #tpu.memory_space<vmem>>, vector<1x64x32xf32>
    %359 = vector.shape_cast %358 : vector<1x64x32xf32> to vector<64x32xf32>
    %cst_151 = arith.constant dense<0.000000e+00> : vector<16x32xf32>
    %360 = tpu.matmul %357, %359, %cst_151 {dimension_numbers = #tpu.dot_dimension_numbers<[1], [0], [0], [1], [0, 0, 1, 1], [], []>} : vector<16x64xf32>, vector<64x32xf32>, vector<16x32xf32> -> vector<16x32xf32>
    %c1_152 = arith.constant 1 : index
    %c0_153 = arith.constant 0 : index
    %c0_154 = arith.constant 0 : index
    %361 = vector.load %arg14[%c1_152, %c0_153, %c0_154] : memref<2x1x32xf32, #tpu.memory_space<vmem>>, vector<1x1x32xf32>
    %362 = vector.shape_cast %361 : vector<1x1x32xf32> to vector<1x32xf32>
    %363 = vector.broadcast %362 : vector<1x32xf32> to vector<16x32xf32>
    %364 = arith.addf %360, %363 : vector<16x32xf32>
    %365 = arith.addf %337, %364 : vector<16x32xf32>
    %c1_155 = arith.constant 1 : index
    %c0_156 = arith.constant 0 : index
    %c0_157 = arith.constant 0 : index
    %366 = vector.load %arg15[%c1_155, %c0_156, %c0_157] : memref<2x1x32xf32, #tpu.memory_space<vmem>>, vector<1x1x32xf32>
    %367 = vector.shape_cast %366 : vector<1x1x32xf32> to vector<1x32xf32>
    %c1_158 = arith.constant 1 : index
    %c0_159 = arith.constant 0 : index
    %c0_160 = arith.constant 0 : index
    %368 = vector.load %arg16[%c1_158, %c0_159, %c0_160] : memref<2x1x32xf32, #tpu.memory_space<vmem>>, vector<1x1x32xf32>
    %369 = vector.shape_cast %368 : vector<1x1x32xf32> to vector<1x32xf32>
    %cst_161 = arith.constant dense<0.000000e+00> : vector<16xf32>
    %370 = vector.multi_reduction <add>, %365, %cst_161 [1] : vector<16x32xf32> to vector<16xf32>
    %371 = vector.shape_cast %370 : vector<16xf32> to vector<16x1xf32>
    %cst_162 = arith.constant 3.200000e+01 : f32
    %372 = vector.broadcast %cst_162 : f32 to vector<16x1xf32>
    %373 = arith.divf %371, %372 : vector<16x1xf32>
    %374 = vector.broadcast %373 : vector<16x1xf32> to vector<16x32xf32>
    %375 = arith.subf %365, %374 : vector<16x32xf32>
    %376 = arith.mulf %375, %375 : vector<16x32xf32>
    %cst_163 = arith.constant dense<0.000000e+00> : vector<16xf32>
    %377 = vector.multi_reduction <add>, %376, %cst_163 [1] : vector<16x32xf32> to vector<16xf32>
    %378 = vector.shape_cast %377 : vector<16xf32> to vector<16x1xf32>
    %cst_164 = arith.constant 3.200000e+01 : f32
    %379 = vector.broadcast %cst_164 : f32 to vector<16x1xf32>
    %380 = arith.divf %378, %379 : vector<16x1xf32>
    %381 = vector.broadcast %373 : vector<16x1xf32> to vector<16x32xf32>
    %382 = arith.subf %365, %381 : vector<16x32xf32>
    %cst_165 = arith.constant 9.99999996E-13 : f32
    %383 = vector.broadcast %cst_165 : f32 to vector<16x1xf32>
    %384 = arith.addf %380, %383 : vector<16x1xf32>
    %385 = math.rsqrt %384 : vector<16x1xf32>
    %386 = vector.broadcast %385 : vector<16x1xf32> to vector<16x32xf32>
    %387 = arith.mulf %382, %386 : vector<16x32xf32>
    %388 = vector.broadcast %367 : vector<1x32xf32> to vector<16x32xf32>
    %389 = arith.mulf %387, %388 : vector<16x32xf32>
    %390 = vector.broadcast %369 : vector<1x32xf32> to vector<16x32xf32>
    %391 = arith.addf %389, %390 : vector<16x32xf32>
    %392 = vector.extract_strided_slice %391 {offsets = [0, 0], sizes = [1, 32], strides = [1, 1]} : vector<16x32xf32> to vector<1x32xf32>
    %c0_166 = arith.constant 0 : index
    %c0_167 = arith.constant 0 : index
    %393 = vector.load %arg17[%c0_166, %c0_167] : memref<32x32xf32, #tpu.memory_space<vmem>>, vector<32x32xf32>
    %cst_168 = arith.constant dense<0.000000e+00> : vector<1x32xf32>
    %394 = tpu.matmul %392, %393, %cst_168 {dimension_numbers = #tpu.dot_dimension_numbers<[1], [0], [0], [1], [0, 0, 1, 1], [], []>} : vector<1x32xf32>, vector<32x32xf32>, vector<1x32xf32> -> vector<1x32xf32>
    %c0_169 = arith.constant 0 : index
    %c0_170 = arith.constant 0 : index
    %395 = vector.load %arg18[%c0_169, %c0_170] : memref<1x32xf32, #tpu.memory_space<vmem>>, vector<1x32xf32>
    %396 = arith.addf %394, %395 : vector<1x32xf32>
    %397 = math.tanh %396 : vector<1x32xf32>
    %c0_171 = arith.constant 0 : index
    %c0_172 = arith.constant 0 : index
    %398 = vector.load %arg19[%c0_171, %c0_172] : memref<32x1xf32, #tpu.memory_space<vmem>>, vector<32x1xf32>
    %cst_173 = arith.constant dense<0.000000e+00> : vector<1x1xf32>
    %399 = tpu.matmul %397, %398, %cst_173 {dimension_numbers = #tpu.dot_dimension_numbers<[1], [0], [0], [1], [0, 0, 1, 1], [], []>} : vector<1x32xf32>, vector<32x1xf32>, vector<1x1xf32> -> vector<1x1xf32>
    %c0_174 = arith.constant 0 : index
    %c0_175 = arith.constant 0 : index
    %400 = vector.load %arg20[%c0_174, %c0_175] : memref<1x1xf32, #tpu.memory_space<vmem>>, vector<1x1xf32>
    %401 = arith.addf %399, %400 : vector<1x1xf32>
    %c0_176 = arith.constant 0 : index
    %c0_177 = arith.constant 0 : index
    %c0_178 = arith.constant 0 : index
    %402 = vector.load %arg21[%c0_176, %c0_177, %c0_178] : memref<1x1x1xf32, #tpu.memory_space<vmem>>, vector<1x1x1xf32>
    %403 = vector.shape_cast %402 : vector<1x1x1xf32> to vector<1x1xf32>
    %404 = vector.shape_cast %401 : vector<1x1xf32> to vector<1x1x1xf32>
    tpu.vector_store %arg21[%c0_176, %c0_177, %c0_178], %404 {strides = array<i32>} : memref<1x1x1xf32, #tpu.memory_space<vmem>>, vector<1x1x1xf32>,
    return
  }
  func.func @transform_0(%arg0: i32) -> (i32, i32, i32) {
    %c0_i32 = arith.constant 0 : i32
    %c0_i32_0 = arith.constant 0 : i32
    %c0_i32_1 = arith.constant 0 : i32
    return %arg0, %c0_i32, %c0_i32_0 : i32, i32, i32
  }
  func.func @transform_1(%arg0: i32) -> (i32, i32, i32) {
    %c0_i32 = arith.constant 0 : i32
    %c0_i32_0 = arith.constant 0 : i32
    %c0_i32_1 = arith.constant 0 : i32
    return %arg0, %c0_i32, %c0_i32_0 : i32, i32, i32
  }
  func.func @transform_2(%arg0: i32) -> (i32, i32) {
    %c0_i32 = arith.constant 0 : i32
    %c0_i32_0 = arith.constant 0 : i32
    %c0_i32_1 = arith.constant 0 : i32
    return %c0_i32, %c0_i32_0 : i32, i32
  }
  func.func @transform_3(%arg0: i32) -> (i32, i32) {
    %c0_i32 = arith.constant 0 : i32
    %c0_i32_0 = arith.constant 0 : i32
    %c0_i32_1 = arith.constant 0 : i32
    return %c0_i32, %c0_i32_0 : i32, i32
  }
  func.func @transform_4(%arg0: i32) -> (i32, i32, i32) {
    %c0_i32 = arith.constant 0 : i32
    %c0_i32_0 = arith.constant 0 : i32
    %c0_i32_1 = arith.constant 0 : i32
    %c0_i32_2 = arith.constant 0 : i32
    return %c0_i32, %c0_i32_0, %c0_i32_1 : i32, i32, i32
  }
  func.func @transform_5(%arg0: i32) -> (i32, i32, i32) {
    %c0_i32 = arith.constant 0 : i32
    %c0_i32_0 = arith.constant 0 : i32
    %c0_i32_1 = arith.constant 0 : i32
    %c0_i32_2 = arith.constant 0 : i32
    return %c0_i32, %c0_i32_0, %c0_i32_1 : i32, i32, i32
  }
  func.func @transform_6(%arg0: i32) -> (i32, i32, i32) {
    %c0_i32 = arith.constant 0 : i32
    %c0_i32_0 = arith.constant 0 : i32
    %c0_i32_1 = arith.constant 0 : i32
    %c0_i32_2 = arith.constant 0 : i32
    return %c0_i32, %c0_i32_0, %c0_i32_1 : i32, i32, i32
  }
  func.func @transform_7(%arg0: i32) -> (i32, i32, i32) {
    %c0_i32 = arith.constant 0 : i32
    %c0_i32_0 = arith.constant 0 : i32
    %c0_i32_1 = arith.constant 0 : i32
    %c0_i32_2 = arith.constant 0 : i32
    return %c0_i32, %c0_i32_0, %c0_i32_1 : i32, i32, i32
  }
  func.func @transform_8(%arg0: i32) -> (i32, i32, i32) {
    %c0_i32 = arith.constant 0 : i32
    %c0_i32_0 = arith.constant 0 : i32
    %c0_i32_1 = arith.constant 0 : i32
    %c0_i32_2 = arith.constant 0 : i32
    return %c0_i32, %c0_i32_0, %c0_i32_1 : i32, i32, i32
  }
  func.func @transform_9(%arg0: i32) -> (i32, i32, i32) {
    %c0_i32 = arith.constant 0 : i32
    %c0_i32_0 = arith.constant 0 : i32
    %c0_i32_1 = arith.constant 0 : i32
    %c0_i32_2 = arith.constant 0 : i32
    return %c0_i32, %c0_i32_0, %c0_i32_1 : i32, i32, i32
  }
  func.func @transform_10(%arg0: i32) -> (i32, i32, i32) {
    %c0_i32 = arith.constant 0 : i32
    %c0_i32_0 = arith.constant 0 : i32
    %c0_i32_1 = arith.constant 0 : i32
    %c0_i32_2 = arith.constant 0 : i32
    return %c0_i32, %c0_i32_0, %c0_i32_1 : i32, i32, i32
  }
  func.func @transform_11(%arg0: i32) -> (i32, i32, i32) {
    %c0_i32 = arith.constant 0 : i32
    %c0_i32_0 = arith.constant 0 : i32
    %c0_i32_1 = arith.constant 0 : i32
    %c0_i32_2 = arith.constant 0 : i32
    return %c0_i32, %c0_i32_0, %c0_i32_1 : i32, i32, i32
  }
  func.func @transform_12(%arg0: i32) -> (i32, i32, i32) {
    %c0_i32 = arith.constant 0 : i32
    %c0_i32_0 = arith.constant 0 : i32
    %c0_i32_1 = arith.constant 0 : i32
    %c0_i32_2 = arith.constant 0 : i32
    return %c0_i32, %c0_i32_0, %c0_i32_1 : i32, i32, i32
  }
  func.func @transform_13(%arg0: i32) -> (i32, i32, i32) {
    %c0_i32 = arith.constant 0 : i32
    %c0_i32_0 = arith.constant 0 : i32
    %c0_i32_1 = arith.constant 0 : i32
    %c0_i32_2 = arith.constant 0 : i32
    return %c0_i32, %c0_i32_0, %c0_i32_1 : i32, i32, i32
  }
  func.func @transform_14(%arg0: i32) -> (i32, i32, i32) {
    %c0_i32 = arith.constant 0 : i32
    %c0_i32_0 = arith.constant 0 : i32
    %c0_i32_1 = arith.constant 0 : i32
    %c0_i32_2 = arith.constant 0 : i32
    return %c0_i32, %c0_i32_0, %c0_i32_1 : i32, i32, i32
  }
  func.func @transform_15(%arg0: i32) -> (i32, i32, i32) {
    %c0_i32 = arith.constant 0 : i32
    %c0_i32_0 = arith.constant 0 : i32
    %c0_i32_1 = arith.constant 0 : i32
    %c0_i32_2 = arith.constant 0 : i32
    return %c0_i32, %c0_i32_0, %c0_i32_1 : i32, i32, i32
  }
  func.func @transform_16(%arg0: i32) -> (i32, i32) {
    %c0_i32 = arith.constant 0 : i32
    %c0_i32_0 = arith.constant 0 : i32
    %c0_i32_1 = arith.constant 0 : i32
    return %c0_i32, %c0_i32_0 : i32, i32
  }
  func.func @transform_17(%arg0: i32) -> (i32, i32) {
    %c0_i32 = arith.constant 0 : i32
    %c0_i32_0 = arith.constant 0 : i32
    %c0_i32_1 = arith.constant 0 : i32
    return %c0_i32, %c0_i32_0 : i32, i32
  }
  func.func @transform_18(%arg0: i32) -> (i32, i32) {
    %c0_i32 = arith.constant 0 : i32
    %c0_i32_0 = arith.constant 0 : i32
    %c0_i32_1 = arith.constant 0 : i32
    return %c0_i32, %c0_i32_0 : i32, i32
  }
  func.func @transform_19(%arg0: i32) -> (i32, i32) {
    %c0_i32 = arith.constant 0 : i32
    %c0_i32_0 = arith.constant 0 : i32
    %c0_i32_1 = arith.constant 0 : i32
    return %c0_i32, %c0_i32_0 : i32, i32
  }
  func.func @transform_20(%arg0: i32) -> (i32, i32, i32) {
    %c0_i32 = arith.constant 0 : i32
    %c0_i32_0 = arith.constant 0 : i32
    %c0_i32_1 = arith.constant 0 : i32
    return %arg0, %c0_i32, %c0_i32_0 : i32, i32, i32
  }
}

</mosaic_0001>

<llo_original>
// kernel: _device_forward.1
$region0: #{_device_forward.1}
  #allocation0 [shape = 'u32[]', space=smem, size = 0x4, offset = 0x4, fixed_abs, tag = 'smem constant byte address 0x4 - core index']
  #allocation1 [shape = 'u32[144,128]{1,0:T(1,128)}', space=vmem, size = 0x12000, scoped, tag = 'internal scratch']
  #allocation2 [shape = 'f32[1,1]{1,0:T(1,128)S(1)}', space=vmem, size = 0x200, scoped, tag = 'scoped memory for _device_forward.1']
  %s0 = inlined_call_operand.vmem [shape: f32[2,16,32], index: 0, kind: input, shape index: {}]
  %s1 = inlined_call_operand.vmem [shape: f32[2,1,16], index: 1, kind: input, shape index: {}]
  %s2 = inlined_call_operand.vmem [shape: f32[1,32], index: 2, kind: input, shape index: {}]
  %s3 = inlined_call_operand.vmem [shape: f32[1,32], index: 3, kind: input, shape index: {}]
  %s4 = inlined_call_operand.vmem [shape: f32[2,32,96], index: 4, kind: input, shape index: {}]
  %s5 = inlined_call_operand.vmem [shape: f32[2,1,96], index: 5, kind: input, shape index: {}]
  %s6 = inlined_call_operand.vmem [shape: f32[2,32,32], index: 6, kind: input, shape index: {}]
  %s7 = inlined_call_operand.vmem [shape: f32[2,1,32], index: 7, kind: input, shape index: {}]
  %s8 = inlined_call_operand.vmem [shape: f32[2,1,32], index: 8, kind: input, shape index: {}]
  %s9 = inlined_call_operand.vmem [shape: f32[2,1,32], index: 9, kind: input, shape index: {}]
  %s10 = inlined_call_operand.vmem [shape: f32[2,32,64], index: 10, kind: input, shape index: {}]
  %s11 = inlined_call_operand.vmem [shape: f32[2,1,64], index: 11, kind: input, shape index: {}]
  %s12 = inlined_call_operand.vmem [shape: f32[2,64,32], index: 12, kind: input, shape index: {}]
  %s13 = inlined_call_operand.vmem [shape: f32[2,1,32], index: 13, kind: input, shape index: {}]
  %s14 = inlined_call_operand.vmem [shape: f32[2,1,32], index: 14, kind: input, shape index: {}]
  %s15 = inlined_call_operand.vmem [shape: f32[2,1,32], index: 15, kind: input, shape index: {}]
  %s16 = inlined_call_operand.vmem [shape: f32[32,32], index: 16, kind: input, shape index: {}]
  %s17 = inlined_call_operand.vmem [shape: f32[1,32], index: 17, kind: input, shape index: {}]
  %s18 = inlined_call_operand.vmem [shape: f32[32,1], index: 18, kind: input, shape index: {}]
  %s19 = inlined_call_operand.<no memory space> [shape: f32[1,1], index: 19, kind: input, shape index: {}]
  %s20 = inlined_call_operand.vmem [shape: f32[2,1,1], index: 20, kind: output, shape index: {}]
  %s21 = sld [smem:[#allocation0]]
  $region113: #{_device_forward.1} parent=0
    _
  %s23 = ssub.s32 1, %s21
  %s24 = scalar_select 0, %s23, %s21
  %v25 = vstv %s19
  %26 = vst [vmem:[#allocation2] sm:$0x1] %v25
  loop: start=0, step=1, limit=4
  $region2: #{_device_forward.1} parent=0 // loop_pre_header
    _
  $region3: #{_device_forward.1} parent=0 // loop_header
    %s28 = sphi 0, %s32
    %p29 = scmp.ge.s32.totalorder %s28, 4
    %s38 = sphi 0, %s40
    %s41 = sphi 0, %s38
    %s42 = sphi 0, %s41
    %s58 = sphi 0, %s42
    %s64 = sphi 0, %s66
    %s67 = sphi 0, %s64
    %s68 = sphi 0, %s67
    %s84 = sphi 0, %s68
    %s88 = sphi 0, %s88
    %s90 = sphi 0, %s88
    %s91 = sphi 0, %s90
    %s105 = sphi 0, %s91
    %s109 = sphi 0, %s109
    %s111 = sphi 0, %s109
    %s112 = sphi 0, %s111
    %s126 = sphi 0, %s112
    %s130 = sphi 0, %s130
    %s132 = sphi 0, %s130
    %s133 = sphi 0, %s132
    %s147 = sphi 0, %s133
    %s151 = sphi 0, %s151
    %s153 = sphi 0, %s151
    %s154 = sphi 0, %s153
    %s168 = sphi 0, %s154
    %s172 = sphi 0, %s172
    %s174 = sphi 0, %s172
    %s175 = sphi 0, %s174
    %s189 = sphi 0, %s175
    %s193 = sphi 0, %s193
    %s195 = sphi 0, %s193
    %s196 = sphi 0, %s195
    %s210 = sphi 0, %s196
    %s214 = sphi 0, %s214
    %s216 = sphi 0, %s214
    %s217 = sphi 0, %s216
    %s231 = sphi 0, %s217
    %s235 = sphi 0, %s235
    %s237 = sphi 0, %s235
    %s238 = sphi 0, %s237
    %s252 = sphi 0, %s238
    %s256 = sphi 0, %s256
    %s258 = sphi 0, %s256
    %s259 = sphi 0, %s258
    %s273 = sphi 0, %s259
    %s277 = sphi 0, %s277
    %s279 = sphi 0, %s277
    %s280 = sphi 0, %s279
    %s294 = sphi 0, %s280
    %s298 = sphi 0, %s298
    %s300 = sphi 0, %s298
    %s301 = sphi 0, %s300
    %s315 = sphi 0, %s301
    %s319 = sphi 0, %s319
    %s321 = sphi 0, %s319
    %s322 = sphi 0, %s321
    %s336 = sphi 0, %s322
    %s340 = sphi 0, %s340
    %s342 = sphi 0, %s340
    %s343 = sphi 0, %s342
    %s357 = sphi 0, %s343
    %s361 = sphi 0, %s361
    %s363 = sphi 0, %s361
    %s364 = sphi 0, %s363
    %s378 = sphi 0, %s364
    %s382 = sphi 0, %s382
    %s384 = sphi 0, %s382
    %s385 = sphi 0, %s384
    %s399 = sphi 0, %s385
    %s403 = sphi 0, %s403
    %s405 = sphi 0, %s403
    %s406 = sphi 0, %s405
    %s420 = sphi 0, %s406
    %s424 = sphi 0, %s424
    %s426 = sphi 0, %s424
    %s427 = sphi 0, %s426
    %s441 = sphi 0, %s427
    %s445 = sphi 0, %s445
    %s447 = sphi 0, %s445
    %s448 = sphi 0, %s447
    %s462 = sphi 0, %s448
    %s468 = sphi 0, %s470
    %s471 = sphi 0, %s468
    %s472 = sphi 0, %s471
    %s488 = sphi 0, %s472
  $region4: #{_device_forward.1} parent=0 // loop_header_branch
    %31 = sbr.rel (%p29) target = $region8
  $region5: #{_device_forward.1} parent=0 // loop_body
    %s33 = ssub.s32 %s28, 1
    %s34 = ssub.s32 %s28, 2
    %s35 = sadd.s32 %s28, 1
    %s36 = ssub.s32 %s28, %s35
    %p37 = scmp.eq.s32.totalorder %s36, 0
    %s39 = sadd.s32 %s38, 1
    %s40 = scalar_select %p37, %s38, %s39
    %p43 = pneg %p37
    %p44 = scmp.eq.s32.totalorder %s28, 1
    %p45 = por %p43, %p44
    %p46 = scmp.ne.s32.totalorder %s38, %s41
    %p47 = scmp.eq.s32.totalorder %s28, 0
    %p48 = por %p46, %p47
    %p49 = scmp.ne.s32.totalorder %s38, %s41
    %p50 = scmp.eq.s32.totalorder %s33, 1
    %p51 = por %p49, %p50
    %p52 = scmp.ne.s32.totalorder %s41, %s42
    %p53 = scmp.eq.s32.totalorder %s33, 0
    %p54 = por %p52, %p53
    %p55 = scmp.ne.s32.totalorder %s41, %s42
    %p56 = scmp.eq.s32.totalorder %s34, 1
    %p57 = por %p55, %p56
    %p59 = scmp.ne.s32.totalorder %s42, %s58
    %p60 = scmp.eq.s32.totalorder %s34, 0
    %p61 = por %p59, %p60
    %s62 = ssub.s32 %s28, %s35
    %p63 = scmp.eq.s32.totalorder %s62, 0
    %s65 = sadd.s32 %s64, 1
    %s66 = scalar_select %p63, %s64, %s65
    %p69 = pneg %p63
    %p70 = scmp.eq.s32.totalorder %s28, 1
    %p71 = por %p69, %p70
    %p72 = scmp.ne.s32.totalorder %s64, %s67
    %p73 = scmp.eq.s32.totalorder %s28, 0
    %p74 = por %p72, %p73
    %p75 = scmp.ne.s32.totalorder %s64, %s67
    %p76 = scmp.eq.s32.totalorder %s33, 1
    %p77 = por %p75, %p76
    %p78 = scmp.ne.s32.totalorder %s67, %s68
    %p79 = scmp.eq.s32.totalorder %s33, 0
    %p80 = por %p78, %p79
    %p81 = scmp.ne.s32.totalorder %s67, %s68
    %p82 = scmp.eq.s32.totalorder %s34, 1
    %p83 = por %p81, %p82
    %p85 = scmp.ne.s32.totalorder %s68, %s84
    %p86 = scmp.eq.s32.totalorder %s34, 0
    %p87 = por %p85, %p86
    %s89 = sadd.s32 %s88, 1
    %p92 = scmp.eq.s32.totalorder %s28, 1
    %p93 = scmp.ne.s32.totalorder %s88, %s90
    %p94 = scmp.eq.s32.totalorder %s28, 0
    %p95 = por %p93, %p94
    %p96 = scmp.ne.s32.totalorder %s88, %s90
    %p97 = scmp.eq.s32.totalorder %s33, 1
    %p98 = por %p96, %p97
    %p99 = scmp.ne.s32.totalorder %s90, %s91
    %p100 = scmp.eq.s32.totalorder %s33, 0
    %p101 = por %p99, %p100
    %p102 = scmp.ne.s32.totalorder %s90, %s91
    %p103 = scmp.eq.s32.totalorder %s34, 1
    %p104 = por %p102, %p103
    %p106 = scmp.ne.s32.totalorder %s91, %s105
    %p107 = scmp.eq.s32.totalorder %s34, 0
    %p108 = por %p106, %p107
    %s110 = sadd.s32 %s109, 1
    %p113 = scmp.eq.s32.totalorder %s28, 1
    %p114 = scmp.ne.s32.totalorder %s109, %s111
    %p115 = scmp.eq.s32.totalorder %s28, 0
    %p116 = por %p114, %p115
    %p117 = scmp.ne.s32.totalorder %s109, %s111
    %p118 = scmp.eq.s32.totalorder %s33, 1
    %p119 = por %p117, %p118
    %p120 = scmp.ne.s32.totalorder %s111, %s112
    %p121 = scmp.eq.s32.totalorder %s33, 0
    %p122 = por %p120, %p121
    %p123 = scmp.ne.s32.totalorder %s111, %s112
    %p124 = scmp.eq.s32.totalorder %s34, 1
    %p125 = por %p123, %p124
    %p127 = scmp.ne.s32.totalorder %s112, %s126
    %p128 = scmp.eq.s32.totalorder %s34, 0
    %p129 = por %p127, %p128
    %s131 = sadd.s32 %s130, 1
    %p134 = scmp.eq.s32.totalorder %s28, 1
    %p135 = scmp.ne.s32.totalorder %s130, %s132
    %p136 = scmp.eq.s32.totalorder %s28, 0
    %p137 = por %p135, %p136
    %p138 = scmp.ne.s32.totalorder %s130, %s132
    %p139 = scmp.eq.s32.totalorder %s33, 1
    %p140 = por %p138, %p139
    %p141 = scmp.ne.s32.totalorder %s132, %s133
    %p142 = scmp.eq.s32.totalorder %s33, 0
    %p143 = por %p141, %p142
    %p144 = scmp.ne.s32.totalorder %s132, %s133
    %p145 = scmp.eq.s32.totalorder %s34, 1
    %p146 = por %p144, %p145
    %p148 = scmp.ne.s32.totalorder %s133, %s147
    %p149 = scmp.eq.s32.totalorder %s34, 0
    %p150 = por %p148, %p149
    %s152 = sadd.s32 %s151, 1
    %p155 = scmp.eq.s32.totalorder %s28, 1
    %p156 = scmp.ne.s32.totalorder %s151, %s153
    %p157 = scmp.eq.s32.totalorder %s28, 0
    %p158 = por %p156, %p157
    %p159 = scmp.ne.s32.totalorder %s151, %s153
    %p160 = scmp.eq.s32.totalorder %s33, 1
    %p161 = por %p159, %p160
    %p162 = scmp.ne.s32.totalorder %s153, %s154
    %p163 = scmp.eq.s32.totalorder %s33, 0
    %p164 = por %p162, %p163
    %p165 = scmp.ne.s32.totalorder %s153, %s154
    %p166 = scmp.eq.s32.totalorder %s34, 1
    %p167 = por %p165, %p166
    %p169 = scmp.ne.s32.totalorder %s154, %s168
    %p170 = scmp.eq.s32.totalorder %s34, 0
    %p171 = por %p169, %p170
    %s173 = sadd.s32 %s172, 1
    %p176 = scmp.eq.s32.totalorder %s28, 1
    %p177 = scmp.ne.s32.totalorder %s172, %s174
    %p178 = scmp.eq.s32.totalorder %s28, 0
    %p179 = por %p177, %p178
    %p180 = scmp.ne.s32.totalorder %s172, %s174
    %p181 = scmp.eq.s32.totalorder %s33, 1
    %p182 = por %p180, %p181
    %p183 = scmp.ne.s32.totalorder %s174, %s175
    %p184 = scmp.eq.s32.totalorder %s33, 0
    %p185 = por %p183, %p184
    %p186 = scmp.ne.s32.totalorder %s174, %s175
    %p187 = scmp.eq.s32.totalorder %s34, 1
    %p188 = por %p186, %p187
    %p190 = scmp.ne.s32.totalorder %s175, %s189
    %p191 = scmp.eq.s32.totalorder %s34, 0
    %p192 = por %p190, %p191
    %s194 = sadd.s32 %s193, 1
    %p197 = scmp.eq.s32.totalorder %s28, 1
    %p198 = scmp.ne.s32.totalorder %s193, %s195
    %p199 = scmp.eq.s32.totalorder %s28, 0
    %p200 = por %p198, %p199
    %p201 = scmp.ne.s32.totalorder %s193, %s195
    %p202 = scmp.eq.s32.totalorder %s33, 1
    %p203 = por %p201, %p202
    %p204 = scmp.ne.s32.totalorder %s195, %s196
    %p205 = scmp.eq.s32.totalorder %s33, 0
    %p206 = por %p204, %p205
    %p207 = scmp.ne.s32.totalorder %s195, %s196
    %p208 = scmp.eq.s32.totalorder %s34, 1
    %p209 = por %p207, %p208
    %p211 = scmp.ne.s32.totalorder %s196, %s210
    %p212 = scmp.eq.s32.totalorder %s34, 0
    %p213 = por %p211, %p212
    %s215 = sadd.s32 %s214, 1
    %p218 = scmp.eq.s32.totalorder %s28, 1
    %p219 = scmp.ne.s32.totalorder %s214, %s216
    %p220 = scmp.eq.s32.totalorder %s28, 0
    %p221 = por %p219, %p220
    %p222 = scmp.ne.s32.totalorder %s214, %s216
    %p223 = scmp.eq.s32.totalorder %s33, 1
    %p224 = por %p222, %p223
    %p225 = scmp.ne.s32.totalorder %s216, %s217
    %p226 = scmp.eq.s32.totalorder %s33, 0
    %p227 = por %p225, %p226
    %p228 = scmp.ne.s32.totalorder %s216, %s217
    %p229 = scmp.eq.s32.totalorder %s34, 1
    %p230 = por %p228, %p229
    %p232 = scmp.ne.s32.totalorder %s217, %s231
    %p233 = scmp.eq.s32.totalorder %s34, 0
    %p234 = por %p232, %p233
    %s236 = sadd.s32 %s235, 1
    %p239 = scmp.eq.s32.totalorder %s28, 1
    %p240 = scmp.ne.s32.totalorder %s235, %s237
    %p241 = scmp.eq.s32.totalorder %s28, 0
    %p242 = por %p240, %p241
    %p243 = scmp.ne.s32.totalorder %s235, %s237
    %p244 = scmp.eq.s32.totalorder %s33, 1
    %p245 = por %p243, %p244
    %p246 = scmp.ne.s32.totalorder %s237, %s238
    %p247 = scmp.eq.s32.totalorder %s33, 0
    %p248 = por %p246, %p247
    %p249 = scmp.ne.s32.totalorder %s237, %s238
    %p250 = scmp.eq.s32.totalorder %s34, 1
    %p251 = por %p249, %p250
    %p253 = scmp.ne.s32.totalorder %s238, %s252
    %p254 = scmp.eq.s32.totalorder %s34, 0
    %p255 = por %p253, %p254
    %s257 = sadd.s32 %s256, 1
    %p260 = scmp.eq.s32.totalorder %s28, 1
    %p261 = scmp.ne.s32.totalorder %s256, %s258
    %p262 = scmp.eq.s32.totalorder %s28, 0
    %p263 = por %p261, %p262
    %p264 = scmp.ne.s32.totalorder %s256, %s258
    %p265 = scmp.eq.s32.totalorder %s33, 1
    %p266 = por %p264, %p265
    %p267 = scmp.ne.s32.totalorder %s258, %s259
    %p268 = scmp.eq.s32.totalorder %s33, 0
    %p269 = por %p267, %p268
    %p270 = scmp.ne.s32.totalorder %s258, %s259
    %p271 = scmp.eq.s32.totalorder %s34, 1
    %p272 = por %p270, %p271
    %p274 = scmp.ne.s32.totalorder %s259, %s273
    %p275 = scmp.eq.s32.totalorder %s34, 0
    %p276 = por %p274, %p275
    %s278 = sadd.s32 %s277, 1
    %p281 = scmp.eq.s32.totalorder %s28, 1
    %p282 = scmp.ne.s32.totalorder %s277, %s279
    %p283 = scmp.eq.s32.totalorder %s28, 0
    %p284 = por %p282, %p283
    %p285 = scmp.ne.s32.totalorder %s277, %s279
    %p286 = scmp.eq.s32.totalorder %s33, 1
    %p287 = por %p285, %p286
    %p288 = scmp.ne.s32.totalorder %s279, %s280
    %p289 = scmp.eq.s32.totalorder %s33, 0
    %p290 = por %p288, %p289
    %p291 = scmp.ne.s32.totalorder %s279, %s280
    %p292 = scmp.eq.s32.totalorder %s34, 1
    %p293 = por %p291, %p292
    %p295 = scmp.ne.s32.totalorder %s280, %s294
    %p296 = scmp.eq.s32.totalorder %s34, 0
    %p297 = por %p295, %p296
    %s299 = sadd.s32 %s298, 1
    %p302 = scmp.eq.s32.totalorder %s28, 1
    %p303 = scmp.ne.s32.totalorder %s298, %s300
    %p304 = scmp.eq.s32.totalorder %s28, 0
    %p305 = por %p303, %p304
    %p306 = scmp.ne.s32.totalorder %s298, %s300
    %p307 = scmp.eq.s32.totalorder %s33, 1
    %p308 = por %p306, %p307
    %p309 = scmp.ne.s32.totalorder %s300, %s301
    %p310 = scmp.eq.s32.totalorder %s33, 0
    %p311 = por %p309, %p310
    %p312 = scmp.ne.s32.totalorder %s300, %s301
    %p313 = scmp.eq.s32.totalorder %s34, 1
    %p314 = por %p312, %p313
    %p316 = scmp.ne.s32.totalorder %s301, %s315
    %p317 = scmp.eq.s32.totalorder %s34, 0
    %p318 = por %p316, %p317
    %s320 = sadd.s32 %s319, 1
    %p323 = scmp.eq.s32.totalorder %s28, 1
    %p324 = scmp.ne.s32.totalorder %s319, %s321
    %p325 = scmp.eq.s32.totalorder %s28, 0
    %p326 = por %p324, %p325
    %p327 = scmp.ne.s32.totalorder %s319, %s321
    %p328 = scmp.eq.s32.totalorder %s33, 1
    %p329 = por %p327, %p328
    %p330 = scmp.ne.s32.totalorder %s321, %s322
    %p331 = scmp.eq.s32.totalorder %s33, 0
    %p332 = por %p330, %p331
    %p333 = scmp.ne.s32.totalorder %s321, %s322
    %p334 = scmp.eq.s32.totalorder %s34, 1
    %p335 = por %p333, %p334
    %p337 = scmp.ne.s32.totalorder %s322, %s336
    %p338 = scmp.eq.s32.totalorder %s34, 0
    %p339 = por %p337, %p338
    %s341 = sadd.s32 %s340, 1
    %p344 = scmp.eq.s32.totalorder %s28, 1
    %p345 = scmp.ne.s32.totalorder %s340, %s342
    %p346 = scmp.eq.s32.totalorder %s28, 0
    %p347 = por %p345, %p346
    %p348 = scmp.ne.s32.totalorder %s340, %s342
    %p349 = scmp.eq.s32.totalorder %s33, 1
    %p350 = por %p348, %p349
    %p351 = scmp.ne.s32.totalorder %s342, %s343
    %p352 = scmp.eq.s32.totalorder %s33, 0
    %p353 = por %p351, %p352
    %p354 = scmp.ne.s32.totalorder %s342, %s343
    %p355 = scmp.eq.s32.totalorder %s34, 1
    %p356 = por %p354, %p355
    %p358 = scmp.ne.s32.totalorder %s343, %s357
    %p359 = scmp.eq.s32.totalorder %s34, 0
    %p360 = por %p358, %p359
    %s362 = sadd.s32 %s361, 1
    %p365 = scmp.eq.s32.totalorder %s28, 1
    %p366 = scmp.ne.s32.totalorder %s361, %s363
    %p367 = scmp.eq.s32.totalorder %s28, 0
    %p368 = por %p366, %p367
    %p369 = scmp.ne.s32.totalorder %s361, %s363
    %p370 = scmp.eq.s32.totalorder %s33, 1
    %p371 = por %p369, %p370
    %p372 = scmp.ne.s32.totalorder %s363, %s364
    %p373 = scmp.eq.s32.totalorder %s33, 0
    %p374 = por %p372, %p373
    %p375 = scmp.ne.s32.totalorder %s363, %s364
    %p376 = scmp.eq.s32.totalorder %s34, 1
    %p377 = por %p375, %p376
    %p379 = scmp.ne.s32.totalorder %s364, %s378
    %p380 = scmp.eq.s32.totalorder %s34, 0
    %p381 = por %p379, %p380
    %s383 = sadd.s32 %s382, 1
    %p386 = scmp.eq.s32.totalorder %s28, 1
    %p387 = scmp.ne.s32.totalorder %s382, %s384
    %p388 = scmp.eq.s32.totalorder %s28, 0
    %p389 = por %p387, %p388
    %p390 = scmp.ne.s32.totalorder %s382, %s384
    %p391 = scmp.eq.s32.totalorder %s33, 1
    %p392 = por %p390, %p391
    %p393 = scmp.ne.s32.totalorder %s384, %s385
    %p394 = scmp.eq.s32.totalorder %s33, 0
    %p395 = por %p393, %p394
    %p396 = scmp.ne.s32.totalorder %s384, %s385
    %p397 = scmp.eq.s32.totalorder %s34, 1
    %p398 = por %p396, %p397
    %p400 = scmp.ne.s32.totalorder %s385, %s399
    %p401 = scmp.eq.s32.totalorder %s34, 0
    %p402 = por %p400, %p401
    %s404 = sadd.s32 %s403, 1
    %p407 = scmp.eq.s32.totalorder %s28, 1
    %p408 = scmp.ne.s32.totalorder %s403, %s405
    %p409 = scmp.eq.s32.totalorder %s28, 0
    %p410 = por %p408, %p409
    %p411 = scmp.ne.s32.totalorder %s403, %s405
    %p412 = scmp.eq.s32.totalorder %s33, 1
    %p413 = por %p411, %p412
    %p414 = scmp.ne.s32.totalorder %s405, %s406
    %p415 = scmp.eq.s32.totalorder %s33, 0
    %p416 = por %p414, %p415
    %p417 = scmp.ne.s32.totalorder %s405, %s406
    %p418 = scmp.eq.s32.totalorder %s34, 1
    %p419 = por %p417, %p418
    %p421 = scmp.ne.s32.totalorder %s406, %s420
    %p422 = scmp.eq.s32.totalorder %s34, 0
    %p423 = por %p421, %p422
    %s425 = sadd.s32 %s424, 1
    %p428 = scmp.eq.s32.totalorder %s28, 1
    %p429 = scmp.ne.s32.totalorder %s424, %s426
    %p430 = scmp.eq.s32.totalorder %s28, 0
    %p431 = por %p429, %p430
    %p432 = scmp.ne.s32.totalorder %s424, %s426
    %p433 = scmp.eq.s32.totalorder %s33, 1
    %p434 = por %p432, %p433
    %p435 = scmp.ne.s32.totalorder %s426, %s427
    %p436 = scmp.eq.s32.totalorder %s33, 0
    %p437 = por %p435, %p436
    %p438 = scmp.ne.s32.totalorder %s426, %s427
    %p439 = scmp.eq.s32.totalorder %s34, 1
    %p440 = por %p438, %p439
    %p442 = scmp.ne.s32.totalorder %s427, %s441
    %p443 = scmp.eq.s32.totalorder %s34, 0
    %p444 = por %p442, %p443
    %s446 = sadd.s32 %s445, 1
    %p449 = scmp.eq.s32.totalorder %s28, 1
    %p450 = scmp.ne.s32.totalorder %s445, %s447
    %p451 = scmp.eq.s32.totalorder %s28, 0
    %p452 = por %p450, %p451
    %p453 = scmp.ne.s32.totalorder %s445, %s447
    %p454 = scmp.eq.s32.totalorder %s33, 1
    %p455 = por %p453, %p454
    %p456 = scmp.ne.s32.totalorder %s447, %s448
    %p457 = scmp.eq.s32.totalorder %s33, 0
    %p458 = por %p456, %p457
    %p459 = scmp.ne.s32.totalorder %s447, %s448
    %p460 = scmp.eq.s32.totalorder %s34, 1
    %p461 = por %p459, %p460
    %p463 = scmp.ne.s32.totalorder %s448, %s462
    %p464 = scmp.eq.s32.totalorder %s34, 0
    %p465 = por %p463, %p464
    %s466 = ssub.s32 %s28, %s35
    %p467 = scmp.eq.s32.totalorder %s466, 0
    %s469 = sadd.s32 %s468, 1
    %s470 = scalar_select %p467, %s468, %s469
    %p473 = pneg %p467
    %p474 = scmp.eq.s32.totalorder %s28, 1
    %p475 = por %p473, %p474
    %p476 = scmp.ne.s32.totalorder %s468, %s471
    %p477 = scmp.eq.s32.totalorder %s28, 0
    %p478 = por %p476, %p477
    %p479 = scmp.ne.s32.totalorder %s468, %s471
    %p480 = scmp.eq.s32.totalorder %s33, 1
    %p481 = por %p479, %p480
    %p482 = scmp.ne.s32.totalorder %s471, %s472
    %p483 = scmp.eq.s32.totalorder %s33, 0
    %p484 = por %p482, %p483
    %p485 = scmp.ne.s32.totalorder %s471, %s472
    %p486 = scmp.eq.s32.totalorder %s34, 1
    %p487 = por %p485, %p486
    %p489 = scmp.ne.s32.totalorder %s472, %s488
    %p490 = scmp.eq.s32.totalorder %s34, 0
    %p491 = por %p489, %p490
    %p492 = scmp.le.s32.totalorder 1, %s28
    %p493 = scmp.lt.s32.totalorder %s28, 3
    %p494 = pnand %p492, %p493
    %p495 = pneg %p494
    // Predicated region
    $region9: #{_device_forward.1} parent=5 // pred_check
      _
    $region10: #{_device_forward.1} parent=5 // pred_check_branch
      %497 = sbr.rel (%p494) target = $region12
    $region11: #{_device_forward.1} parent=5 // pred_region
      %s498 = ssub.s32 %s28, 1
      // Predicated region
      $region13: #{_device_forward.1} parent=11 // pred_check
        %p499 = pneg %p101
      $region14: #{_device_forward.1} parent=11 // pred_check_branch
        %501 = sbr.rel (%p499) target = $region16
      $region15: #{_device_forward.1} parent=11 // pred_region
        _
      $region16: #{_device_forward.1} parent=11 // pred_fallthru
        _
      // Predicated region
      $region17: #{_device_forward.1} parent=11 // pred_check
        %p502 = pneg %p122
      $region18: #{_device_forward.1} parent=11 // pred_check_branch
        %504 = sbr.rel (%p502) target = $region20
      $region19: #{_device_forward.1} parent=11 // pred_region
        _
      $region20: #{_device_forward.1} parent=11 // pred_fallthru
        _
      // Predicated region
      $region21: #{_device_forward.1} parent=11 // pred_check
        %p505 = pneg %p143
      $region22: #{_device_forward.1} parent=11 // pred_check_branch
        %507 = sbr.rel (%p505) target = $region24
      $region23: #{_device_forward.1} parent=11 // pred_region
        _
      $region24: #{_device_forward.1} parent=11 // pred_fallthru
        _
      // Predicated region
      $region25: #{_device_forward.1} parent=11 // pred_check
        %p508 = pneg %p164
      $region26: #{_device_forward.1} parent=11 // pred_check_branch
        %510 = sbr.rel (%p508) target = $region28
      $region27: #{_device_forward.1} parent=11 // pred_region
        _
      $region28: #{_device_forward.1} parent=11 // pred_fallthru
        _
      // Predicated region
      $region29: #{_device_forward.1} parent=11 // pred_check
        %p511 = pneg %p185
      $region30: #{_device_forward.1} parent=11 // pred_check_branch
        %513 = sbr.rel (%p511) target = $region32
      $region31: #{_device_forward.1} parent=11 // pred_region
        _
      $region32: #{_device_forward.1} parent=11 // pred_fallthru
        _
      // Predicated region
      $region33: #{_device_forward.1} parent=11 // pred_check
        %p514 = pneg %p206
      $region34: #{_device_forward.1} parent=11 // pred_check_branch
        %516 = sbr.rel (%p514) target = $region36
      $region35: #{_device_forward.1} parent=11 // pred_region
        _
      $region36: #{_device_forward.1} parent=11 // pred_fallthru
        _
      // Predicated region
      $region37: #{_device_forward.1} parent=11 // pred_check
        %p517 = pneg %p227
      $region38: #{_device_forward.1} parent=11 // pred_check_branch
        %519 = sbr.rel (%p517) target = $region40
      $region39: #{_device_forward.1} parent=11 // pred_region
        _
      $region40: #{_device_forward.1} parent=11 // pred_fallthru
        _
      // Predicated region
      $region41: #{_device_forward.1} parent=11 // pred_check
        %p520 = pneg %p248
      $region42: #{_device_forward.1} parent=11 // pred_check_branch
        %522 = sbr.rel (%p520) target = $region44
      $region43: #{_device_forward.1} parent=11 // pred_region
        _
      $region44: #{_device_forward.1} parent=11 // pred_fallthru
        _
      // Predicated region
      $region45: #{_device_forward.1} parent=11 // pred_check
        %p523 = pneg %p269
      $region46: #{_device_forward.1} parent=11 // pred_check_branch
        %525 = sbr.rel (%p523) target = $region48
      $region47: #{_device_forward.1} parent=11 // pred_region
        _
      $region48: #{_device_forward.1} parent=11 // pred_fallthru
        _
      // Predicated region
      $region49: #{_device_forward.1} parent=11 // pred_check
        %p526 = pneg %p290
      $region50: #{_device_forward.1} parent=11 // pred_check_branch
        %528 = sbr.rel (%p526) target = $region52
      $region51: #{_device_forward.1} parent=11 // pred_region
        _
      $region52: #{_device_forward.1} parent=11 // pred_fallthru
        _
      // Predicated region
      $region53: #{_device_forward.1} parent=11 // pred_check
        %p529 = pneg %p311
      $region54: #{_device_forward.1} parent=11 // pred_check_branch
        %531 = sbr.rel (%p529) target = $region56
      $region55: #{_device_forward.1} parent=11 // pred_region
        _
      $region56: #{_device_forward.1} parent=11 // pred_fallthru
        _
      // Predicated region
      $region57: #{_device_forward.1} parent=11 // pred_check
        %p532 = pneg %p332
      $region58: #{_device_forward.1} parent=11 // pred_check_branch
        %534 = sbr.rel (%p532) target = $region60
      $region59: #{_device_forward.1} parent=11 // pred_region
        _
      $region60: #{_device_forward.1} parent=11 // pred_fallthru
        _
      // Predicated region
      $region61: #{_device_forward.1} parent=11 // pred_check
        %p535 = pneg %p353
      $region62: #{_device_forward.1} parent=11 // pred_check_branch
        %537 = sbr.rel (%p535) target = $region64
      $region63: #{_device_forward.1} parent=11 // pred_region
        _
      $region64: #{_device_forward.1} parent=11 // pred_fallthru
        _
      // Predicated region
      $region65: #{_device_forward.1} parent=11 // pred_check
        %p538 = pneg %p374
      $region66: #{_device_forward.1} parent=11 // pred_check_branch
        %540 = sbr.rel (%p538) target = $region68
      $region67: #{_device_forward.1} parent=11 // pred_region
        _
      $region68: #{_device_forward.1} parent=11 // pred_fallthru
        _
      // Predicated region
      $region69: #{_device_forward.1} parent=11 // pred_check
        %p541 = pneg %p395
      $region70: #{_device_forward.1} parent=11 // pred_check_branch
        %543 = sbr.rel (%p541) target = $region72
      $region71: #{_device_forward.1} parent=11 // pred_region
        _
      $region72: #{_device_forward.1} parent=11 // pred_fallthru
        _
      // Predicated region
      $region73: #{_device_forward.1} parent=11 // pred_check
        %p544 = pneg %p416
      $region74: #{_device_forward.1} parent=11 // pred_check_branch
        %546 = sbr.rel (%p544) target = $region76
      $region75: #{_device_forward.1} parent=11 // pred_region
        _
      $region76: #{_device_forward.1} parent=11 // pred_fallthru
        _
      // Predicated region
      $region77: #{_device_forward.1} parent=11 // pred_check
        %p547 = pneg %p437
      $region78: #{_device_forward.1} parent=11 // pred_check_branch
        %549 = sbr.rel (%p547) target = $region80
      $region79: #{_device_forward.1} parent=11 // pred_region
        _
      $region80: #{_device_forward.1} parent=11 // pred_fallthru
        _
      // Predicated region
      $region81: #{_device_forward.1} parent=11 // pred_check
        %p550 = pneg %p458
      $region82: #{_device_forward.1} parent=11 // pred_check_branch
        %552 = sbr.rel (%p550) target = $region84
      $region83: #{_device_forward.1} parent=11 // pred_region
        _
      $region84: #{_device_forward.1} parent=11 // pred_fallthru
        _
    $region12: #{_device_forward.1} parent=5 // pred_fallthru
      _
    %p553 = scmp.lt.s32.totalorder %s28, 2
    // Predicated region
    $region85: #{_device_forward.1} parent=5 // pred_check
      %p554 = pneg %p553
    $region86: #{_device_forward.1} parent=5 // pred_check_branch
      %556 = sbr.rel (%p554) target = $region88
    $region87: #{_device_forward.1} parent=5 // pred_region
      // Predicated region
      $region89: #{_device_forward.1} parent=87 // pred_check
        %p557 = pneg %p48
      $region90: #{_device_forward.1} parent=87 // pred_check_branch
        %559 = sbr.rel (%p557) target = $region92
      $region91: #{_device_forward.1} parent=87 // pred_region
        %p560 = scmp.lt.s32.totalorder %s28, 1
        %s561 = scalar_select %p560, %s28, 1
        %s562 = smul.addr %s561, 2
        %s563 = smul.addr %s562, 8
        %s564 = scalar_lea.vmem %s0, %s563
      $region92: #{_device_forward.1} parent=87 // pred_fallthru
        _
      // Predicated region
      $region93: #{_device_forward.1} parent=87 // pred_check
        %p565 = pneg %p74
      $region94: #{_device_forward.1} parent=87 // pred_check_branch
        %567 = sbr.rel (%p565) target = $region96
      $region95: #{_device_forward.1} parent=87 // pred_region
        %p568 = scmp.lt.s32.totalorder %s28, 1
        %s569 = scalar_select %p568, %s28, 1
        %s570 = scalar_lea.vmem %s1, %s569
      $region96: #{_device_forward.1} parent=87 // pred_fallthru
        _
    $region88: #{_device_forward.1} parent=5 // pred_fallthru
      _
    %p571 = scmp.le.s32.totalorder 1, %s28
    %p572 = scmp.lt.s32.totalorder %s28, 3
    %p573 = pnand %p571, %p572
    %p574 = pneg %p573
    // Predicated region
    $region97: #{_device_forward.1} parent=5 // pred_check
      _
    $region98: #{_device_forward.1} parent=5 // pred_check_branch
      %576 = sbr.rel (%p573) target = $region100
    $region99: #{_device_forward.1} parent=5 // pred_region
      %s577 = ssub.s32 %s28, 1
      %p578 = scmp.lt.s32.totalorder %s33, 1
      %s579 = scalar_select %p578, %s33, 1
      %s580 = smul.addr %s579, 2
      %s581 = smul.addr %s580, 8
      %s582 = scalar_lea.vmem %s0, %s581
      %p583 = pneg %p54
      %p584 = pneg %p51
      %p585 = scmp.lt.s32.totalorder %s33, 1
      %s586 = scalar_select %p585, %s33, 1
      %s587 = scalar_lea.vmem %s1, %s586
      %p588 = pneg %p80
      %p589 = pneg %p77
      %p590 = pneg %p101
      %p591 = pneg %p98
      %p592 = pneg %p122
      %p593 = pneg %p119
      %p594 = pneg %p143
      %p595 = pneg %p140
      %p596 = pneg %p164
      %p597 = pneg %p161
      %p598 = pneg %p185
      %p599 = pneg %p182
      %p600 = pneg %p206
      %p601 = pneg %p203
      %p602 = pneg %p227
      %p603 = pneg %p224
      %p604 = pneg %p248
      %p605 = pneg %p245
      %p606 = pneg %p269
      %p607 = pneg %p266
      %p608 = pneg %p290
      %p609 = pneg %p287
      %p610 = pneg %p311
      %p611 = pneg %p308
      %p612 = pneg %p332
      %p613 = pneg %p329
      %p614 = pneg %p353
      %p615 = pneg %p350
      %p616 = pneg %p374
      %p617 = pneg %p371
      %p618 = pneg %p395
      %p619 = pneg %p392
      %p620 = pneg %p416
      %p621 = pneg %p413
      %p622 = pneg %p437
      %p623 = pneg %p434
      %p624 = pneg %p458
      %p625 = pneg %p455
      %p626 = pneg %p484
      %p627 = pneg %p481
      %p628 = scmp.lt.s32.totalorder %s33, 1
      %s629 = scalar_select %p628, %s33, 1
      %s630 = scalar_lea.vmem %s20, %s629
      %p631 = scmp.lt.s32.totalorder %s33, 1
      %s632 = scalar_select %p631, %s33, 1
      %s633 = smul.addr %s632, 2
      %s634 = smul.addr %s633, 8
      %s635 = scalar_lea.vmem %s0, %s634
      %p636 = scmp.lt.s32.totalorder %s33, 1
      %s637 = scalar_select %p636, %s33, 1
      %s638 = scalar_lea.vmem %s1, %s637
      %p639 = scmp.lt.s32.totalorder %s33, 1
      %s640 = scalar_select %p639, %s33, 1
      %s641 = scalar_lea.vmem %s20, %s640
      %v642 = vld [vmem:[%s638] sm:$0x1]
      %v643 = vld [vmem:[%s635] sm:$0xff]
      %v644 = vld [vmem:[%s635 + $0x8] sm:$0xff]
      %v645 = vld [vmem:[%s2] sm:$0x1]
      %v646 = vld [vmem:[%s3] sm:$0x1]
      %vm647 = vcmask 261120
      %v648 = vsel %vm647, %v643, 0.0
      %649 = vadd.xlane.f32.xlu0 %v648
      %v650 = vpop.xlane.xlu0 %649
      %v651 = vsel %vm647, %v644, 0.0
      %652 = vadd.xlane.f32.xlu0 %v651
      %v653 = vpop.xlane.xlu0 %652
      %v654 = vrcp.pop 32.0
      %v655 = vmul.f32 %v650, %v654
      %v656 = vmul.f32 %v653, %v654
      %v657 = vsub.f32 %v643, %v655
      %v658 = vsub.f32 %v644, %v656
      %v659 = vmul.f32 %v657, %v657
      %v660 = vmul.f32 %v658, %v658
      %v661 = vsel %vm647, %v659, 0.0
      %662 = vadd.xlane.f32.xlu0 %v661
      %v663 = vpop.xlane.xlu0 %662
      %v664 = vsel %vm647, %v660, 0.0
      %665 = vadd.xlane.f32.xlu0 %v664
      %v666 = vpop.xlane.xlu0 %665
      %v667 = vmul.f32 %v663, %v654
      %v668 = vmul.f32 %v666, %v654
      %v669 = vadd.f32 %v667, 1e-12
      %v670 = vadd.f32 %v668, 1e-12
      %v671 = vrsqrt.pop %v669
      %v672 = vrsqrt.pop %v670
      %v673 = vmul.f32 %v657, %v671
      %v674 = vmul.f32 %v658, %v672
      %v676 = vlaneseq
      %v677 = vshrl.u32 %v676, 7
      %v678 = vsub.s32 0, %v677
      %v679 = vrot.slane %v645, %v678
      %v681 = vmul.f32 %v673, %v679
      %v682 = vmul.f32 %v674, %v679
      %v684 = vlaneseq
      %v685 = vshrl.u32 %v684, 7
      %v686 = vsub.s32 0, %v685
      %v687 = vrot.slane %v646, %v686
      %v689 = vadd.f32 %v681, %v687
      %v690 = vadd.f32 %v682, %v687
      %v691 = vld [vmem:[%s4] sm:$0xff]
      %v692 = vld [vmem:[%s4 + $0x8] sm:$0xff]
      %v693 = vld [vmem:[%s4 + $0x10] sm:$0xff]
      %v694 = vld [vmem:[%s4 + $0x18] sm:$0xff]
      %v695 = vld [vmem:[%s5] sm:$0x1]
      %v697 = vlaneseq
      %v698 = vshrl.u32 %v697, 7
      %v699 = vsub.s32 0, %v698
      %v700 = vrot.slane %v695, %v699
      %v703 = vsel %vm647, %v689, 0
      %v706 = vsel %vm647, %v690, 0
      %708 = vmatprep.subr.mxu0 0.0
      %709 = vmatpush1.msra.mxu0 %v691
      %710 = vmatprep.subr.mxu0 0.0
      %711 = vmatpush1.msra.mxu0 %v692
      %712 = vmatprep.subr.mxu0 0.0
      %713 = vmatpush1.msra.mxu0 %v693
      %714 = vmatprep.subr.mxu0 0.0
      %715 = vmatpush1.msra.mxu0 %v694
      %716 = vmatprep.subr.mxu0 0.0
      %717 = vmatpush1.msra.mxu0 0.0
      %718 = vmatprep.subr.mxu0 0.0
      %719 = vmatpush1.msra.mxu0 0.0
      %720 = vmatprep.subr.mxu0 0.0
      %721 = vmatpush1.msra.mxu0 0.0
      %722 = vmatprep.subr.mxu0 0.0
      %723 = vmatpush1.msra.mxu0 0.0
      %724 = vmatprep.subr.mxu0 0.0
      %725 = vmatpush1.msra.mxu0 0.0
      %726 = vmatprep.subr.mxu0 0.0
      %727 = vmatpush1.msra.mxu0 0.0
      %728 = vmatprep.subr.mxu0 0.0
      %729 = vmatpush1.msra.mxu0 0.0
      %730 = vmatprep.subr.mxu0 0.0
      %731 = vmatpush1.msra.mxu0 0.0
      %732 = vmatprep.subr.mxu0 0.0
      %733 = vmatpush1.msra.mxu0 0.0
      %734 = vmatprep.subr.mxu0 0.0
      %735 = vmatpush1.msra.mxu0 0.0
      %736 = vmatprep.subr.mxu0 0.0
      %737 = vmatpush1.msra.mxu0 0.0
      %738 = vmatprep.subr.mxu0 0.0
      %739 = vmatpush1.msra.mxu0 0.0
      %740 = vmatprep.subr.mxu0 0.0
      %741 = vmatpush1.msra.mxu0 0.0
      %742 = vmatprep.subr.mxu0 0.0
      %743 = vmatpush1.msra.mxu0 0.0
      %744 = vmatprep.subr.mxu0 0.0
      %745 = vmatpush1.msra.mxu0 0.0
      %746 = vmatprep.subr.mxu0 0.0
      %747 = vmatpush1.msra.mxu0 0.0
      %748 = vmatprep.subr.mxu0 0.0
      %749 = vmatpush1.msra.mxu0 0.0
      %750 = vmatprep.subr.mxu0 0.0
      %751 = vmatpush1.msra.mxu0 0.0
      %752 = vmatprep.subr.mxu0 0.0
      %753 = vmatpush1.msra.mxu0 0.0
      %754 = vmatprep.subr.mxu0 0.0
      %755 = vmatpush1.msra.mxu0 0.0
      %756 = vmatprep.subr.mxu0 0.0
      %757 = vmatpush1.msra.mxu0 0.0
      %758 = vmatprep.subr.mxu0 0.0
      %759 = vmatpush1.msra.mxu0 0.0
      %760 = vmatprep.subr.mxu0 0.0
      %761 = vmatpush1.msra.mxu0 0.0
      %762 = vmatprep.subr.mxu0 0.0
      %763 = vmatpush1.msra.mxu0 0.0
      %764 = vmatprep.subr.mxu0 0.0
      %765 = vmatpush1.msra.mxu0 0.0
      %766 = vmatprep.subr.mxu0 0.0
      %767 = vmatpush1.msra.mxu0 0.0
      %768 = vmatprep.subr.mxu0 0.0
      %769 = vmatpush1.msra.mxu0 0.0
      %770 = vmatprep.subr.mxu0 0.0
      %771 = vmatpush1.msra.mxu0 0.0
      %772 = vmatprep.mubr.f32.mxu0 0.0
      %773 = vmatmul.mubr.f32.gmra.mrb[0].mxu0 %v703
      %v774 = vpop.f32.mrb[0].mxu0
      %v775 = vadd.f32 %v700, %v774
      %v776 = vpop.f32.mrb[0].mxu0
      %777 = vmatprep.mubr.f32.mxu0 0.0
      %778 = vmatmul.mubr.f32.gmra.mrb[0].mxu0 %v706
      %v779 = vpop.f32.mrb[0].mxu0
      %v780 = vadd.f32 %v700, %v779
      %v781 = vpop.f32.mrb[0].mxu0
      %782 = vdwg.mxu0
      %v783 = vld [vmem:[%s6] sm:$0xff]
      %v784 = vld [vmem:[%s6 + $0x8] sm:$0xff]
      %v785 = vld [vmem:[%s6 + $0x10] sm:$0xff]
      %v786 = vld [vmem:[%s6 + $0x18] sm:$0xff]
      %v787 = vld [vmem:[%s7] sm:$0x1]
      %v789 = vlaneseq
      %v790 = vshrl.u32 %v789, 7
      %v791 = vsub.s32 0, %v790
      %v792 = vrot.slane %v787, %v791
      %796 = vrot.lane.b32.xlu0 %v775, 96
      %v797 = vpop.permute.xlu0 %796
      %798 = vrot.lane.b32.xlu0 %v780, 96
      %v799 = vpop.permute.xlu0 %798
      %vm800 = vcmask 64512
      %v801 = vsel %vm800, %v775, 0
      %v803 = vsel %vm800, %v780, 0
      %v805 = vsel %vm800, %v797, 0
      %v807 = vsel %vm800, %v799, 0
      %809 = vmatprep.subr.mxu0 0.0
      %810 = vmatpush1.xpose.msra.mxu0 %v805
      %811 = vmatprep.subr.mxu0 0.0
      %812 = vmatpush1.xpose.msra.mxu0 %v807
      %813 = vmatprep.subr.mxu0 0.0
      %814 = vmatpush1.xpose.msra.mxu0 0.0
      %815 = vmatprep.subr.mxu0 0.0
      %816 = vmatpush1.xpose.msra.mxu0 0.0
      %817 = vmatprep.subr.mxu0 0.0
      %818 = vmatpush1.xpose.msra.mxu0 0.0
      %819 = vmatprep.subr.mxu0 0.0
      %820 = vmatpush1.xpose.msra.mxu0 0.0
      %821 = vmatprep.subr.mxu0 0.0
      %822 = vmatpush1.xpose.msra.mxu0 0.0
      %823 = vmatprep.subr.mxu0 0.0
      %824 = vmatpush1.xpose.msra.mxu0 0.0
      %825 = vmatprep.subr.mxu0 0.0
      %826 = vmatpush1.xpose.msra.mxu0 0.0
      %827 = vmatprep.subr.mxu0 0.0
      %828 = vmatpush1.xpose.msra.mxu0 0.0
      %829 = vmatprep.subr.mxu0 0.0
      %830 = vmatpush1.xpose.msra.mxu0 0.0
      %831 = vmatprep.subr.mxu0 0.0
      %832 = vmatpush1.xpose.msra.mxu0 0.0
      %833 = vmatprep.subr.mxu0 0.0
      %834 = vmatpush1.xpose.msra.mxu0 0.0
      %835 = vmatprep.subr.mxu0 0.0
      %836 = vmatpush1.xpose.msra.mxu0 0.0
      %837 = vmatprep.subr.mxu0 0.0
      %838 = vmatpush1.xpose.msra.mxu0 0.0
      %839 = vmatprep.subr.mxu0 0.0
      %840 = vmatpush1.xpose.msra.mxu0 0.0
      %841 = vmatprep.subr.mxu0 0.0
      %842 = vmatpush1.xpose.msra.mxu0 0.0
      %843 = vmatprep.subr.mxu0 0.0
      %844 = vmatpush1.xpose.msra.mxu0 0.0
      %845 = vmatprep.subr.mxu0 0.0
      %846 = vmatpush1.xpose.msra.mxu0 0.0
      %847 = vmatprep.subr.mxu0 0.0
      %848 = vmatpush1.xpose.msra.mxu0 0.0
      %849 = vmatprep.subr.mxu0 0.0
      %850 = vmatpush1.xpose.msra.mxu0 0.0
      %851 = vmatprep.subr.mxu0 0.0
      %852 = vmatpush1.xpose.msra.mxu0 0.0
      %853 = vmatprep.subr.mxu0 0.0
      %854 = vmatpush1.xpose.msra.mxu0 0.0
      %855 = vmatprep.subr.mxu0 0.0
      %856 = vmatpush1.xpose.msra.mxu0 0.0
      %857 = vmatprep.subr.mxu0 0.0
      %858 = vmatpush1.xpose.msra.mxu0 0.0
      %859 = vmatprep.subr.mxu0 0.0
      %860 = vmatpush1.xpose.msra.mxu0 0.0
      %861 = vmatprep.subr.mxu0 0.0
      %862 = vmatpush1.xpose.msra.mxu0 0.0
      %863 = vmatprep.subr.mxu0 0.0
      %864 = vmatpush1.xpose.msra.mxu0 0.0
      %865 = vmatprep.subr.mxu0 0.0
      %866 = vmatpush1.xpose.msra.mxu0 0.0
      %867 = vmatprep.subr.mxu0 0.0
      %868 = vmatpush1.xpose.msra.mxu0 0.0
      %869 = vmatprep.subr.mxu0 0.0
      %870 = vmatpush1.xpose.msra.mxu0 0.0
      %871 = vmatprep.subr.mxu0 0.0
      %872 = vmatpush1.xpose.msra.mxu0 0.0
      %873 = vmatprep.mubr.f32.mxu0 0.0
      %874 = vmatmul.mubr.f32.gmra.mrb[0].mxu0 %v801
      %v875 = vpop.f32.mrb[0].mxu0
      %v876 = vadd.f32 0.0, %v875
      %v877 = vpop.f32.mrb[0].mxu0
      %878 = vmatprep.mubr.f32.mxu0 0.0
      %879 = vmatmul.mubr.f32.gmra.mrb[0].mxu0 %v803
      %v880 = vpop.f32.mrb[0].mxu0
      %v881 = vadd.f32 0.0, %v880
      %v882 = vpop.f32.mrb[0].mxu0
      %883 = vdwg.mxu0
      %v884 = vmul.f32 %v876, 0.35355338
      %v885 = vmul.f32 %v881, 0.35355338
      %v887 = vlaneseq
      %v888 = vshrl.u32 %v887, 7
      %v889 = vsub.s32 0, %v888
      %v890 = vrot.slane %v642, %v889
      %v892 = vadd.f32 %v884, %v890
      %v893 = vadd.f32 %v885, %v890
      %vm894 = vcmask 130048
      %v895 = vsel %vm894, %v892, -inf
      %896 = vmax.xlane.f32.xlu0 %v895
      %v897 = vpop.xlane.xlu0 %896
      %v898 = vsel %vm894, %v893, -inf
      %899 = vmax.xlane.f32.xlu0 %v898
      %v900 = vpop.xlane.xlu0 %899
      %v901 = vsub.f32 %v892, %v897
      %v902 = vsub.f32 %v893, %v900
      %v903 = vmul.f32 %v901, 1.442695
      %v904 = vpow.pop %v903
      %v905 = vmul.f32 %v902, 1.442695
      %v906 = vpow.pop %v905
      %v907 = vsel %vm894, %v904, 0.0
      %908 = vadd.xlane.f32.xlu0 %v907
      %v909 = vpop.xlane.xlu0 %908
      %v910 = vsel %vm894, %v906, 0.0
      %911 = vadd.xlane.f32.xlu0 %v910
      %v912 = vpop.xlane.xlu0 %911
      %v913 = vrcp.pop %v909
      %v914 = vrcp.pop %v912
      %v915 = vmul.f32 %v904, %v913
      %v916 = vmul.f32 %v906, %v914
      %917 = vrot.lane.b32.xlu0 %v775, 64
      %v918 = vpop.permute.xlu0 %917
      %919 = vrot.lane.b32.xlu0 %v780, 64
      %v920 = vpop.permute.xlu0 %919
      %v924 = vsel %vm894, %v915, 0
      %v927 = vsel %vm894, %v916, 0
      %929 = vmatprep.subr.mxu0 0.0
      %930 = vmatpush1.msra.mxu0 %v918
      %931 = vmatprep.subr.mxu0 0.0
      %932 = vmatpush1.msra.mxu0 %v920
      %933 = vmatprep.subr.mxu0 0.0
      %934 = vmatpush1.msra.mxu0 0.0
      %935 = vmatprep.subr.mxu0 0.0
      %936 = vmatpush1.msra.mxu0 0.0
      %937 = vmatprep.subr.mxu0 0.0
      %938 = vmatpush1.msra.mxu0 0.0
      %939 = vmatprep.subr.mxu0 0.0
      %940 = vmatpush1.msra.mxu0 0.0
      %941 = vmatprep.subr.mxu0 0.0
      %942 = vmatpush1.msra.mxu0 0.0
      %943 = vmatprep.subr.mxu0 0.0
      %944 = vmatpush1.msra.mxu0 0.0
      %945 = vmatprep.subr.mxu0 0.0
      %946 = vmatpush1.msra.mxu0 0.0
      %947 = vmatprep.subr.mxu0 0.0
      %948 = vmatpush1.msra.mxu0 0.0
      %949 = vmatprep.subr.mxu0 0.0
      %950 = vmatpush1.msra.mxu0 0.0
      %951 = vmatprep.subr.mxu0 0.0
      %952 = vmatpush1.msra.mxu0 0.0
      %953 = vmatprep.subr.mxu0 0.0
      %954 = vmatpush1.msra.mxu0 0.0
      %955 = vmatprep.subr.mxu0 0.0
      %956 = vmatpush1.msra.mxu0 0.0
      %957 = vmatprep.subr.mxu0 0.0
      %958 = vmatpush1.msra.mxu0 0.0
      %959 = vmatprep.subr.mxu0 0.0
      %960 = vmatpush1.msra.mxu0 0.0
      %961 = vmatprep.subr.mxu0 0.0
      %962 = vmatpush1.msra.mxu0 0.0
      %963 = vmatprep.subr.mxu0 0.0
      %964 = vmatpush1.msra.mxu0 0.0
      %965 = vmatprep.subr.mxu0 0.0
      %966 = vmatpush1.msra.mxu0 0.0
      %967 = vmatprep.subr.mxu0 0.0
      %968 = vmatpush1.msra.mxu0 0.0
      %969 = vmatprep.subr.mxu0 0.0
      %970 = vmatpush1.msra.mxu0 0.0
      %971 = vmatprep.subr.mxu0 0.0
      %972 = vmatpush1.msra.mxu0 0.0
      %973 = vmatprep.subr.mxu0 0.0
      %974 = vmatpush1.msra.mxu0 0.0
      %975 = vmatprep.subr.mxu0 0.0
      %976 = vmatpush1.msra.mxu0 0.0
      %977 = vmatprep.subr.mxu0 0.0
      %978 = vmatpush1.msra.mxu0 0.0
      %979 = vmatprep.subr.mxu0 0.0
      %980 = vmatpush1.msra.mxu0 0.0
      %981 = vmatprep.subr.mxu0 0.0
      %982 = vmatpush1.msra.mxu0 0.0
      %983 = vmatprep.subr.mxu0 0.0
      %984 = vmatpush1.msra.mxu0 0.0
      %985 = vmatprep.subr.mxu0 0.0
      %986 = vmatpush1.msra.mxu0 0.0
      %987 = vmatprep.subr.mxu0 0.0
      %988 = vmatpush1.msra.mxu0 0.0
      %989 = vmatprep.subr.mxu0 0.0
      %990 = vmatpush1.msra.mxu0 0.0
      %991 = vmatprep.subr.mxu0 0.0
      %992 = vmatpush1.msra.mxu0 0.0
      %993 = vmatprep.mubr.f32.mxu0 0.0
      %994 = vmatmul.mubr.f32.gmra.mrb[0].mxu0 %v924
      %v995 = vpop.f32.mrb[0].mxu0
      %v996 = vadd.f32 0.0, %v995
      %v997 = vpop.f32.mrb[0].mxu0
      %998 = vmatprep.mubr.f32.mxu0 0.0
      %999 = vmatmul.mubr.f32.gmra.mrb[0].mxu0 %v927
      %v1000 = vpop.f32.mrb[0].mxu0
      %v1001 = vadd.f32 0.0, %v1000
      %v1002 = vpop.f32.mrb[0].mxu0
      %1003 = vdwg.mxu0
      %v1005 = vsel %vm800, %v996, 0
      %v1008 = vsel %vm800, %v1001, 0
      %1010 = vmatprep.subr.mxu0 0.0
      %1011 = vmatpush1.msra.mxu0 %v783
      %1012 = vmatprep.subr.mxu0 0.0
      %1013 = vmatpush1.msra.mxu0 0.0
      %1014 = vmatprep.subr.mxu0 0.0
      %1015 = vmatpush1.msra.mxu0 0.0
      %1016 = vmatprep.subr.mxu0 0.0
      %1017 = vmatpush1.msra.mxu0 0.0
      %1018 = vmatprep.subr.mxu0 0.0
      %1019 = vmatpush1.msra.mxu0 0.0
      %1020 = vmatprep.subr.mxu0 0.0
      %1021 = vmatpush1.msra.mxu0 0.0
      %1022 = vmatprep.subr.mxu0 0.0
      %1023 = vmatpush1.msra.mxu0 0.0
      %1024 = vmatprep.subr.mxu0 0.0
      %1025 = vmatpush1.msra.mxu0 0.0
      %1026 = vmatprep.subr.mxu0 0.0
      %1027 = vmatpush1.msra.mxu0 0.0
      %1028 = vmatprep.subr.mxu0 0.0
      %1029 = vmatpush1.msra.mxu0 0.0
      %1030 = vmatprep.subr.mxu0 0.0
      %1031 = vmatpush1.msra.mxu0 0.0
      %1032 = vmatprep.subr.mxu0 0.0
      %1033 = vmatpush1.msra.mxu0 0.0
      %1034 = vmatprep.subr.mxu0 0.0
      %1035 = vmatpush1.msra.mxu0 0.0
      %1036 = vmatprep.subr.mxu0 0.0
      %1037 = vmatpush1.msra.mxu0 0.0
      %1038 = vmatprep.subr.mxu0 0.0
      %1039 = vmatpush1.msra.mxu0 0.0
      %1040 = vmatprep.subr.mxu0 0.0
      %1041 = vmatpush1.msra.mxu0 0.0
      %1042 = vmatprep.subr.mxu0 0.0
      %1043 = vmatpush1.msra.mxu0 0.0
      %1044 = vmatprep.subr.mxu0 0.0
      %1045 = vmatpush1.msra.mxu0 0.0
      %1046 = vmatprep.subr.mxu0 0.0
      %1047 = vmatpush1.msra.mxu0 0.0
      %1048 = vmatprep.subr.mxu0 0.0
      %1049 = vmatpush1.msra.mxu0 0.0
      %1050 = vmatprep.subr.mxu0 0.0
      %1051 = vmatpush1.msra.mxu0 0.0
      %1052 = vmatprep.subr.mxu0 0.0
      %1053 = vmatpush1.msra.mxu0 0.0
      %1054 = vmatprep.subr.mxu0 0.0
      %1055 = vmatpush1.msra.mxu0 0.0
      %1056 = vmatprep.subr.mxu0 0.0
      %1057 = vmatpush1.msra.mxu0 0.0
      %1058 = vmatprep.subr.mxu0 0.0
      %1059 = vmatpush1.msra.mxu0 0.0
      %1060 = vmatprep.subr.mxu0 0.0
      %1061 = vmatpush1.msra.mxu0 0.0
      %1062 = vmatprep.subr.mxu0 0.0
      %1063 = vmatpush1.msra.mxu0 0.0
      %1064 = vmatprep.subr.mxu0 0.0
      %1065 = vmatpush1.msra.mxu0 0.0
      %1066 = vmatprep.subr.mxu0 0.0
      %1067 = vmatpush1.msra.mxu0 0.0
      %1068 = vmatprep.subr.mxu0 0.0
      %1069 = vmatpush1.msra.mxu0 0.0
      %1070 = vmatprep.subr.mxu0 0.0
      %1071 = vmatpush1.msra.mxu0 0.0
      %1072 = vmatprep.subr.mxu0 0.0
      %1073 = vmatpush1.msra.mxu0 0.0
      %1074 = vmatprep.mubr.f32.mxu0 0.0
      %1075 = vmatmul.mubr.f32.gmra.mrb[0].mxu0 %v1005
      %v1076 = vpop.f32.mrb[0].mxu0
      %v1077 = vadd.f32 0.0, %v1076
      %v1078 = vpop.f32.mrb[0].mxu0
      %1079 = vmatprep.mubr.f32.mxu0 0.0
      %1080 = vmatmul.mubr.f32.gmra.mrb[0].mxu0 %v1008
      %v1081 = vpop.f32.mrb[0].mxu0
      %v1082 = vadd.f32 0.0, %v1081
      %v1083 = vpop.f32.mrb[0].mxu0
      %1084 = vdwg.mxu0
      %v1085 = vadd.f32 %v792, %v1077
      %v1086 = vadd.f32 %v792, %v1082
      %1087 = vrot.lane.b32.xlu0 %v775, 120
      %v1088 = vpop.permute.xlu0 %1087
      %1089 = vrot.lane.b32.xlu0 %v780, 120
      %v1090 = vpop.permute.xlu0 %1089
      %1091 = vrot.lane.b32.xlu0 %v775, 88
      %v1092 = vpop.permute.xlu0 %1091
      %1093 = vrot.lane.b32.xlu0 %v780, 88
      %v1094 = vpop.permute.xlu0 %1093
      %v1095 = vsel %vm800, %v1088, 0
      %v1097 = vsel %vm800, %v1090, 0
      %v1099 = vsel %vm800, %v1092, 0
      %v1101 = vsel %vm800, %v1094, 0
      %1103 = vmatprep.subr.mxu0 0.0
      %1104 = vmatpush1.xpose.msra.mxu0 %v1099
      %1105 = vmatprep.subr.mxu0 0.0
      %1106 = vmatpush1.xpose.msra.mxu0 %v1101
      %1107 = vmatprep.subr.mxu0 0.0
      %1108 = vmatpush1.xpose.msra.mxu0 0.0
      %1109 = vmatprep.subr.mxu0 0.0
      %1110 = vmatpush1.xpose.msra.mxu0 0.0
      %1111 = vmatprep.subr.mxu0 0.0
      %1112 = vmatpush1.xpose.msra.mxu0 0.0
      %1113 = vmatprep.subr.mxu0 0.0
      %1114 = vmatpush1.xpose.msra.mxu0 0.0
      %1115 = vmatprep.subr.mxu0 0.0
      %1116 = vmatpush1.xpose.msra.mxu0 0.0
      %1117 = vmatprep.subr.mxu0 0.0
      %1118 = vmatpush1.xpose.msra.mxu0 0.0
      %1119 = vmatprep.subr.mxu0 0.0
      %1120 = vmatpush1.xpose.msra.mxu0 0.0
      %1121 = vmatprep.subr.mxu0 0.0
      %1122 = vmatpush1.xpose.msra.mxu0 0.0
      %1123 = vmatprep.subr.mxu0 0.0
      %1124 = vmatpush1.xpose.msra.mxu0 0.0
      %1125 = vmatprep.subr.mxu0 0.0
      %1126 = vmatpush1.xpose.msra.mxu0 0.0
      %1127 = vmatprep.subr.mxu0 0.0
      %1128 = vmatpush1.xpose.msra.mxu0 0.0
      %1129 = vmatprep.subr.mxu0 0.0
      %1130 = vmatpush1.xpose.msra.mxu0 0.0
      %1131 = vmatprep.subr.mxu0 0.0
      %1132 = vmatpush1.xpose.msra.mxu0 0.0
      %1133 = vmatprep.subr.mxu0 0.0
      %1134 = vmatpush1.xpose.msra.mxu0 0.0
      %1135 = vmatprep.subr.mxu0 0.0
      %1136 = vmatpush1.xpose.msra.mxu0 0.0
      %1137 = vmatprep.subr.mxu0 0.0
      %1138 = vmatpush1.xpose.msra.mxu0 0.0
      %1139 = vmatprep.subr.mxu0 0.0
      %1140 = vmatpush1.xpose.msra.mxu0 0.0
      %1141 = vmatprep.subr.mxu0 0.0
      %1142 = vmatpush1.xpose.msra.mxu0 0.0
      %1143 = vmatprep.subr.mxu0 0.0
      %1144 = vmatpush1.xpose.msra.mxu0 0.0
      %1145 = vmatprep.subr.mxu0 0.0
      %1146 = vmatpush1.xpose.msra.mxu0 0.0
      %1147 = vmatprep.subr.mxu0 0.0
      %1148 = vmatpush1.xpose.msra.mxu0 0.0
      %1149 = vmatprep.subr.mxu0 0.0
      %1150 = vmatpush1.xpose.msra.mxu0 0.0
      %1151 = vmatprep.subr.mxu0 0.0
      %1152 = vmatpush1.xpose.msra.mxu0 0.0
      %1153 = vmatprep.subr.mxu0 0.0
      %1154 = vmatpush1.xpose.msra.mxu0 0.0
      %1155 = vmatprep.subr.mxu0 0.0
      %1156 = vmatpush1.xpose.msra.mxu0 0.0
      %1157 = vmatprep.subr.mxu0 0.0
      %1158 = vmatpush1.xpose.msra.mxu0 0.0
      %1159 = vmatprep.subr.mxu0 0.0
      %1160 = vmatpush1.xpose.msra.mxu0 0.0
      %1161 = vmatprep.subr.mxu0 0.0
      %1162 = vmatpush1.xpose.msra.mxu0 0.0
      %1163 = vmatprep.subr.mxu0 0.0
      %1164 = vmatpush1.xpose.msra.mxu0 0.0
      %1165 = vmatprep.subr.mxu0 0.0
      %1166 = vmatpush1.xpose.msra.mxu0 0.0
      %1167 = vmatprep.mubr.f32.mxu0 0.0
      %1168 = vmatmul.mubr.f32.gmra.mrb[0].mxu0 %v1095
      %v1169 = vpop.f32.mrb[0].mxu0
      %v1170 = vadd.f32 0.0, %v1169
      %v1171 = vpop.f32.mrb[0].mxu0
      %1172 = vmatprep.mubr.f32.mxu0 0.0
      %1173 = vmatmul.mubr.f32.gmra.mrb[0].mxu0 %v1097
      %v1174 = vpop.f32.mrb[0].mxu0
      %v1175 = vadd.f32 0.0, %v1174
      %v1176 = vpop.f32.mrb[0].mxu0
      %1177 = vdwg.mxu0
      %v1178 = vmul.f32 %v1170, 0.35355338
      %v1179 = vmul.f32 %v1175, 0.35355338
      %v1180 = vadd.f32 %v1178, %v890
      %v1181 = vadd.f32 %v1179, %v890
      %v1182 = vsel %vm894, %v1180, -inf
      %1183 = vmax.xlane.f32.xlu0 %v1182
      %v1184 = vpop.xlane.xlu0 %1183
      %v1185 = vsel %vm894, %v1181, -inf
      %1186 = vmax.xlane.f32.xlu0 %v1185
      %v1187 = vpop.xlane.xlu0 %1186
      %v1188 = vsub.f32 %v1180, %v1184
      %v1189 = vsub.f32 %v1181, %v1187
      %v1190 = vmul.f32 %v1188, 1.442695
      %v1191 = vpow.pop %v1190
      %v1192 = vmul.f32 %v1189, 1.442695
      %v1193 = vpow.pop %v1192
      %v1194 = vsel %vm894, %v1191, 0.0
      %1195 = vadd.xlane.f32.xlu0 %v1194
      %v1196 = vpop.xlane.xlu0 %1195
      %v1197 = vsel %vm894, %v1193, 0.0
      %1198 = vadd.xlane.f32.xlu0 %v1197
      %v1199 = vpop.xlane.xlu0 %1198
      %v1200 = vrcp.pop %v1196
      %v1201 = vrcp.pop %v1199
      %v1202 = vmul.f32 %v1191, %v1200
      %v1203 = vmul.f32 %v1193, %v1201
      %1204 = vrot.lane.b32.xlu0 %v775, 56
      %v1205 = vpop.permute.xlu0 %1204
      %1206 = vrot.lane.b32.xlu0 %v780, 56
      %v1207 = vpop.permute.xlu0 %1206
      %v1211 = vsel %vm894, %v1202, 0
      %v1214 = vsel %vm894, %v1203, 0
      %1216 = vmatprep.subr.mxu0 0.0
      %1217 = vmatpush1.msra.mxu0 %v1205
      %1218 = vmatprep.subr.mxu0 0.0
      %1219 = vmatpush1.msra.mxu0 %v1207
      %1220 = vmatprep.subr.mxu0 0.0
      %1221 = vmatpush1.msra.mxu0 0.0
      %1222 = vmatprep.subr.mxu0 0.0
      %1223 = vmatpush1.msra.mxu0 0.0
      %1224 = vmatprep.subr.mxu0 0.0
      %1225 = vmatpush1.msra.mxu0 0.0
      %1226 = vmatprep.subr.mxu0 0.0
      %1227 = vmatpush1.msra.mxu0 0.0
      %1228 = vmatprep.subr.mxu0 0.0
      %1229 = vmatpush1.msra.mxu0 0.0
      %1230 = vmatprep.subr.mxu0 0.0
      %1231 = vmatpush1.msra.mxu0 0.0
      %1232 = vmatprep.subr.mxu0 0.0
      %1233 = vmatpush1.msra.mxu0 0.0
      %1234 = vmatprep.subr.mxu0 0.0
      %1235 = vmatpush1.msra.mxu0 0.0
      %1236 = vmatprep.subr.mxu0 0.0
      %1237 = vmatpush1.msra.mxu0 0.0
      %1238 = vmatprep.subr.mxu0 0.0
      %1239 = vmatpush1.msra.mxu0 0.0
      %1240 = vmatprep.subr.mxu0 0.0
      %1241 = vmatpush1.msra.mxu0 0.0
      %1242 = vmatprep.subr.mxu0 0.0
      %1243 = vmatpush1.msra.mxu0 0.0
      %1244 = vmatprep.subr.mxu0 0.0
      %1245 = vmatpush1.msra.mxu0 0.0
      %1246 = vmatprep.subr.mxu0 0.0
      %1247 = vmatpush1.msra.mxu0 0.0
      %1248 = vmatprep.subr.mxu0 0.0
      %1249 = vmatpush1.msra.mxu0 0.0
      %1250 = vmatprep.subr.mxu0 0.0
      %1251 = vmatpush1.msra.mxu0 0.0
      %1252 = vmatprep.subr.mxu0 0.0
      %1253 = vmatpush1.msra.mxu0 0.0
      %1254 = vmatprep.subr.mxu0 0.0
      %1255 = vmatpush1.msra.mxu0 0.0
      %1256 = vmatprep.subr.mxu0 0.0
      %1257 = vmatpush1.msra.mxu0 0.0
      %1258 = vmatprep.subr.mxu0 0.0
      %1259 = vmatpush1.msra.mxu0 0.0
      %1260 = vmatprep.subr.mxu0 0.0
      %1261 = vmatpush1.msra.mxu0 0.0
      %1262 = vmatprep.subr.mxu0 0.0
      %1263 = vmatpush1.msra.mxu0 0.0
      %1264 = vmatprep.subr.mxu0 0.0
      %1265 = vmatpush1.msra.mxu0 0.0
      %1266 = vmatprep.subr.mxu0 0.0
      %1267 = vmatpush1.msra.mxu0 0.0
      %1268 = vmatprep.subr.mxu0 0.0
      %1269 = vmatpush1.msra.mxu0 0.0
      %1270 = vmatprep.subr.mxu0 0.0
      %1271 = vmatpush1.msra.mxu0 0.0
      %1272 = vmatprep.subr.mxu0 0.0
      %1273 = vmatpush1.msra.mxu0 0.0
      %1274 = vmatprep.subr.mxu0 0.0
      %1275 = vmatpush1.msra.mxu0 0.0
      %1276 = vmatprep.subr.mxu0 0.0
      %1277 = vmatpush1.msra.mxu0 0.0
      %1278 = vmatprep.subr.mxu0 0.0
      %1279 = vmatpush1.msra.mxu0 0.0
      %1280 = vmatprep.mubr.f32.mxu0 0.0
      %1281 = vmatmul.mubr.f32.gmra.mrb[0].mxu0 %v1211
      %v1282 = vpop.f32.mrb[0].mxu0
      %v1283 = vadd.f32 0.0, %v1282
      %v1284 = vpop.f32.mrb[0].mxu0
      %1285 = vmatprep.mubr.f32.mxu0 0.0
      %1286 = vmatmul.mubr.f32.gmra.mrb[0].mxu0 %v1214
      %v1287 = vpop.f32.mrb[0].mxu0
      %v1288 = vadd.f32 0.0, %v1287
      %v1289 = vpop.f32.mrb[0].mxu0
      %1290 = vdwg.mxu0
      %v1292 = vsel %vm800, %v1283, 0
      %v1295 = vsel %vm800, %v1288, 0
      %1297 = vmatprep.subr.mxu0 0.0
      %1298 = vmatpush1.msra.mxu0 %v784
      %1299 = vmatprep.subr.mxu0 0.0
      %1300 = vmatpush1.msra.mxu0 0.0
      %1301 = vmatprep.subr.mxu0 0.0
      %1302 = vmatpush1.msra.mxu0 0.0
      %1303 = vmatprep.subr.mxu0 0.0
      %1304 = vmatpush1.msra.mxu0 0.0
      %1305 = vmatprep.subr.mxu0 0.0
      %1306 = vmatpush1.msra.mxu0 0.0
      %1307 = vmatprep.subr.mxu0 0.0
      %1308 = vmatpush1.msra.mxu0 0.0
      %1309 = vmatprep.subr.mxu0 0.0
      %1310 = vmatpush1.msra.mxu0 0.0
      %1311 = vmatprep.subr.mxu0 0.0
      %1312 = vmatpush1.msra.mxu0 0.0
      %1313 = vmatprep.subr.mxu0 0.0
      %1314 = vmatpush1.msra.mxu0 0.0
      %1315 = vmatprep.subr.mxu0 0.0
      %1316 = vmatpush1.msra.mxu0 0.0
      %1317 = vmatprep.subr.mxu0 0.0
      %1318 = vmatpush1.msra.mxu0 0.0
      %1319 = vmatprep.subr.mxu0 0.0
      %1320 = vmatpush1.msra.mxu0 0.0
      %1321 = vmatprep.subr.mxu0 0.0
      %1322 = vmatpush1.msra.mxu0 0.0
      %1323 = vmatprep.subr.mxu0 0.0
      %1324 = vmatpush1.msra.mxu0 0.0
      %1325 = vmatprep.subr.mxu0 0.0
      %1326 = vmatpush1.msra.mxu0 0.0
      %1327 = vmatprep.subr.mxu0 0.0
      %1328 = vmatpush1.msra.mxu0 0.0
      %1329 = vmatprep.subr.mxu0 0.0
      %1330 = vmatpush1.msra.mxu0 0.0
      %1331 = vmatprep.subr.mxu0 0.0
      %1332 = vmatpush1.msra.mxu0 0.0
      %1333 = vmatprep.subr.mxu0 0.0
      %1334 = vmatpush1.msra.mxu0 0.0
      %1335 = vmatprep.subr.mxu0 0.0
      %1336 = vmatpush1.msra.mxu0 0.0
      %1337 = vmatprep.subr.mxu0 0.0
      %1338 = vmatpush1.msra.mxu0 0.0
      %1339 = vmatprep.subr.mxu0 0.0
      %1340 = vmatpush1.msra.mxu0 0.0
      %1341 = vmatprep.subr.mxu0 0.0
      %1342 = vmatpush1.msra.mxu0 0.0
      %1343 = vmatprep.subr.mxu0 0.0
      %1344 = vmatpush1.msra.mxu0 0.0
      %1345 = vmatprep.subr.mxu0 0.0
      %1346 = vmatpush1.msra.mxu0 0.0
      %1347 = vmatprep.subr.mxu0 0.0
      %1348 = vmatpush1.msra.mxu0 0.0
      %1349 = vmatprep.subr.mxu0 0.0
      %1350 = vmatpush1.msra.mxu0 0.0
      %1351 = vmatprep.subr.mxu0 0.0
      %1352 = vmatpush1.msra.mxu0 0.0
      %1353 = vmatprep.subr.mxu0 0.0
      %1354 = vmatpush1.msra.mxu0 0.0
      %1355 = vmatprep.subr.mxu0 0.0
      %1356 = vmatpush1.msra.mxu0 0.0
      %1357 = vmatprep.subr.mxu0 0.0
      %1358 = vmatpush1.msra.mxu0 0.0
      %1359 = vmatprep.subr.mxu0 0.0
      %1360 = vmatpush1.msra.mxu0 0.0
      %1361 = vmatprep.mubr.f32.mxu0 0.0
      %1362 = vmatmul.mubr.f32.gmra.mrb[0].mxu0 %v1292
      %v1363 = vpop.f32.mrb[0].mxu0
      %v1364 = vadd.f32 0.0, %v1363
      %v1365 = vpop.f32.mrb[0].mxu0
      %1366 = vmatprep.mubr.f32.mxu0 0.0
      %1367 = vmatmul.mubr.f32.gmra.mrb[0].mxu0 %v1295
      %v1368 = vpop.f32.mrb[0].mxu0
      %v1369 = vadd.f32 0.0, %v1368
      %v1370 = vpop.f32.mrb[0].mxu0
      %1371 = vdwg.mxu0
      %v1372 = vadd.f32 %v1085, %v1364
      %v1373 = vadd.f32 %v1086, %v1369
      %1374 = vrot.lane.b32.xlu0 %v775, 112
      %v1375 = vpop.permute.xlu0 %1374
      %1376 = vrot.lane.b32.xlu0 %v780, 112
      %v1377 = vpop.permute.xlu0 %1376
      %1378 = vrot.lane.b32.xlu0 %v775, 80
      %v1379 = vpop.permute.xlu0 %1378
      %1380 = vrot.lane.b32.xlu0 %v780, 80
      %v1381 = vpop.permute.xlu0 %1380
      %v1382 = vsel %vm800, %v1375, 0
      %v1384 = vsel %vm800, %v1377, 0
      %v1386 = vsel %vm800, %v1379, 0
      %v1388 = vsel %vm800, %v1381, 0
      %1390 = vmatprep.subr.mxu0 0.0
      %1391 = vmatpush1.xpose.msra.mxu0 %v1386
      %1392 = vmatprep.subr.mxu0 0.0
      %1393 = vmatpush1.xpose.msra.mxu0 %v1388
      %1394 = vmatprep.subr.mxu0 0.0
      %1395 = vmatpush1.xpose.msra.mxu0 0.0
      %1396 = vmatprep.subr.mxu0 0.0
      %1397 = vmatpush1.xpose.msra.mxu0 0.0
      %1398 = vmatprep.subr.mxu0 0.0
      %1399 = vmatpush1.xpose.msra.mxu0 0.0
      %1400 = vmatprep.subr.mxu0 0.0
      %1401 = vmatpush1.xpose.msra.mxu0 0.0
      %1402 = vmatprep.subr.mxu0 0.0
      %1403 = vmatpush1.xpose.msra.mxu0 0.0
      %1404 = vmatprep.subr.mxu0 0.0
      %1405 = vmatpush1.xpose.msra.mxu0 0.0
      %1406 = vmatprep.subr.mxu0 0.0
      %1407 = vmatpush1.xpose.msra.mxu0 0.0
      %1408 = vmatprep.subr.mxu0 0.0
      %1409 = vmatpush1.xpose.msra.mxu0 0.0
      %1410 = vmatprep.subr.mxu0 0.0
      %1411 = vmatpush1.xpose.msra.mxu0 0.0
      %1412 = vmatprep.subr.mxu0 0.0
      %1413 = vmatpush1.xpose.msra.mxu0 0.0
      %1414 = vmatprep.subr.mxu0 0.0
      %1415 = vmatpush1.xpose.msra.mxu0 0.0
      %1416 = vmatprep.subr.mxu0 0.0
      %1417 = vmatpush1.xpose.msra.mxu0 0.0
      %1418 = vmatprep.subr.mxu0 0.0
      %1419 = vmatpush1.xpose.msra.mxu0 0.0
      %1420 = vmatprep.subr.mxu0 0.0
      %1421 = vmatpush1.xpose.msra.mxu0 0.0
      %1422 = vmatprep.subr.mxu0 0.0
      %1423 = vmatpush1.xpose.msra.mxu0 0.0
      %1424 = vmatprep.subr.mxu0 0.0
      %1425 = vmatpush1.xpose.msra.mxu0 0.0
      %1426 = vmatprep.subr.mxu0 0.0
      %1427 = vmatpush1.xpose.msra.mxu0 0.0
      %1428 = vmatprep.subr.mxu0 0.0
      %1429 = vmatpush1.xpose.msra.mxu0 0.0
      %1430 = vmatprep.subr.mxu0 0.0
      %1431 = vmatpush1.xpose.msra.mxu0 0.0
      %1432 = vmatprep.subr.mxu0 0.0
      %1433 = vmatpush1.xpose.msra.mxu0 0.0
      %1434 = vmatprep.subr.mxu0 0.0
      %1435 = vmatpush1.xpose.msra.mxu0 0.0
      %1436 = vmatprep.subr.mxu0 0.0
      %1437 = vmatpush1.xpose.msra.mxu0 0.0
      %1438 = vmatprep.subr.mxu0 0.0
      %1439 = vmatpush1.xpose.msra.mxu0 0.0
      %1440 = vmatprep.subr.mxu0 0.0
      %1441 = vmatpush1.xpose.msra.mxu0 0.0
      %1442 = vmatprep.subr.mxu0 0.0
      %1443 = vmatpush1.xpose.msra.mxu0 0.0
      %1444 = vmatprep.subr.mxu0 0.0
      %1445 = vmatpush1.xpose.msra.mxu0 0.0
      %1446 = vmatprep.subr.mxu0 0.0
      %1447 = vmatpush1.xpose.msra.mxu0 0.0
      %1448 = vmatprep.subr.mxu0 0.0
      %1449 = vmatpush1.xpose.msra.mxu0 0.0
      %1450 = vmatprep.subr.mxu0 0.0
      %1451 = vmatpush1.xpose.msra.mxu0 0.0
      %1452 = vmatprep.subr.mxu0 0.0
      %1453 = vmatpush1.xpose.msra.mxu0 0.0
      %1454 = vmatprep.mubr.f32.mxu0 0.0
      %1455 = vmatmul.mubr.f32.gmra.mrb[0].mxu0 %v1382
      %v1456 = vpop.f32.mrb[0].mxu0
      %v1457 = vadd.f32 0.0, %v1456
      %v1458 = vpop.f32.mrb[0].mxu0
      %1459 = vmatprep.mubr.f32.mxu0 0.0
      %1460 = vmatmul.mubr.f32.gmra.mrb[0].mxu0 %v1384
      %v1461 = vpop.f32.mrb[0].mxu0
      %v1462 = vadd.f32 0.0, %v1461
      %v1463 = vpop.f32.mrb[0].mxu0
      %1464 = vdwg.mxu0
      %v1465 = vmul.f32 %v1457, 0.35355338
      %v1466 = vmul.f32 %v1462, 0.35355338
      %v1467 = vadd.f32 %v1465, %v890
      %v1468 = vadd.f32 %v1466, %v890
      %v1469 = vsel %vm894, %v1467, -inf
      %1470 = vmax.xlane.f32.xlu0 %v1469
      %v1471 = vpop.xlane.xlu0 %1470
      %v1472 = vsel %vm894, %v1468, -inf
      %1473 = vmax.xlane.f32.xlu0 %v1472
      %v1474 = vpop.xlane.xlu0 %1473
      %v1475 = vsub.f32 %v1467, %v1471
      %v1476 = vsub.f32 %v1468, %v1474
      %v1477 = vmul.f32 %v1475, 1.442695
      %v1478 = vpow.pop %v1477
      %v1479 = vmul.f32 %v1476, 1.442695
      %v1480 = vpow.pop %v1479
      %v1481 = vsel %vm894, %v1478, 0.0
      %1482 = vadd.xlane.f32.xlu0 %v1481
      %v1483 = vpop.xlane.xlu0 %1482
      %v1484 = vsel %vm894, %v1480, 0.0
      %1485 = vadd.xlane.f32.xlu0 %v1484
      %v1486 = vpop.xlane.xlu0 %1485
      %v1487 = vrcp.pop %v1483
      %v1488 = vrcp.pop %v1486
      %v1489 = vmul.f32 %v1478, %v1487
      %v1490 = vmul.f32 %v1480, %v1488
      %1491 = vrot.lane.b32.xlu0 %v775, 48
      %v1492 = vpop.permute.xlu0 %1491
      %1493 = vrot.lane.b32.xlu0 %v780, 48
      %v1494 = vpop.permute.xlu0 %1493
      %v1498 = vsel %vm894, %v1489, 0
      %v1501 = vsel %vm894, %v1490, 0
      %1503 = vmatprep.subr.mxu0 0.0
      %1504 = vmatpush1.msra.mxu0 %v1492
      %1505 = vmatprep.subr.mxu0 0.0
      %1506 = vmatpush1.msra.mxu0 %v1494
      %1507 = vmatprep.subr.mxu0 0.0
      %1508 = vmatpush1.msra.mxu0 0.0
      %1509 = vmatprep.subr.mxu0 0.0
      %1510 = vmatpush1.msra.mxu0 0.0
      %1511 = vmatprep.subr.mxu0 0.0
      %1512 = vmatpush1.msra.mxu0 0.0
      %1513 = vmatprep.subr.mxu0 0.0
      %1514 = vmatpush1.msra.mxu0 0.0
      %1515 = vmatprep.subr.mxu0 0.0
      %1516 = vmatpush1.msra.mxu0 0.0
      %1517 = vmatprep.subr.mxu0 0.0
      %1518 = vmatpush1.msra.mxu0 0.0
      %1519 = vmatprep.subr.mxu0 0.0
      %1520 = vmatpush1.msra.mxu0 0.0
      %1521 = vmatprep.subr.mxu0 0.0
      %1522 = vmatpush1.msra.mxu0 0.0
      %1523 = vmatprep.subr.mxu0 0.0
      %1524 = vmatpush1.msra.mxu0 0.0
      %1525 = vmatprep.subr.mxu0 0.0
      %1526 = vmatpush1.msra.mxu0 0.0
      %1527 = vmatprep.subr.mxu0 0.0
      %1528 = vmatpush1.msra.mxu0 0.0
      %1529 = vmatprep.subr.mxu0 0.0
      %1530 = vmatpush1.msra.mxu0 0.0
      %1531 = vmatprep.subr.mxu0 0.0
      %1532 = vmatpush1.msra.mxu0 0.0
      %1533 = vmatprep.subr.mxu0 0.0
      %1534 = vmatpush1.msra.mxu0 0.0
      %1535 = vmatprep.subr.mxu0 0.0
      %1536 = vmatpush1.msra.mxu0 0.0
      %1537 = vmatprep.subr.mxu0 0.0
      %1538 = vmatpush1.msra.mxu0 0.0
      %1539 = vmatprep.subr.mxu0 0.0
      %1540 = vmatpush1.msra.mxu0 0.0
      %1541 = vmatprep.subr.mxu0 0.0
      %1542 = vmatpush1.msra.mxu0 0.0
      %1543 = vmatprep.subr.mxu0 0.0
      %1544 = vmatpush1.msra.mxu0 0.0
      %1545 = vmatprep.subr.mxu0 0.0
      %1546 = vmatpush1.msra.mxu0 0.0
      %1547 = vmatprep.subr.mxu0 0.0
      %1548 = vmatpush1.msra.mxu0 0.0
      %1549 = vmatprep.subr.mxu0 0.0
      %1550 = vmatpush1.msra.mxu0 0.0
      %1551 = vmatprep.subr.mxu0 0.0
      %1552 = vmatpush1.msra.mxu0 0.0
      %1553 = vmatprep.subr.mxu0 0.0
      %1554 = vmatpush1.msra.mxu0 0.0
      %1555 = vmatprep.subr.mxu0 0.0
      %1556 = vmatpush1.msra.mxu0 0.0
      %1557 = vmatprep.subr.mxu0 0.0
      %1558 = vmatpush1.msra.mxu0 0.0
      %1559 = vmatprep.subr.mxu0 0.0
      %1560 = vmatpush1.msra.mxu0 0.0
      %1561 = vmatprep.subr.mxu0 0.0
      %1562 = vmatpush1.msra.mxu0 0.0
      %1563 = vmatprep.subr.mxu0 0.0
      %1564 = vmatpush1.msra.mxu0 0.0
      %1565 = vmatprep.subr.mxu0 0.0
      %1566 = vmatpush1.msra.mxu0 0.0
      %1567 = vmatprep.mubr.f32.mxu0 0.0
      %1568 = vmatmul.mubr.f32.gmra.mrb[0].mxu0 %v1498
      %v1569 = vpop.f32.mrb[0].mxu0
      %v1570 = vadd.f32 0.0, %v1569
      %v1571 = vpop.f32.mrb[0].mxu0
      %1572 = vmatprep.mubr.f32.mxu0 0.0
      %1573 = vmatmul.mubr.f32.gmra.mrb[0].mxu0 %v1501
      %v1574 = vpop.f32.mrb[0].mxu0
      %v1575 = vadd.f32 0.0, %v1574
      %v1576 = vpop.f32.mrb[0].mxu0
      %1577 = vdwg.mxu0
      %v1579 = vsel %vm800, %v1570, 0
      %v1582 = vsel %vm800, %v1575, 0
      %1584 = vmatprep.subr.mxu0 0.0
      %1585 = vmatpush1.msra.mxu0 %v785
      %1586 = vmatprep.subr.mxu0 0.0
      %1587 = vmatpush1.msra.mxu0 0.0
      %1588 = vmatprep.subr.mxu0 0.0
      %1589 = vmatpush1.msra.mxu0 0.0
      %1590 = vmatprep.subr.mxu0 0.0
      %1591 = vmatpush1.msra.mxu0 0.0
      %1592 = vmatprep.subr.mxu0 0.0
      %1593 = vmatpush1.msra.mxu0 0.0
      %1594 = vmatprep.subr.mxu0 0.0
      %1595 = vmatpush1.msra.mxu0 0.0
      %1596 = vmatprep.subr.mxu0 0.0
      %1597 = vmatpush1.msra.mxu0 0.0
      %1598 = vmatprep.subr.mxu0 0.0
      %1599 = vmatpush1.msra.mxu0 0.0
      %1600 = vmatprep.subr.mxu0 0.0
      %1601 = vmatpush1.msra.mxu0 0.0
      %1602 = vmatprep.subr.mxu0 0.0
      %1603 = vmatpush1.msra.mxu0 0.0
      %1604 = vmatprep.subr.mxu0 0.0
      %1605 = vmatpush1.msra.mxu0 0.0
      %1606 = vmatprep.subr.mxu0 0.0
      %1607 = vmatpush1.msra.mxu0 0.0
      %1608 = vmatprep.subr.mxu0 0.0
      %1609 = vmatpush1.msra.mxu0 0.0
      %1610 = vmatprep.subr.mxu0 0.0
      %1611 = vmatpush1.msra.mxu0 0.0
      %1612 = vmatprep.subr.mxu0 0.0
      %1613 = vmatpush1.msra.mxu0 0.0
      %1614 = vmatprep.subr.mxu0 0.0
      %1615 = vmatpush1.msra.mxu0 0.0
      %1616 = vmatprep.subr.mxu0 0.0
      %1617 = vmatpush1.msra.mxu0 0.0
      %1618 = vmatprep.subr.mxu0 0.0
      %1619 = vmatpush1.msra.mxu0 0.0
      %1620 = vmatprep.subr.mxu0 0.0
      %1621 = vmatpush1.msra.mxu0 0.0
      %1622 = vmatprep.subr.mxu0 0.0
      %1623 = vmatpush1.msra.mxu0 0.0
      %1624 = vmatprep.subr.mxu0 0.0
      %1625 = vmatpush1.msra.mxu0 0.0
      %1626 = vmatprep.subr.mxu0 0.0
      %1627 = vmatpush1.msra.mxu0 0.0
      %1628 = vmatprep.subr.mxu0 0.0
      %1629 = vmatpush1.msra.mxu0 0.0
      %1630 = vmatprep.subr.mxu0 0.0
      %1631 = vmatpush1.msra.mxu0 0.0
      %1632 = vmatprep.subr.mxu0 0.0
      %1633 = vmatpush1.msra.mxu0 0.0
      %1634 = vmatprep.subr.mxu0 0.0
      %1635 = vmatpush1.msra.mxu0 0.0
      %1636 = vmatprep.subr.mxu0 0.0
      %1637 = vmatpush1.msra.mxu0 0.0
      %1638 = vmatprep.subr.mxu0 0.0
      %1639 = vmatpush1.msra.mxu0 0.0
      %1640 = vmatprep.subr.mxu0 0.0
      %1641 = vmatpush1.msra.mxu0 0.0
      %1642 = vmatprep.subr.mxu0 0.0
      %1643 = vmatpush1.msra.mxu0 0.0
      %1644 = vmatprep.subr.mxu0 0.0
      %1645 = vmatpush1.msra.mxu0 0.0
      %1646 = vmatprep.subr.mxu0 0.0
      %1647 = vmatpush1.msra.mxu0 0.0
      %1648 = vmatprep.mubr.f32.mxu0 0.0
      %1649 = vmatmul.mubr.f32.gmra.mrb[0].mxu0 %v1579
      %v1650 = vpop.f32.mrb[0].mxu0
      %v1651 = vadd.f32 0.0, %v1650
      %v1652 = vpop.f32.mrb[0].mxu0
      %1653 = vmatprep.mubr.f32.mxu0 0.0
      %1654 = vmatmul.mubr.f32.gmra.mrb[0].mxu0 %v1582
      %v1655 = vpop.f32.mrb[0].mxu0
      %v1656 = vadd.f32 0.0, %v1655
      %v1657 = vpop.f32.mrb[0].mxu0
      %1658 = vdwg.mxu0
      %v1659 = vadd.f32 %v1372, %v1651
      %v1660 = vadd.f32 %v1373, %v1656
      %1661 = vrot.lane.b32.xlu0 %v775, 104
      %v1662 = vpop.permute.xlu0 %1661
      %1663 = vrot.lane.b32.xlu0 %v780, 104
      %v1664 = vpop.permute.xlu0 %1663
      %1665 = vrot.lane.b32.xlu0 %v775, 72
      %v1666 = vpop.permute.xlu0 %1665
      %1667 = vrot.lane.b32.xlu0 %v780, 72
      %v1668 = vpop.permute.xlu0 %1667
      %v1669 = vsel %vm800, %v1662, 0
      %v1671 = vsel %vm800, %v1664, 0
      %v1673 = vsel %vm800, %v1666, 0
      %v1675 = vsel %vm800, %v1668, 0
      %1677 = vmatprep.subr.mxu0 0.0
      %1678 = vmatpush1.xpose.msra.mxu0 %v1673
      %1679 = vmatprep.subr.mxu0 0.0
      %1680 = vmatpush1.xpose.msra.mxu0 %v1675
      %1681 = vmatprep.subr.mxu0 0.0
      %1682 = vmatpush1.xpose.msra.mxu0 0.0
      %1683 = vmatprep.subr.mxu0 0.0
      %1684 = vmatpush1.xpose.msra.mxu0 0.0
      %1685 = vmatprep.subr.mxu0 0.0
      %1686 = vmatpush1.xpose.msra.mxu0 0.0
      %1687 = vmatprep.subr.mxu0 0.0
      %1688 = vmatpush1.xpose.msra.mxu0 0.0
      %1689 = vmatprep.subr.mxu0 0.0
      %1690 = vmatpush1.xpose.msra.mxu0 0.0
      %1691 = vmatprep.subr.mxu0 0.0
      %1692 = vmatpush1.xpose.msra.mxu0 0.0
      %1693 = vmatprep.subr.mxu0 0.0
      %1694 = vmatpush1.xpose.msra.mxu0 0.0
      %1695 = vmatprep.subr.mxu0 0.0
      %1696 = vmatpush1.xpose.msra.mxu0 0.0
      %1697 = vmatprep.subr.mxu0 0.0
      %1698 = vmatpush1.xpose.msra.mxu0 0.0
      %1699 = vmatprep.subr.mxu0 0.0
      %1700 = vmatpush1.xpose.msra.mxu0 0.0
      %1701 = vmatprep.subr.mxu0 0.0
      %1702 = vmatpush1.xpose.msra.mxu0 0.0
      %1703 = vmatprep.subr.mxu0 0.0
      %1704 = vmatpush1.xpose.msra.mxu0 0.0
      %1705 = vmatprep.subr.mxu0 0.0
      %1706 = vmatpush1.xpose.msra.mxu0 0.0
      %1707 = vmatprep.subr.mxu0 0.0
      %1708 = vmatpush1.xpose.msra.mxu0 0.0
      %1709 = vmatprep.subr.mxu0 0.0
      %1710 = vmatpush1.xpose.msra.mxu0 0.0
      %1711 = vmatprep.subr.mxu0 0.0
      %1712 = vmatpush1.xpose.msra.mxu0 0.0
      %1713 = vmatprep.subr.mxu0 0.0
      %1714 = vmatpush1.xpose.msra.mxu0 0.0
      %1715 = vmatprep.subr.mxu0 0.0
      %1716 = vmatpush1.xpose.msra.mxu0 0.0
      %1717 = vmatprep.subr.mxu0 0.0
      %1718 = vmatpush1.xpose.msra.mxu0 0.0
      %1719 = vmatprep.subr.mxu0 0.0
      %1720 = vmatpush1.xpose.msra.mxu0 0.0
      %1721 = vmatprep.subr.mxu0 0.0
      %1722 = vmatpush1.xpose.msra.mxu0 0.0
      %1723 = vmatprep.subr.mxu0 0.0
      %1724 = vmatpush1.xpose.msra.mxu0 0.0
      %1725 = vmatprep.subr.mxu0 0.0
      %1726 = vmatpush1.xpose.msra.mxu0 0.0
      %1727 = vmatprep.subr.mxu0 0.0
      %1728 = vmatpush1.xpose.msra.mxu0 0.0
      %1729 = vmatprep.subr.mxu0 0.0
      %1730 = vmatpush1.xpose.msra.mxu0 0.0
      %1731 = vmatprep.subr.mxu0 0.0
      %1732 = vmatpush1.xpose.msra.mxu0 0.0
      %1733 = vmatprep.subr.mxu0 0.0
      %1734 = vmatpush1.xpose.msra.mxu0 0.0
      %1735 = vmatprep.subr.mxu0 0.0
      %1736 = vmatpush1.xpose.msra.mxu0 0.0
      %1737 = vmatprep.subr.mxu0 0.0
      %1738 = vmatpush1.xpose.msra.mxu0 0.0
      %1739 = vmatprep.subr.mxu0 0.0
      %1740 = vmatpush1.xpose.msra.mxu0 0.0
      %1741 = vmatprep.mubr.f32.mxu0 0.0
      %1742 = vmatmul.mubr.f32.gmra.mrb[0].mxu0 %v1669
      %v1743 = vpop.f32.mrb[0].mxu0
      %v1744 = vadd.f32 0.0, %v1743
      %v1745 = vpop.f32.mrb[0].mxu0
      %1746 = vmatprep.mubr.f32.mxu0 0.0
      %1747 = vmatmul.mubr.f32.gmra.mrb[0].mxu0 %v1671
      %v1748 = vpop.f32.mrb[0].mxu0
      %v1749 = vadd.f32 0.0, %v1748
      %v1750 = vpop.f32.mrb[0].mxu0
      %1751 = vdwg.mxu0
      %v1752 = vmul.f32 %v1744, 0.35355338
      %v1753 = vmul.f32 %v1749, 0.35355338
      %v1754 = vadd.f32 %v1752, %v890
      %v1755 = vadd.f32 %v1753, %v890
      %v1756 = vsel %vm894, %v1754, -inf
      %1757 = vmax.xlane.f32.xlu0 %v1756
      %v1758 = vpop.xlane.xlu0 %1757
      %v1759 = vsel %vm894, %v1755, -inf
      %1760 = vmax.xlane.f32.xlu0 %v1759
      %v1761 = vpop.xlane.xlu0 %1760
      %v1762 = vsub.f32 %v1754, %v1758
      %v1763 = vsub.f32 %v1755, %v1761
      %v1764 = vmul.f32 %v1762, 1.442695
      %v1765 = vpow.pop %v1764
      %v1766 = vmul.f32 %v1763, 1.442695
      %v1767 = vpow.pop %v1766
      %v1768 = vsel %vm894, %v1765, 0.0
      %1769 = vadd.xlane.f32.xlu0 %v1768
      %v1770 = vpop.xlane.xlu0 %1769
      %v1771 = vsel %vm894, %v1767, 0.0
      %1772 = vadd.xlane.f32.xlu0 %v1771
      %v1773 = vpop.xlane.xlu0 %1772
      %v1774 = vrcp.pop %v1770
      %v1775 = vrcp.pop %v1773
      %v1776 = vmul.f32 %v1765, %v1774
      %v1777 = vmul.f32 %v1767, %v1775
      %1778 = vrot.lane.b32.xlu0 %v775, 40
      %v1779 = vpop.permute.xlu0 %1778
      %1780 = vrot.lane.b32.xlu0 %v780, 40
      %v1781 = vpop.permute.xlu0 %1780
      %v1785 = vsel %vm894, %v1776, 0
      %v1788 = vsel %vm894, %v1777, 0
      %1790 = vmatprep.subr.mxu0 0.0
      %1791 = vmatpush1.msra.mxu0 %v1779
      %1792 = vmatprep.subr.mxu0 0.0
      %1793 = vmatpush1.msra.mxu0 %v1781
      %1794 = vmatprep.subr.mxu0 0.0
      %1795 = vmatpush1.msra.mxu0 0.0
      %1796 = vmatprep.subr.mxu0 0.0
      %1797 = vmatpush1.msra.mxu0 0.0
      %1798 = vmatprep.subr.mxu0 0.0
      %1799 = vmatpush1.msra.mxu0 0.0
      %1800 = vmatprep.subr.mxu0 0.0
      %1801 = vmatpush1.msra.mxu0 0.0
      %1802 = vmatprep.subr.mxu0 0.0
      %1803 = vmatpush1.msra.mxu0 0.0
      %1804 = vmatprep.subr.mxu0 0.0
      %1805 = vmatpush1.msra.mxu0 0.0
      %1806 = vmatprep.subr.mxu0 0.0
      %1807 = vmatpush1.msra.mxu0 0.0
      %1808 = vmatprep.subr.mxu0 0.0
      %1809 = vmatpush1.msra.mxu0 0.0
      %1810 = vmatprep.subr.mxu0 0.0
      %1811 = vmatpush1.msra.mxu0 0.0
      %1812 = vmatprep.subr.mxu0 0.0
      %1813 = vmatpush1.msra.mxu0 0.0
      %1814 = vmatprep.subr.mxu0 0.0
      %1815 = vmatpush1.msra.mxu0 0.0
      %1816 = vmatprep.subr.mxu0 0.0
      %1817 = vmatpush1.msra.mxu0 0.0
      %1818 = vmatprep.subr.mxu0 0.0
      %1819 = vmatpush1.msra.mxu0 0.0
      %1820 = vmatprep.subr.mxu0 0.0
      %1821 = vmatpush1.msra.mxu0 0.0
      %1822 = vmatprep.subr.mxu0 0.0
      %1823 = vmatpush1.msra.mxu0 0.0
      %1824 = vmatprep.subr.mxu0 0.0
      %1825 = vmatpush1.msra.mxu0 0.0
      %1826 = vmatprep.subr.mxu0 0.0
      %1827 = vmatpush1.msra.mxu0 0.0
      %1828 = vmatprep.subr.mxu0 0.0
      %1829 = vmatpush1.msra.mxu0 0.0
      %1830 = vmatprep.subr.mxu0 0.0
      %1831 = vmatpush1.msra.mxu0 0.0
      %1832 = vmatprep.subr.mxu0 0.0
      %1833 = vmatpush1.msra.mxu0 0.0
      %1834 = vmatprep.subr.mxu0 0.0
      %1835 = vmatpush1.msra.mxu0 0.0
      %1836 = vmatprep.subr.mxu0 0.0
      %1837 = vmatpush1.msra.mxu0 0.0
      %1838 = vmatprep.subr.mxu0 0.0
      %1839 = vmatpush1.msra.mxu0 0.0
      %1840 = vmatprep.subr.mxu0 0.0
      %1841 = vmatpush1.msra.mxu0 0.0
      %1842 = vmatprep.subr.mxu0 0.0
      %1843 = vmatpush1.msra.mxu0 0.0
      %1844 = vmatprep.subr.mxu0 0.0
      %1845 = vmatpush1.msra.mxu0 0.0
      %1846 = vmatprep.subr.mxu0 0.0
      %1847 = vmatpush1.msra.mxu0 0.0
      %1848 = vmatprep.subr.mxu0 0.0
      %1849 = vmatpush1.msra.mxu0 0.0
      %1850 = vmatprep.subr.mxu0 0.0
      %1851 = vmatpush1.msra.mxu0 0.0
      %1852 = vmatprep.subr.mxu0 0.0
      %1853 = vmatpush1.msra.mxu0 0.0
      %1854 = vmatprep.mubr.f32.mxu0 0.0
      %1855 = vmatmul.mubr.f32.gmra.mrb[0].mxu0 %v1785
      %v1856 = vpop.f32.mrb[0].mxu0
      %v1857 = vadd.f32 0.0, %v1856
      %v1858 = vpop.f32.mrb[0].mxu0
      %1859 = vmatprep.mubr.f32.mxu0 0.0
      %1860 = vmatmul.mubr.f32.gmra.mrb[0].mxu0 %v1788
      %v1861 = vpop.f32.mrb[0].mxu0
      %v1862 = vadd.f32 0.0, %v1861
      %v1863 = vpop.f32.mrb[0].mxu0
      %1864 = vdwg.mxu0
      %v1866 = vsel %vm800, %v1857, 0
      %v1869 = vsel %vm800, %v1862, 0
      %1871 = vmatprep.subr.mxu0 0.0
      %1872 = vmatpush1.msra.mxu0 %v786
      %1873 = vmatprep.subr.mxu0 0.0
      %1874 = vmatpush1.msra.mxu0 0.0
      %1875 = vmatprep.subr.mxu0 0.0
      %1876 = vmatpush1.msra.mxu0 0.0
      %1877 = vmatprep.subr.mxu0 0.0
      %1878 = vmatpush1.msra.mxu0 0.0
      %1879 = vmatprep.subr.mxu0 0.0
      %1880 = vmatpush1.msra.mxu0 0.0
      %1881 = vmatprep.subr.mxu0 0.0
      %1882 = vmatpush1.msra.mxu0 0.0
      %1883 = vmatprep.subr.mxu0 0.0
      %1884 = vmatpush1.msra.mxu0 0.0
      %1885 = vmatprep.subr.mxu0 0.0
      %1886 = vmatpush1.msra.mxu0 0.0
      %1887 = vmatprep.subr.mxu0 0.0
      %1888 = vmatpush1.msra.mxu0 0.0
      %1889 = vmatprep.subr.mxu0 0.0
      %1890 = vmatpush1.msra.mxu0 0.0
      %1891 = vmatprep.subr.mxu0 0.0
      %1892 = vmatpush1.msra.mxu0 0.0
      %1893 = vmatprep.subr.mxu0 0.0
      %1894 = vmatpush1.msra.mxu0 0.0
      %1895 = vmatprep.subr.mxu0 0.0
      %1896 = vmatpush1.msra.mxu0 0.0
      %1897 = vmatprep.subr.mxu0 0.0
      %1898 = vmatpush1.msra.mxu0 0.0
      %1899 = vmatprep.subr.mxu0 0.0
      %1900 = vmatpush1.msra.mxu0 0.0
      %1901 = vmatprep.subr.mxu0 0.0
      %1902 = vmatpush1.msra.mxu0 0.0
      %1903 = vmatprep.subr.mxu0 0.0
      %1904 = vmatpush1.msra.mxu0 0.0
      %1905 = vmatprep.subr.mxu0 0.0
      %1906 = vmatpush1.msra.mxu0 0.0
      %1907 = vmatprep.subr.mxu0 0.0
      %1908 = vmatpush1.msra.mxu0 0.0
      %1909 = vmatprep.subr.mxu0 0.0
      %1910 = vmatpush1.msra.mxu0 0.0
      %1911 = vmatprep.subr.mxu0 0.0
      %1912 = vmatpush1.msra.mxu0 0.0
      %1913 = vmatprep.subr.mxu0 0.0
      %1914 = vmatpush1.msra.mxu0 0.0
      %1915 = vmatprep.subr.mxu0 0.0
      %1916 = vmatpush1.msra.mxu0 0.0
      %1917 = vmatprep.subr.mxu0 0.0
      %1918 = vmatpush1.msra.mxu0 0.0
      %1919 = vmatprep.subr.mxu0 0.0
      %1920 = vmatpush1.msra.mxu0 0.0
      %1921 = vmatprep.subr.mxu0 0.0
      %1922 = vmatpush1.msra.mxu0 0.0
      %1923 = vmatprep.subr.mxu0 0.0
      %1924 = vmatpush1.msra.mxu0 0.0
      %1925 = vmatprep.subr.mxu0 0.0
      %1926 = vmatpush1.msra.mxu0 0.0
      %1927 = vmatprep.subr.mxu0 0.0
      %1928 = vmatpush1.msra.mxu0 0.0
      %1929 = vmatprep.subr.mxu0 0.0
      %1930 = vmatpush1.msra.mxu0 0.0
      %1931 = vmatprep.subr.mxu0 0.0
      %1932 = vmatpush1.msra.mxu0 0.0
      %1933 = vmatprep.subr.mxu0 0.0
      %1934 = vmatpush1.msra.mxu0 0.0
      %1935 = vmatprep.mubr.f32.mxu0 0.0
      %1936 = vmatmul.mubr.f32.gmra.mrb[0].mxu0 %v1866
      %v1937 = vpop.f32.mrb[0].mxu0
      %v1938 = vadd.f32 0.0, %v1937
      %v1939 = vpop.f32.mrb[0].mxu0
      %1940 = vmatprep.mubr.f32.mxu0 0.0
      %1941 = vmatmul.mubr.f32.gmra.mrb[0].mxu0 %v1869
      %v1942 = vpop.f32.mrb[0].mxu0
      %v1943 = vadd.f32 0.0, %v1942
      %v1944 = vpop.f32.mrb[0].mxu0
      %1945 = vdwg.mxu0
      %v1946 = vadd.f32 %v1659, %v1938
      %v1947 = vadd.f32 %v1660, %v1943
      %v1948 = vadd.f32 %v689, %v1946
      %v1949 = vadd.f32 %v690, %v1947
      %v1950 = vld [vmem:[%s8] sm:$0x1]
      %v1951 = vld [vmem:[%s9] sm:$0x1]
      %v1952 = vsel %vm647, %v1948, 0.0
      %1953 = vadd.xlane.f32.xlu0 %v1952
      %v1954 = vpop.xlane.xlu0 %1953
      %v1955 = vsel %vm647, %v1949, 0.0
      %1956 = vadd.xlane.f32.xlu0 %v1955
      %v1957 = vpop.xlane.xlu0 %1956
      %v1958 = vmul.f32 %v1954, %v654
      %v1959 = vmul.f32 %v1957, %v654
      %v1960 = vsub.f32 %v1948, %v1958
      %v1961 = vsub.f32 %v1949, %v1959
      %v1962 = vmul.f32 %v1960, %v1960
      %v1963 = vmul.f32 %v1961, %v1961
      %v1964 = vsel %vm647, %v1962, 0.0
      %1965 = vadd.xlane.f32.xlu0 %v1964
      %v1966 = vpop.xlane.xlu0 %1965
      %v1967 = vsel %vm647, %v1963, 0.0
      %1968 = vadd.xlane.f32.xlu0 %v1967
      %v1969 = vpop.xlane.xlu0 %1968
      %v1970 = vmul.f32 %v1966, %v654
      %v1971 = vmul.f32 %v1969, %v654
      %v1972 = vadd.f32 %v1970, 1e-12
      %v1973 = vadd.f32 %v1971, 1e-12
      %v1974 = vrsqrt.pop %v1972
      %v1975 = vrsqrt.pop %v1973
      %v1976 = vmul.f32 %v1960, %v1974
      %v1977 = vmul.f32 %v1961, %v1975
      %v1979 = vlaneseq
      %v1980 = vshrl.u32 %v1979, 7
      %v1981 = vsub.s32 0, %v1980
      %v1982 = vrot.slane %v1950, %v1981
      %v1984 = vmul.f32 %v1976, %v1982
      %v1985 = vmul.f32 %v1977, %v1982
      %v1987 = vlaneseq
      %v1988 = vshrl.u32 %v1987, 7
      %v1989 = vsub.s32 0, %v1988
      %v1990 = vrot.slane %v1951, %v1989
      %v1992 = vadd.f32 %v1984, %v1990
      %v1993 = vadd.f32 %v1985, %v1990
      %v1994 = vld [vmem:[%s10] sm:$0xff]
      %v1995 = vld [vmem:[%s10 + $0x8] sm:$0xff]
      %v1996 = vld [vmem:[%s10 + $0x10] sm:$0xff]
      %v1997 = vld [vmem:[%s10 + $0x18] sm:$0xff]
      %v1998 = vld [vmem:[%s11] sm:$0x1]
      %v2000 = vlaneseq
      %v2001 = vshrl.u32 %v2000, 7
      %v2002 = vsub.s32 0, %v2001
      %v2003 = vrot.slane %v1998, %v2002
      %v2006 = vsel %vm647, %v1992, 0
      %v2009 = vsel %vm647, %v1993, 0
      %2011 = vmatprep.subr.mxu0 0.0
      %2012 = vmatpush1.msra.mxu0 %v1994
      %2013 = vmatprep.subr.mxu0 0.0
      %2014 = vmatpush1.msra.mxu0 %v1995
      %2015 = vmatprep.subr.mxu0 0.0
      %2016 = vmatpush1.msra.mxu0 %v1996
      %2017 = vmatprep.subr.mxu0 0.0
      %2018 = vmatpush1.msra.mxu0 %v1997
      %2019 = vmatprep.subr.mxu0 0.0
      %2020 = vmatpush1.msra.mxu0 0.0
      %2021 = vmatprep.subr.mxu0 0.0
      %2022 = vmatpush1.msra.mxu0 0.0
      %2023 = vmatprep.subr.mxu0 0.0
      %2024 = vmatpush1.msra.mxu0 0.0
      %2025 = vmatprep.subr.mxu0 0.0
      %2026 = vmatpush1.msra.mxu0 0.0
      %2027 = vmatprep.subr.mxu0 0.0
      %2028 = vmatpush1.msra.mxu0 0.0
      %2029 = vmatprep.subr.mxu0 0.0
      %2030 = vmatpush1.msra.mxu0 0.0
      %2031 = vmatprep.subr.mxu0 0.0
      %2032 = vmatpush1.msra.mxu0 0.0
      %2033 = vmatprep.subr.mxu0 0.0
      %2034 = vmatpush1.msra.mxu0 0.0
      %2035 = vmatprep.subr.mxu0 0.0
      %2036 = vmatpush1.msra.mxu0 0.0
      %2037 = vmatprep.subr.mxu0 0.0
      %2038 = vmatpush1.msra.mxu0 0.0
      %2039 = vmatprep.subr.mxu0 0.0
      %2040 = vmatpush1.msra.mxu0 0.0
      %2041 = vmatprep.subr.mxu0 0.0
      %2042 = vmatpush1.msra.mxu0 0.0
      %2043 = vmatprep.subr.mxu0 0.0
      %2044 = vmatpush1.msra.mxu0 0.0
      %2045 = vmatprep.subr.mxu0 0.0
      %2046 = vmatpush1.msra.mxu0 0.0
      %2047 = vmatprep.subr.mxu0 0.0
      %2048 = vmatpush1.msra.mxu0 0.0
      %2049 = vmatprep.subr.mxu0 0.0
      %2050 = vmatpush1.msra.mxu0 0.0
      %2051 = vmatprep.subr.mxu0 0.0
      %2052 = vmatpush1.msra.mxu0 0.0
      %2053 = vmatprep.subr.mxu0 0.0
      %2054 = vmatpush1.msra.mxu0 0.0
      %2055 = vmatprep.subr.mxu0 0.0
      %2056 = vmatpush1.msra.mxu0 0.0
      %2057 = vmatprep.subr.mxu0 0.0
      %2058 = vmatpush1.msra.mxu0 0.0
      %2059 = vmatprep.subr.mxu0 0.0
      %2060 = vmatpush1.msra.mxu0 0.0
      %2061 = vmatprep.subr.mxu0 0.0
      %2062 = vmatpush1.msra.mxu0 0.0
      %2063 = vmatprep.subr.mxu0 0.0
      %2064 = vmatpush1.msra.mxu0 0.0
      %2065 = vmatprep.subr.mxu0 0.0
      %2066 = vmatpush1.msra.mxu0 0.0
      %2067 = vmatprep.subr.mxu0 0.0
      %2068 = vmatpush1.msra.mxu0 0.0
      %2069 = vmatprep.subr.mxu0 0.0
      %2070 = vmatpush1.msra.mxu0 0.0
      %2071 = vmatprep.subr.mxu0 0.0
      %2072 = vmatpush1.msra.mxu0 0.0
      %2073 = vmatprep.subr.mxu0 0.0
      %2074 = vmatpush1.msra.mxu0 0.0
      %2075 = vmatprep.mubr.f32.mxu0 0.0
      %2076 = vmatmul.mubr.f32.gmra.mrb[0].mxu0 %v2006
      %v2077 = vpop.f32.mrb[0].mxu0
      %v2078 = vadd.f32 %v2003, %v2077
      %v2079 = vpop.f32.mrb[0].mxu0
      %2080 = vmatprep.mubr.f32.mxu0 0.0
      %2081 = vmatmul.mubr.f32.gmra.mrb[0].mxu0 %v2009
      %v2082 = vpop.f32.mrb[0].mxu0
      %v2083 = vadd.f32 %v2003, %v2082
      %v2084 = vpop.f32.mrb[0].mxu0
      %2085 = vdwg.mxu0
      %v2086 = vmul.f32 %v2078, 0.5
      %v2087 = vmul.f32 %v2083, 0.5
      %v2088 = vmul.f32 %v2078, 0.044715
      %v2089 = vmul.f32 %v2083, 0.044715
      %v2090 = vmul.f32 %v2088, %v2078
      %v2091 = vmul.f32 %v2089, %v2083
      %v2092 = vmul.f32 %v2090, %v2078
      %v2093 = vmul.f32 %v2091, %v2083
      %v2094 = vadd.f32 %v2078, %v2092
      %v2095 = vadd.f32 %v2083, %v2093
      %v2096 = vmul.f32 %v2094, 0.7978846
      %v2097 = vmul.f32 %v2095, 0.7978846
      %v2098 = vtanh.pop %v2096
      %v2099 = vtanh.pop %v2097
      %v2100 = vadd.f32 %v2098, 1.0
      %v2101 = vadd.f32 %v2099, 1.0
      %v2102 = vmul.f32 %v2086, %v2100
      %v2103 = vmul.f32 %v2087, %v2101
      %v2104 = vld [vmem:[%s12] sm:$0xff]
      %v2105 = vld [vmem:[%s12 + $0x8] sm:$0xff]
      %v2106 = vld [vmem:[%s12 + $0x10] sm:$0xff]
      %v2107 = vld [vmem:[%s12 + $0x18] sm:$0xff]
      %v2108 = vld [vmem:[%s12 + $0x20] sm:$0xff]
      %v2109 = vld [vmem:[%s12 + $0x28] sm:$0xff]
      %v2110 = vld [vmem:[%s12 + $0x30] sm:$0xff]
      %v2111 = vld [vmem:[%s12 + $0x38] sm:$0xff]
      %v2112 = vld [vmem:[%s13] sm:$0x1]
      %v2114 = vlaneseq
      %v2115 = vshrl.u32 %v2114, 7
      %v2116 = vsub.s32 0, %v2115
      %v2117 = vrot.slane %v2112, %v2116
      %vm2119 = vcmask 523264
      %v2121 = vsel %vm2119, %v2102, 0
      %v2124 = vsel %vm2119, %v2103, 0
      %2126 = vmatprep.subr.mxu0 0.0
      %2127 = vmatpush1.msra.mxu0 %v2104
      %2128 = vmatprep.subr.mxu0 0.0
      %2129 = vmatpush1.msra.mxu0 %v2105
      %2130 = vmatprep.subr.mxu0 0.0
      %2131 = vmatpush1.msra.mxu0 %v2106
      %2132 = vmatprep.subr.mxu0 0.0
      %2133 = vmatpush1.msra.mxu0 %v2107
      %2134 = vmatprep.subr.mxu0 0.0
      %2135 = vmatpush1.msra.mxu0 %v2108
      %2136 = vmatprep.subr.mxu0 0.0
      %2137 = vmatpush1.msra.mxu0 %v2109
      %2138 = vmatprep.subr.mxu0 0.0
      %2139 = vmatpush1.msra.mxu0 %v2110
      %2140 = vmatprep.subr.mxu0 0.0
      %2141 = vmatpush1.msra.mxu0 %v2111
      %2142 = vmatprep.subr.mxu0 0.0
      %2143 = vmatpush1.msra.mxu0 0.0
      %2144 = vmatprep.subr.mxu0 0.0
      %2145 = vmatpush1.msra.mxu0 0.0
      %2146 = vmatprep.subr.mxu0 0.0
      %2147 = vmatpush1.msra.mxu0 0.0
      %2148 = vmatprep.subr.mxu0 0.0
      %2149 = vmatpush1.msra.mxu0 0.0
      %2150 = vmatprep.subr.mxu0 0.0
      %2151 = vmatpush1.msra.mxu0 0.0
      %2152 = vmatprep.subr.mxu0 0.0
      %2153 = vmatpush1.msra.mxu0 0.0
      %2154 = vmatprep.subr.mxu0 0.0
      %2155 = vmatpush1.msra.mxu0 0.0
      %2156 = vmatprep.subr.mxu0 0.0
      %2157 = vmatpush1.msra.mxu0 0.0
      %2158 = vmatprep.subr.mxu0 0.0
      %2159 = vmatpush1.msra.mxu0 0.0
      %2160 = vmatprep.subr.mxu0 0.0
      %2161 = vmatpush1.msra.mxu0 0.0
      %2162 = vmatprep.subr.mxu0 0.0
      %2163 = vmatpush1.msra.mxu0 0.0
      %2164 = vmatprep.subr.mxu0 0.0
      %2165 = vmatpush1.msra.mxu0 0.0
      %2166 = vmatprep.subr.mxu0 0.0
      %2167 = vmatpush1.msra.mxu0 0.0
      %2168 = vmatprep.subr.mxu0 0.0
      %2169 = vmatpush1.msra.mxu0 0.0
      %2170 = vmatprep.subr.mxu0 0.0
      %2171 = vmatpush1.msra.mxu0 0.0
      %2172 = vmatprep.subr.mxu0 0.0
      %2173 = vmatpush1.msra.mxu0 0.0
      %2174 = vmatprep.subr.mxu0 0.0
      %2175 = vmatpush1.msra.mxu0 0.0
      %2176 = vmatprep.subr.mxu0 0.0
      %2177 = vmatpush1.msra.mxu0 0.0
      %2178 = vmatprep.subr.mxu0 0.0
      %2179 = vmatpush1.msra.mxu0 0.0
      %2180 = vmatprep.subr.mxu0 0.0
      %2181 = vmatpush1.msra.mxu0 0.0
      %2182 = vmatprep.subr.mxu0 0.0
      %2183 = vmatpush1.msra.mxu0 0.0
      %2184 = vmatprep.subr.mxu0 0.0
      %2185 = vmatpush1.msra.mxu0 0.0
      %2186 = vmatprep.subr.mxu0 0.0
      %2187 = vmatpush1.msra.mxu0 0.0
      %2188 = vmatprep.subr.mxu0 0.0
      %2189 = vmatpush1.msra.mxu0 0.0
      %2190 = vmatprep.mubr.f32.mxu0 0.0
      %2191 = vmatmul.mubr.f32.gmra.mrb[0].mxu0 %v2121
      %v2192 = vpop.f32.mrb[0].mxu0
      %v2193 = vadd.f32 %v2117, %v2192
      %v2194 = vpop.f32.mrb[0].mxu0
      %2195 = vmatprep.mubr.f32.mxu0 0.0
      %2196 = vmatmul.mubr.f32.gmra.mrb[0].mxu0 %v2124
      %v2197 = vpop.f32.mrb[0].mxu0
      %v2198 = vadd.f32 %v2117, %v2197
      %v2199 = vpop.f32.mrb[0].mxu0
      %2200 = vdwg.mxu0
      %v2201 = vadd.f32 %v1992, %v2193
      %v2202 = vadd.f32 %v1993, %v2198
      %v2203 = vld [vmem:[%s14] sm:$0x1]
      %v2204 = vld [vmem:[%s15] sm:$0x1]
      %v2205 = vsel %vm647, %v2201, 0.0
      %2206 = vadd.xlane.f32.xlu0 %v2205
      %v2207 = vpop.xlane.xlu0 %2206
      %v2208 = vsel %vm647, %v2202, 0.0
      %2209 = vadd.xlane.f32.xlu0 %v2208
      %v2210 = vpop.xlane.xlu0 %2209
      %v2211 = vmul.f32 %v2207, %v654
      %v2212 = vmul.f32 %v2210, %v654
      %v2213 = vsub.f32 %v2201, %v2211
      %v2214 = vsub.f32 %v2202, %v2212
      %v2215 = vmul.f32 %v2213, %v2213
      %v2216 = vmul.f32 %v2214, %v2214
      %v2217 = vsel %vm647, %v2215, 0.0
      %2218 = vadd.xlane.f32.xlu0 %v2217
      %v2219 = vpop.xlane.xlu0 %2218
      %v2220 = vsel %vm647, %v2216, 0.0
      %2221 = vadd.xlane.f32.xlu0 %v2220
      %v2222 = vpop.xlane.xlu0 %2221
      %v2223 = vmul.f32 %v2219, %v654
      %v2224 = vmul.f32 %v2222, %v654
      %v2225 = vadd.f32 %v2223, 1e-12
      %v2226 = vadd.f32 %v2224, 1e-12
      %v2227 = vrsqrt.pop %v2225
      %v2228 = vrsqrt.pop %v2226
      %v2229 = vmul.f32 %v2213, %v2227
      %v2230 = vmul.f32 %v2214, %v2228
      %v2232 = vlaneseq
      %v2233 = vshrl.u32 %v2232, 7
      %v2234 = vsub.s32 0, %v2233
      %v2235 = vrot.slane %v2203, %v2234
      %v2237 = vmul.f32 %v2229, %v2235
      %v2238 = vmul.f32 %v2230, %v2235
      %v2240 = vlaneseq
      %v2241 = vshrl.u32 %v2240, 7
      %v2242 = vsub.s32 0, %v2241
      %v2243 = vrot.slane %v2204, %v2242
      %v2245 = vadd.f32 %v2237, %v2243
      %v2246 = vadd.f32 %v2238, %v2243
      %s2247 = scalar_lea.vmem %s4, 32
      %v2248 = vld [vmem:[%s2247] sm:$0xff]
      %v2249 = vld [vmem:[%s2247 + $0x8] sm:$0xff]
      %v2250 = vld [vmem:[%s2247 + $0x10] sm:$0xff]
      %v2251 = vld [vmem:[%s2247 + $0x18] sm:$0xff]
      %s2252 = scalar_lea.vmem %s5, 1
      %v2253 = vld [vmem:[%s2252] sm:$0x1]
      %v2255 = vlaneseq
      %v2256 = vshrl.u32 %v2255, 7
      %v2257 = vsub.s32 0, %v2256
      %v2258 = vrot.slane %v2253, %v2257
      %v2261 = vsel %vm647, %v2245, 0
      %v2264 = vsel %vm647, %v2246, 0
      %2266 = vmatprep.subr.mxu0 0.0
      %2267 = vmatpush1.msra.mxu0 %v2248
      %2268 = vmatprep.subr.mxu0 0.0
      %2269 = vmatpush1.msra.mxu0 %v2249
      %2270 = vmatprep.subr.mxu0 0.0
      %2271 = vmatpush1.msra.mxu0 %v2250
      %2272 = vmatprep.subr.mxu0 0.0
      %2273 = vmatpush1.msra.mxu0 %v2251
      %2274 = vmatprep.subr.mxu0 0.0
      %2275 = vmatpush1.msra.mxu0 0.0
      %2276 = vmatprep.subr.mxu0 0.0
      %2277 = vmatpush1.msra.mxu0 0.0
      %2278 = vmatprep.subr.mxu0 0.0
      %2279 = vmatpush1.msra.mxu0 0.0
      %2280 = vmatprep.subr.mxu0 0.0
      %2281 = vmatpush1.msra.mxu0 0.0
      %2282 = vmatprep.subr.mxu0 0.0
      %2283 = vmatpush1.msra.mxu0 0.0
      %2284 = vmatprep.subr.mxu0 0.0
      %2285 = vmatpush1.msra.mxu0 0.0
      %2286 = vmatprep.subr.mxu0 0.0
      %2287 = vmatpush1.msra.mxu0 0.0
      %2288 = vmatprep.subr.mxu0 0.0
      %2289 = vmatpush1.msra.mxu0 0.0
      %2290 = vmatprep.subr.mxu0 0.0
      %2291 = vmatpush1.msra.mxu0 0.0
      %2292 = vmatprep.subr.mxu0 0.0
      %2293 = vmatpush1.msra.mxu0 0.0
      %2294 = vmatprep.subr.mxu0 0.0
      %2295 = vmatpush1.msra.mxu0 0.0
      %2296 = vmatprep.subr.mxu0 0.0
      %2297 = vmatpush1.msra.mxu0 0.0
      %2298 = vmatprep.subr.mxu0 0.0
      %2299 = vmatpush1.msra.mxu0 0.0
      %2300 = vmatprep.subr.mxu0 0.0
      %2301 = vmatpush1.msra.mxu0 0.0
      %2302 = vmatprep.subr.mxu0 0.0
      %2303 = vmatpush1.msra.mxu0 0.0
      %2304 = vmatprep.subr.mxu0 0.0
      %2305 = vmatpush1.msra.mxu0 0.0
      %2306 = vmatprep.subr.mxu0 0.0
      %2307 = vmatpush1.msra.mxu0 0.0
      %2308 = vmatprep.subr.mxu0 0.0
      %2309 = vmatpush1.msra.mxu0 0.0
      %2310 = vmatprep.subr.mxu0 0.0
      %2311 = vmatpush1.msra.mxu0 0.0
      %2312 = vmatprep.subr.mxu0 0.0
      %2313 = vmatpush1.msra.mxu0 0.0
      %2314 = vmatprep.subr.mxu0 0.0
      %2315 = vmatpush1.msra.mxu0 0.0
      %2316 = vmatprep.subr.mxu0 0.0
      %2317 = vmatpush1.msra.mxu0 0.0
      %2318 = vmatprep.subr.mxu0 0.0
      %2319 = vmatpush1.msra.mxu0 0.0
      %2320 = vmatprep.subr.mxu0 0.0
      %2321 = vmatpush1.msra.mxu0 0.0
      %2322 = vmatprep.subr.mxu0 0.0
      %2323 = vmatpush1.msra.mxu0 0.0
      %2324 = vmatprep.subr.mxu0 0.0
      %2325 = vmatpush1.msra.mxu0 0.0
      %2326 = vmatprep.subr.mxu0 0.0
      %2327 = vmatpush1.msra.mxu0 0.0
      %2328 = vmatprep.subr.mxu0 0.0
      %2329 = vmatpush1.msra.mxu0 0.0
      %2330 = vmatprep.mubr.f32.mxu0 0.0
      %2331 = vmatmul.mubr.f32.gmra.mrb[0].mxu0 %v2261
      %v2332 = vpop.f32.mrb[0].mxu0
      %v2333 = vadd.f32 %v2258, %v2332
      %v2334 = vpop.f32.mrb[0].mxu0
      %2335 = vmatprep.mubr.f32.mxu0 0.0
      %2336 = vmatmul.mubr.f32.gmra.mrb[0].mxu0 %v2264
      %v2337 = vpop.f32.mrb[0].mxu0
      %v2338 = vadd.f32 %v2258, %v2337
      %v2339 = vpop.f32.mrb[0].mxu0
      %2340 = vdwg.mxu0
      %s2341 = scalar_lea.vmem %s6, 32
      %v2342 = vld [vmem:[%s2341] sm:$0xff]
      %v2343 = vld [vmem:[%s2341 + $0x8] sm:$0xff]
      %v2344 = vld [vmem:[%s2341 + $0x10] sm:$0xff]
      %v2345 = vld [vmem:[%s2341 + $0x18] sm:$0xff]
      %s2346 = scalar_lea.vmem %s7, 1
      %v2347 = vld [vmem:[%s2346] sm:$0x1]
      %v2349 = vlaneseq
      %v2350 = vshrl.u32 %v2349, 7
      %v2351 = vsub.s32 0, %v2350
      %v2352 = vrot.slane %v2347, %v2351
      %2356 = vrot.lane.b32.xlu0 %v2333, 96
      %v2357 = vpop.permute.xlu0 %2356
      %2358 = vrot.lane.b32.xlu0 %v2338, 96
      %v2359 = vpop.permute.xlu0 %2358
      %v2360 = vsel %vm800, %v2333, 0
      %v2362 = vsel %vm800, %v2338, 0
      %v2364 = vsel %vm800, %v2357, 0
      %v2366 = vsel %vm800, %v2359, 0
      %2368 = vmatprep.subr.mxu0 0.0
      %2369 = vmatpush1.xpose.msra.mxu0 %v2364
      %2370 = vmatprep.subr.mxu0 0.0
      %2371 = vmatpush1.xpose.msra.mxu0 %v2366
      %2372 = vmatprep.subr.mxu0 0.0
      %2373 = vmatpush1.xpose.msra.mxu0 0.0
      %2374 = vmatprep.subr.mxu0 0.0
      %2375 = vmatpush1.xpose.msra.mxu0 0.0
      %2376 = vmatprep.subr.mxu0 0.0
      %2377 = vmatpush1.xpose.msra.mxu0 0.0
      %2378 = vmatprep.subr.mxu0 0.0
      %2379 = vmatpush1.xpose.msra.mxu0 0.0
      %2380 = vmatprep.subr.mxu0 0.0
      %2381 = vmatpush1.xpose.msra.mxu0 0.0
      %2382 = vmatprep.subr.mxu0 0.0
      %2383 = vmatpush1.xpose.msra.mxu0 0.0
      %2384 = vmatprep.subr.mxu0 0.0
      %2385 = vmatpush1.xpose.msra.mxu0 0.0
      %2386 = vmatprep.subr.mxu0 0.0
      %2387 = vmatpush1.xpose.msra.mxu0 0.0
      %2388 = vmatprep.subr.mxu0 0.0
      %2389 = vmatpush1.xpose.msra.mxu0 0.0
      %2390 = vmatprep.subr.mxu0 0.0
      %2391 = vmatpush1.xpose.msra.mxu0 0.0
      %2392 = vmatprep.subr.mxu0 0.0
      %2393 = vmatpush1.xpose.msra.mxu0 0.0
      %2394 = vmatprep.subr.mxu0 0.0
      %2395 = vmatpush1.xpose.msra.mxu0 0.0
      %2396 = vmatprep.subr.mxu0 0.0
      %2397 = vmatpush1.xpose.msra.mxu0 0.0
      %2398 = vmatprep.subr.mxu0 0.0
      %2399 = vmatpush1.xpose.msra.mxu0 0.0
      %2400 = vmatprep.subr.mxu0 0.0
      %2401 = vmatpush1.xpose.msra.mxu0 0.0
      %2402 = vmatprep.subr.mxu0 0.0
      %2403 = vmatpush1.xpose.msra.mxu0 0.0
      %2404 = vmatprep.subr.mxu0 0.0
      %2405 = vmatpush1.xpose.msra.mxu0 0.0
      %2406 = vmatprep.subr.mxu0 0.0
      %2407 = vmatpush1.xpose.msra.mxu0 0.0
      %2408 = vmatprep.subr.mxu0 0.0
      %2409 = vmatpush1.xpose.msra.mxu0 0.0
      %2410 = vmatprep.subr.mxu0 0.0
      %2411 = vmatpush1.xpose.msra.mxu0 0.0
      %2412 = vmatprep.subr.mxu0 0.0
      %2413 = vmatpush1.xpose.msra.mxu0 0.0
      %2414 = vmatprep.subr.mxu0 0.0
      %2415 = vmatpush1.xpose.msra.mxu0 0.0
      %2416 = vmatprep.subr.mxu0 0.0
      %2417 = vmatpush1.xpose.msra.mxu0 0.0
      %2418 = vmatprep.subr.mxu0 0.0
      %2419 = vmatpush1.xpose.msra.mxu0 0.0
      %2420 = vmatprep.subr.mxu0 0.0
      %2421 = vmatpush1.xpose.msra.mxu0 0.0
      %2422 = vmatprep.subr.mxu0 0.0
      %2423 = vmatpush1.xpose.msra.mxu0 0.0
      %2424 = vmatprep.subr.mxu0 0.0
      %2425 = vmatpush1.xpose.msra.mxu0 0.0
      %2426 = vmatprep.subr.mxu0 0.0
      %2427 = vmatpush1.xpose.msra.mxu0 0.0
      %2428 = vmatprep.subr.mxu0 0.0
      %2429 = vmatpush1.xpose.msra.mxu0 0.0
      %2430 = vmatprep.subr.mxu0 0.0
      %2431 = vmatpush1.xpose.msra.mxu0 0.0
      %2432 = vmatprep.mubr.f32.mxu0 0.0
      %2433 = vmatmul.mubr.f32.gmra.mrb[0].mxu0 %v2360
      %v2434 = vpop.f32.mrb[0].mxu0
      %v2435 = vadd.f32 0.0, %v2434
      %v2436 = vpop.f32.mrb[0].mxu0
      %2437 = vmatprep.mubr.f32.mxu0 0.0
      %2438 = vmatmul.mubr.f32.gmra.mrb[0].mxu0 %v2362
      %v2439 = vpop.f32.mrb[0].mxu0
      %v2440 = vadd.f32 0.0, %v2439
      %v2441 = vpop.f32.mrb[0].mxu0
      %2442 = vdwg.mxu0
      %v2443 = vmul.f32 %v2435, 0.35355338
      %v2444 = vmul.f32 %v2440, 0.35355338
      %v2445 = vadd.f32 %v2443, %v890
      %v2446 = vadd.f32 %v2444, %v890
      %v2447 = vsel %vm894, %v2445, -inf
      %2448 = vmax.xlane.f32.xlu0 %v2447
      %v2449 = vpop.xlane.xlu0 %2448
      %v2450 = vsel %vm894, %v2446, -inf
      %2451 = vmax.xlane.f32.xlu0 %v2450
      %v2452 = vpop.xlane.xlu0 %2451
      %v2453 = vsub.f32 %v2445, %v2449
      %v2454 = vsub.f32 %v2446, %v2452
      %v2455 = vmul.f32 %v2453, 1.442695
      %v2456 = vpow.pop %v2455
      %v2457 = vmul.f32 %v2454, 1.442695
      %v2458 = vpow.pop %v2457
      %v2459 = vsel %vm894, %v2456, 0.0
      %2460 = vadd.xlane.f32.xlu0 %v2459
      %v2461 = vpop.xlane.xlu0 %2460
      %v2462 = vsel %vm894, %v2458, 0.0
      %2463 = vadd.xlane.f32.xlu0 %v2462
      %v2464 = vpop.xlane.xlu0 %2463
      %v2465 = vrcp.pop %v2461
      %v2466 = vrcp.pop %v2464
      %v2467 = vmul.f32 %v2456, %v2465
      %v2468 = vmul.f32 %v2458, %v2466
      %2469 = vrot.lane.b32.xlu0 %v2333, 64
      %v2470 = vpop.permute.xlu0 %2469
      %2471 = vrot.lane.b32.xlu0 %v2338, 64
      %v2472 = vpop.permute.xlu0 %2471
      %v2476 = vsel %vm894, %v2467, 0
      %v2479 = vsel %vm894, %v2468, 0
      %2481 = vmatprep.subr.mxu0 0.0
      %2482 = vmatpush1.msra.mxu0 %v2470
      %2483 = vmatprep.subr.mxu0 0.0
      %2484 = vmatpush1.msra.mxu0 %v2472
      %2485 = vmatprep.subr.mxu0 0.0
      %2486 = vmatpush1.msra.mxu0 0.0
      %2487 = vmatprep.subr.mxu0 0.0
      %2488 = vmatpush1.msra.mxu0 0.0
      %2489 = vmatprep.subr.mxu0 0.0
      %2490 = vmatpush1.msra.mxu0 0.0
      %2491 = vmatprep.subr.mxu0 0.0
      %2492 = vmatpush1.msra.mxu0 0.0
      %2493 = vmatprep.subr.mxu0 0.0
      %2494 = vmatpush1.msra.mxu0 0.0
      %2495 = vmatprep.subr.mxu0 0.0
      %2496 = vmatpush1.msra.mxu0 0.0
      %2497 = vmatprep.subr.mxu0 0.0
      %2498 = vmatpush1.msra.mxu0 0.0
      %2499 = vmatprep.subr.mxu0 0.0
      %2500 = vmatpush1.msra.mxu0 0.0
      %2501 = vmatprep.subr.mxu0 0.0
      %2502 = vmatpush1.msra.mxu0 0.0
      %2503 = vmatprep.subr.mxu0 0.0
      %2504 = vmatpush1.msra.mxu0 0.0
      %2505 = vmatprep.subr.mxu0 0.0
      %2506 = vmatpush1.msra.mxu0 0.0
      %2507 = vmatprep.subr.mxu0 0.0
      %2508 = vmatpush1.msra.mxu0 0.0
      %2509 = vmatprep.subr.mxu0 0.0
      %2510 = vmatpush1.msra.mxu0 0.0
      %2511 = vmatprep.subr.mxu0 0.0
      %2512 = vmatpush1.msra.mxu0 0.0
      %2513 = vmatprep.subr.mxu0 0.0
      %2514 = vmatpush1.msra.mxu0 0.0
      %2515 = vmatprep.subr.mxu0 0.0
      %2516 = vmatpush1.msra.mxu0 0.0
      %2517 = vmatprep.subr.mxu0 0.0
      %2518 = vmatpush1.msra.mxu0 0.0
      %2519 = vmatprep.subr.mxu0 0.0
      %2520 = vmatpush1.msra.mxu0 0.0
      %2521 = vmatprep.subr.mxu0 0.0
      %2522 = vmatpush1.msra.mxu0 0.0
      %2523 = vmatprep.subr.mxu0 0.0
      %2524 = vmatpush1.msra.mxu0 0.0
      %2525 = vmatprep.subr.mxu0 0.0
      %2526 = vmatpush1.msra.mxu0 0.0
      %2527 = vmatprep.subr.mxu0 0.0
      %2528 = vmatpush1.msra.mxu0 0.0
      %2529 = vmatprep.subr.mxu0 0.0
      %2530 = vmatpush1.msra.mxu0 0.0
      %2531 = vmatprep.subr.mxu0 0.0
      %2532 = vmatpush1.msra.mxu0 0.0
      %2533 = vmatprep.subr.mxu0 0.0
      %2534 = vmatpush1.msra.mxu0 0.0
      %2535 = vmatprep.subr.mxu0 0.0
      %2536 = vmatpush1.msra.mxu0 0.0
      %2537 = vmatprep.subr.mxu0 0.0
      %2538 = vmatpush1.msra.mxu0 0.0
      %2539 = vmatprep.subr.mxu0 0.0
      %2540 = vmatpush1.msra.mxu0 0.0
      %2541 = vmatprep.subr.mxu0 0.0
      %2542 = vmatpush1.msra.mxu0 0.0
      %2543 = vmatprep.subr.mxu0 0.0
      %2544 = vmatpush1.msra.mxu0 0.0
      %2545 = vmatprep.mubr.f32.mxu0 0.0
      %2546 = vmatmul.mubr.f32.gmra.mrb[0].mxu0 %v2476
      %v2547 = vpop.f32.mrb[0].mxu0
      %v2548 = vadd.f32 0.0, %v2547
      %v2549 = vpop.f32.mrb[0].mxu0
      %2550 = vmatprep.mubr.f32.mxu0 0.0
      %2551 = vmatmul.mubr.f32.gmra.mrb[0].mxu0 %v2479
      %v2552 = vpop.f32.mrb[0].mxu0
      %v2553 = vadd.f32 0.0, %v2552
      %v2554 = vpop.f32.mrb[0].mxu0
      %2555 = vdwg.mxu0
      %v2557 = vsel %vm800, %v2548, 0
      %v2560 = vsel %vm800, %v2553, 0
      %2562 = vmatprep.subr.mxu0 0.0
      %2563 = vmatpush1.msra.mxu0 %v2342
      %2564 = vmatprep.subr.mxu0 0.0
      %2565 = vmatpush1.msra.mxu0 0.0
      %2566 = vmatprep.subr.mxu0 0.0
      %2567 = vmatpush1.msra.mxu0 0.0
      %2568 = vmatprep.subr.mxu0 0.0
      %2569 = vmatpush1.msra.mxu0 0.0
      %2570 = vmatprep.subr.mxu0 0.0
      %2571 = vmatpush1.msra.mxu0 0.0
      %2572 = vmatprep.subr.mxu0 0.0
      %2573 = vmatpush1.msra.mxu0 0.0
      %2574 = vmatprep.subr.mxu0 0.0
      %2575 = vmatpush1.msra.mxu0 0.0
      %2576 = vmatprep.subr.mxu0 0.0
      %2577 = vmatpush1.msra.mxu0 0.0
      %2578 = vmatprep.subr.mxu0 0.0
      %2579 = vmatpush1.msra.mxu0 0.0
      %2580 = vmatprep.subr.mxu0 0.0
      %2581 = vmatpush1.msra.mxu0 0.0
      %2582 = vmatprep.subr.mxu0 0.0
      %2583 = vmatpush1.msra.mxu0 0.0
      %2584 = vmatprep.subr.mxu0 0.0
      %2585 = vmatpush1.msra.mxu0 0.0
      %2586 = vmatprep.subr.mxu0 0.0
      %2587 = vmatpush1.msra.mxu0 0.0
      %2588 = vmatprep.subr.mxu0 0.0
      %2589 = vmatpush1.msra.mxu0 0.0
      %2590 = vmatprep.subr.mxu0 0.0
      %2591 = vmatpush1.msra.mxu0 0.0
      %2592 = vmatprep.subr.mxu0 0.0
      %2593 = vmatpush1.msra.mxu0 0.0
      %2594 = vmatprep.subr.mxu0 0.0
      %2595 = vmatpush1.msra.mxu0 0.0
      %2596 = vmatprep.subr.mxu0 0.0
      %2597 = vmatpush1.msra.mxu0 0.0
      %2598 = vmatprep.subr.mxu0 0.0
      %2599 = vmatpush1.msra.mxu0 0.0
      %2600 = vmatprep.subr.mxu0 0.0
      %2601 = vmatpush1.msra.mxu0 0.0
      %2602 = vmatprep.subr.mxu0 0.0
      %2603 = vmatpush1.msra.mxu0 0.0
      %2604 = vmatprep.subr.mxu0 0.0
      %2605 = vmatpush1.msra.mxu0 0.0
      %2606 = vmatprep.subr.mxu0 0.0
      %2607 = vmatpush1.msra.mxu0 0.0
      %2608 = vmatprep.subr.mxu0 0.0
      %2609 = vmatpush1.msra.mxu0 0.0
      %2610 = vmatprep.subr.mxu0 0.0
      %2611 = vmatpush1.msra.mxu0 0.0
      %2612 = vmatprep.subr.mxu0 0.0
      %2613 = vmatpush1.msra.mxu0 0.0
      %2614 = vmatprep.subr.mxu0 0.0
      %2615 = vmatpush1.msra.mxu0 0.0
      %2616 = vmatprep.subr.mxu0 0.0
      %2617 = vmatpush1.msra.mxu0 0.0
      %2618 = vmatprep.subr.mxu0 0.0
      %2619 = vmatpush1.msra.mxu0 0.0
      %2620 = vmatprep.subr.mxu0 0.0
      %2621 = vmatpush1.msra.mxu0 0.0
      %2622 = vmatprep.subr.mxu0 0.0
      %2623 = vmatpush1.msra.mxu0 0.0
      %2624 = vmatprep.subr.mxu0 0.0
      %2625 = vmatpush1.msra.mxu0 0.0
      %2626 = vmatprep.mubr.f32.mxu0 0.0
      %2627 = vmatmul.mubr.f32.gmra.mrb[0].mxu0 %v2557
      %v2628 = vpop.f32.mrb[0].mxu0
      %v2629 = vadd.f32 0.0, %v2628
      %v2630 = vpop.f32.mrb[0].mxu0
      %2631 = vmatprep.mubr.f32.mxu0 0.0
      %2632 = vmatmul.mubr.f32.gmra.mrb[0].mxu0 %v2560
      %v2633 = vpop.f32.mrb[0].mxu0
      %v2634 = vadd.f32 0.0, %v2633
      %v2635 = vpop.f32.mrb[0].mxu0
      %2636 = vdwg.mxu0
      %v2637 = vadd.f32 %v2352, %v2629
      %v2638 = vadd.f32 %v2352, %v2634
      %2639 = vrot.lane.b32.xlu0 %v2333, 120
      %v2640 = vpop.permute.xlu0 %2639
      %2641 = vrot.lane.b32.xlu0 %v2338, 120
      %v2642 = vpop.permute.xlu0 %2641
      %2643 = vrot.lane.b32.xlu0 %v2333, 88
      %v2644 = vpop.permute.xlu0 %2643
      %2645 = vrot.lane.b32.xlu0 %v2338, 88
      %v2646 = vpop.permute.xlu0 %2645
      %v2647 = vsel %vm800, %v2640, 0
      %v2649 = vsel %vm800, %v2642, 0
      %v2651 = vsel %vm800, %v2644, 0
      %v2653 = vsel %vm800, %v2646, 0
      %2655 = vmatprep.subr.mxu0 0.0
      %2656 = vmatpush1.xpose.msra.mxu0 %v2651
      %2657 = vmatprep.subr.mxu0 0.0
      %2658 = vmatpush1.xpose.msra.mxu0 %v2653
      %2659 = vmatprep.subr.mxu0 0.0
      %2660 = vmatpush1.xpose.msra.mxu0 0.0
      %2661 = vmatprep.subr.mxu0 0.0
      %2662 = vmatpush1.xpose.msra.mxu0 0.0
      %2663 = vmatprep.subr.mxu0 0.0
      %2664 = vmatpush1.xpose.msra.mxu0 0.0
      %2665 = vmatprep.subr.mxu0 0.0
      %2666 = vmatpush1.xpose.msra.mxu0 0.0
      %2667 = vmatprep.subr.mxu0 0.0
      %2668 = vmatpush1.xpose.msra.mxu0 0.0
      %2669 = vmatprep.subr.mxu0 0.0
      %2670 = vmatpush1.xpose.msra.mxu0 0.0
      %2671 = vmatprep.subr.mxu0 0.0
      %2672 = vmatpush1.xpose.msra.mxu0 0.0
      %2673 = vmatprep.subr.mxu0 0.0
      %2674 = vmatpush1.xpose.msra.mxu0 0.0
      %2675 = vmatprep.subr.mxu0 0.0
      %2676 = vmatpush1.xpose.msra.mxu0 0.0
      %2677 = vmatprep.subr.mxu0 0.0
      %2678 = vmatpush1.xpose.msra.mxu0 0.0
      %2679 = vmatprep.subr.mxu0 0.0
      %2680 = vmatpush1.xpose.msra.mxu0 0.0
      %2681 = vmatprep.subr.mxu0 0.0
      %2682 = vmatpush1.xpose.msra.mxu0 0.0
      %2683 = vmatprep.subr.mxu0 0.0
      %2684 = vmatpush1.xpose.msra.mxu0 0.0
      %2685 = vmatprep.subr.mxu0 0.0
      %2686 = vmatpush1.xpose.msra.mxu0 0.0
      %2687 = vmatprep.subr.mxu0 0.0
      %2688 = vmatpush1.xpose.msra.mxu0 0.0
      %2689 = vmatprep.subr.mxu0 0.0
      %2690 = vmatpush1.xpose.msra.mxu0 0.0
      %2691 = vmatprep.subr.mxu0 0.0
      %2692 = vmatpush1.xpose.msra.mxu0 0.0
      %2693 = vmatprep.subr.mxu0 0.0
      %2694 = vmatpush1.xpose.msra.mxu0 0.0
      %2695 = vmatprep.subr.mxu0 0.0
      %2696 = vmatpush1.xpose.msra.mxu0 0.0
      %2697 = vmatprep.subr.mxu0 0.0
      %2698 = vmatpush1.xpose.msra.mxu0 0.0
      %2699 = vmatprep.subr.mxu0 0.0
      %2700 = vmatpush1.xpose.msra.mxu0 0.0
      %2701 = vmatprep.subr.mxu0 0.0
      %2702 = vmatpush1.xpose.msra.mxu0 0.0
      %2703 = vmatprep.subr.mxu0 0.0
      %2704 = vmatpush1.xpose.msra.mxu0 0.0
      %2705 = vmatprep.subr.mxu0 0.0
      %2706 = vmatpush1.xpose.msra.mxu0 0.0
      %2707 = vmatprep.subr.mxu0 0.0
      %2708 = vmatpush1.xpose.msra.mxu0 0.0
      %2709 = vmatprep.subr.mxu0 0.0
      %2710 = vmatpush1.xpose.msra.mxu0 0.0
      %2711 = vmatprep.subr.mxu0 0.0
      %2712 = vmatpush1.xpose.msra.mxu0 0.0
      %2713 = vmatprep.subr.mxu0 0.0
      %2714 = vmatpush1.xpose.msra.mxu0 0.0
      %2715 = vmatprep.subr.mxu0 0.0
      %2716 = vmatpush1.xpose.msra.mxu0 0.0
      %2717 = vmatprep.subr.mxu0 0.0
      %2718 = vmatpush1.xpose.msra.mxu0 0.0
      %2719 = vmatprep.mubr.f32.mxu0 0.0
      %2720 = vmatmul.mubr.f32.gmra.mrb[0].mxu0 %v2647
      %v2721 = vpop.f32.mrb[0].mxu0
      %v2722 = vadd.f32 0.0, %v2721
      %v2723 = vpop.f32.mrb[0].mxu0
      %2724 = vmatprep.mubr.f32.mxu0 0.0
      %2725 = vmatmul.mubr.f32.gmra.mrb[0].mxu0 %v2649
      %v2726 = vpop.f32.mrb[0].mxu0
      %v2727 = vadd.f32 0.0, %v2726
      %v2728 = vpop.f32.mrb[0].mxu0
      %2729 = vdwg.mxu0
      %v2730 = vmul.f32 %v2722, 0.35355338
      %v2731 = vmul.f32 %v2727, 0.35355338
      %v2732 = vadd.f32 %v2730, %v890
      %v2733 = vadd.f32 %v2731, %v890
      %v2734 = vsel %vm894, %v2732, -inf
      %2735 = vmax.xlane.f32.xlu0 %v2734
      %v2736 = vpop.xlane.xlu0 %2735
      %v2737 = vsel %vm894, %v2733, -inf
      %2738 = vmax.xlane.f32.xlu0 %v2737
      %v2739 = vpop.xlane.xlu0 %2738
      %v2740 = vsub.f32 %v2732, %v2736
      %v2741 = vsub.f32 %v2733, %v2739
      %v2742 = vmul.f32 %v2740, 1.442695
      %v2743 = vpow.pop %v2742
      %v2744 = vmul.f32 %v2741, 1.442695
      %v2745 = vpow.pop %v2744
      %v2746 = vsel %vm894, %v2743, 0.0
      %2747 = vadd.xlane.f32.xlu0 %v2746
      %v2748 = vpop.xlane.xlu0 %2747
      %v2749 = vsel %vm894, %v2745, 0.0
      %2750 = vadd.xlane.f32.xlu0 %v2749
      %v2751 = vpop.xlane.xlu0 %2750
      %v2752 = vrcp.pop %v2748
      %v2753 = vrcp.pop %v2751
      %v2754 = vmul.f32 %v2743, %v2752
      %v2755 = vmul.f32 %v2745, %v2753
      %2756 = vrot.lane.b32.xlu0 %v2333, 56
      %v2757 = vpop.permute.xlu0 %2756
      %2758 = vrot.lane.b32.xlu0 %v2338, 56
      %v2759 = vpop.permute.xlu0 %2758
      %v2763 = vsel %vm894, %v2754, 0
      %v2766 = vsel %vm894, %v2755, 0
      %2768 = vmatprep.subr.mxu0 0.0
      %2769 = vmatpush1.msra.mxu0 %v2757
      %2770 = vmatprep.subr.mxu0 0.0
      %2771 = vmatpush1.msra.mxu0 %v2759
      %2772 = vmatprep.subr.mxu0 0.0
      %2773 = vmatpush1.msra.mxu0 0.0
      %2774 = vmatprep.subr.mxu0 0.0
      %2775 = vmatpush1.msra.mxu0 0.0
      %2776 = vmatprep.subr.mxu0 0.0
      %2777 = vmatpush1.msra.mxu0 0.0
      %2778 = vmatprep.subr.mxu0 0.0
      %2779 = vmatpush1.msra.mxu0 0.0
      %2780 = vmatprep.subr.mxu0 0.0
      %2781 = vmatpush1.msra.mxu0 0.0
      %2782 = vmatprep.subr.mxu0 0.0
      %2783 = vmatpush1.msra.mxu0 0.0
      %2784 = vmatprep.subr.mxu0 0.0
      %2785 = vmatpush1.msra.mxu0 0.0
      %2786 = vmatprep.subr.mxu0 0.0
      %2787 = vmatpush1.msra.mxu0 0.0
      %2788 = vmatprep.subr.mxu0 0.0
      %2789 = vmatpush1.msra.mxu0 0.0
      %2790 = vmatprep.subr.mxu0 0.0
      %2791 = vmatpush1.msra.mxu0 0.0
      %2792 = vmatprep.subr.mxu0 0.0
      %2793 = vmatpush1.msra.mxu0 0.0
      %2794 = vmatprep.subr.mxu0 0.0
      %2795 = vmatpush1.msra.mxu0 0.0
      %2796 = vmatprep.subr.mxu0 0.0
      %2797 = vmatpush1.msra.mxu0 0.0
      %2798 = vmatprep.subr.mxu0 0.0
      %2799 = vmatpush1.msra.mxu0 0.0
      %2800 = vmatprep.subr.mxu0 0.0
      %2801 = vmatpush1.msra.mxu0 0.0
      %2802 = vmatprep.subr.mxu0 0.0
      %2803 = vmatpush1.msra.mxu0 0.0
      %2804 = vmatprep.subr.mxu0 0.0
      %2805 = vmatpush1.msra.mxu0 0.0
      %2806 = vmatprep.subr.mxu0 0.0
      %2807 = vmatpush1.msra.mxu0 0.0
      %2808 = vmatprep.subr.mxu0 0.0
      %2809 = vmatpush1.msra.mxu0 0.0
      %2810 = vmatprep.subr.mxu0 0.0
      %2811 = vmatpush1.msra.mxu0 0.0
      %2812 = vmatprep.subr.mxu0 0.0
      %2813 = vmatpush1.msra.mxu0 0.0
      %2814 = vmatprep.subr.mxu0 0.0
      %2815 = vmatpush1.msra.mxu0 0.0
      %2816 = vmatprep.subr.mxu0 0.0
      %2817 = vmatpush1.msra.mxu0 0.0
      %2818 = vmatprep.subr.mxu0 0.0
      %2819 = vmatpush1.msra.mxu0 0.0
      %2820 = vmatprep.subr.mxu0 0.0
      %2821 = vmatpush1.msra.mxu0 0.0
      %2822 = vmatprep.subr.mxu0 0.0
      %2823 = vmatpush1.msra.mxu0 0.0
      %2824 = vmatprep.subr.mxu0 0.0
      %2825 = vmatpush1.msra.mxu0 0.0
      %2826 = vmatprep.subr.mxu0 0.0
      %2827 = vmatpush1.msra.mxu0 0.0
      %2828 = vmatprep.subr.mxu0 0.0
      %2829 = vmatpush1.msra.mxu0 0.0
      %2830 = vmatprep.subr.mxu0 0.0
      %2831 = vmatpush1.msra.mxu0 0.0
      %2832 = vmatprep.mubr.f32.mxu0 0.0
      %2833 = vmatmul.mubr.f32.gmra.mrb[0].mxu0 %v2763
      %v2834 = vpop.f32.mrb[0].mxu0
      %v2835 = vadd.f32 0.0, %v2834
      %v2836 = vpop.f32.mrb[0].mxu0
      %2837 = vmatprep.mubr.f32.mxu0 0.0
      %2838 = vmatmul.mubr.f32.gmra.mrb[0].mxu0 %v2766
      %v2839 = vpop.f32.mrb[0].mxu0
      %v2840 = vadd.f32 0.0, %v2839
      %v2841 = vpop.f32.mrb[0].mxu0
      %2842 = vdwg.mxu0
      %v2844 = vsel %vm800, %v2835, 0
      %v2847 = vsel %vm800, %v2840, 0
      %2849 = vmatprep.subr.mxu0 0.0
      %2850 = vmatpush1.msra.mxu0 %v2343
      %2851 = vmatprep.subr.mxu0 0.0
      %2852 = vmatpush1.msra.mxu0 0.0
      %2853 = vmatprep.subr.mxu0 0.0
      %2854 = vmatpush1.msra.mxu0 0.0
      %2855 = vmatprep.subr.mxu0 0.0
      %2856 = vmatpush1.msra.mxu0 0.0
      %2857 = vmatprep.subr.mxu0 0.0
      %2858 = vmatpush1.msra.mxu0 0.0
      %2859 = vmatprep.subr.mxu0 0.0
      %2860 = vmatpush1.msra.mxu0 0.0
      %2861 = vmatprep.subr.mxu0 0.0
      %2862 = vmatpush1.msra.mxu0 0.0
      %2863 = vmatprep.subr.mxu0 0.0
      %2864 = vmatpush1.msra.mxu0 0.0
      %2865 = vmatprep.subr.mxu0 0.0
      %2866 = vmatpush1.msra.mxu0 0.0
      %2867 = vmatprep.subr.mxu0 0.0
      %2868 = vmatpush1.msra.mxu0 0.0
      %2869 = vmatprep.subr.mxu0 0.0
      %2870 = vmatpush1.msra.mxu0 0.0
      %2871 = vmatprep.subr.mxu0 0.0
      %2872 = vmatpush1.msra.mxu0 0.0
      %2873 = vmatprep.subr.mxu0 0.0
      %2874 = vmatpush1.msra.mxu0 0.0
      %2875 = vmatprep.subr.mxu0 0.0
      %2876 = vmatpush1.msra.mxu0 0.0
      %2877 = vmatprep.subr.mxu0 0.0
      %2878 = vmatpush1.msra.mxu0 0.0
      %2879 = vmatprep.subr.mxu0 0.0
      %2880 = vmatpush1.msra.mxu0 0.0
      %2881 = vmatprep.subr.mxu0 0.0
      %2882 = vmatpush1.msra.mxu0 0.0
      %2883 = vmatprep.subr.mxu0 0.0
      %2884 = vmatpush1.msra.mxu0 0.0
      %2885 = vmatprep.subr.mxu0 0.0
      %2886 = vmatpush1.msra.mxu0 0.0
      %2887 = vmatprep.subr.mxu0 0.0
      %2888 = vmatpush1.msra.mxu0 0.0
      %2889 = vmatprep.subr.mxu0 0.0
      %2890 = vmatpush1.msra.mxu0 0.0
      %2891 = vmatprep.subr.mxu0 0.0
      %2892 = vmatpush1.msra.mxu0 0.0
      %2893 = vmatprep.subr.mxu0 0.0
      %2894 = vmatpush1.msra.mxu0 0.0
      %2895 = vmatprep.subr.mxu0 0.0
      %2896 = vmatpush1.msra.mxu0 0.0
      %2897 = vmatprep.subr.mxu0 0.0
      %2898 = vmatpush1.msra.mxu0 0.0
      %2899 = vmatprep.subr.mxu0 0.0
      %2900 = vmatpush1.msra.mxu0 0.0
      %2901 = vmatprep.subr.mxu0 0.0
      %2902 = vmatpush1.msra.mxu0 0.0
      %2903 = vmatprep.subr.mxu0 0.0
      %2904 = vmatpush1.msra.mxu0 0.0
      %2905 = vmatprep.subr.mxu0 0.0
      %2906 = vmatpush1.msra.mxu0 0.0
      %2907 = vmatprep.subr.mxu0 0.0
      %2908 = vmatpush1.msra.mxu0 0.0
      %2909 = vmatprep.subr.mxu0 0.0
      %2910 = vmatpush1.msra.mxu0 0.0
      %2911 = vmatprep.subr.mxu0 0.0
      %2912 = vmatpush1.msra.mxu0 0.0
      %2913 = vmatprep.mubr.f32.mxu0 0.0
      %2914 = vmatmul.mubr.f32.gmra.mrb[0].mxu0 %v2844
      %v2915 = vpop.f32.mrb[0].mxu0
      %v2916 = vadd.f32 0.0, %v2915
      %v2917 = vpop.f32.mrb[0].mxu0
      %2918 = vmatprep.mubr.f32.mxu0 0.0
      %2919 = vmatmul.mubr.f32.gmra.mrb[0].mxu0 %v2847
      %v2920 = vpop.f32.mrb[0].mxu0
      %v2921 = vadd.f32 0.0, %v2920
      %v2922 = vpop.f32.mrb[0].mxu0
      %2923 = vdwg.mxu0
      %v2924 = vadd.f32 %v2637, %v2916
      %v2925 = vadd.f32 %v2638, %v2921
      %2926 = vrot.lane.b32.xlu0 %v2333, 112
      %v2927 = vpop.permute.xlu0 %2926
      %2928 = vrot.lane.b32.xlu0 %v2338, 112
      %v2929 = vpop.permute.xlu0 %2928
      %2930 = vrot.lane.b32.xlu0 %v2333, 80
      %v2931 = vpop.permute.xlu0 %2930
      %2932 = vrot.lane.b32.xlu0 %v2338, 80
      %v2933 = vpop.permute.xlu0 %2932
      %v2934 = vsel %vm800, %v2927, 0
      %v2936 = vsel %vm800, %v2929, 0
      %v2938 = vsel %vm800, %v2931, 0
      %v2940 = vsel %vm800, %v2933, 0
      %2942 = vmatprep.subr.mxu0 0.0
      %2943 = vmatpush1.xpose.msra.mxu0 %v2938
      %2944 = vmatprep.subr.mxu0 0.0
      %2945 = vmatpush1.xpose.msra.mxu0 %v2940
      %2946 = vmatprep.subr.mxu0 0.0
      %2947 = vmatpush1.xpose.msra.mxu0 0.0
      %2948 = vmatprep.subr.mxu0 0.0
      %2949 = vmatpush1.xpose.msra.mxu0 0.0
      %2950 = vmatprep.subr.mxu0 0.0
      %2951 = vmatpush1.xpose.msra.mxu0 0.0
      %2952 = vmatprep.subr.mxu0 0.0
      %2953 = vmatpush1.xpose.msra.mxu0 0.0
      %2954 = vmatprep.subr.mxu0 0.0
      %2955 = vmatpush1.xpose.msra.mxu0 0.0
      %2956 = vmatprep.subr.mxu0 0.0
      %2957 = vmatpush1.xpose.msra.mxu0 0.0
      %2958 = vmatprep.subr.mxu0 0.0
      %2959 = vmatpush1.xpose.msra.mxu0 0.0
      %2960 = vmatprep.subr.mxu0 0.0
      %2961 = vmatpush1.xpose.msra.mxu0 0.0
      %2962 = vmatprep.subr.mxu0 0.0
      %2963 = vmatpush1.xpose.msra.mxu0 0.0
      %2964 = vmatprep.subr.mxu0 0.0
      %2965 = vmatpush1.xpose.msra.mxu0 0.0
      %2966 = vmatprep.subr.mxu0 0.0
      %2967 = vmatpush1.xpose.msra.mxu0 0.0
      %2968 = vmatprep.subr.mxu0 0.0
      %2969 = vmatpush1.xpose.msra.mxu0 0.0
      %2970 = vmatprep.subr.mxu0 0.0
      %2971 = vmatpush1.xpose.msra.mxu0 0.0
      %2972 = vmatprep.subr.mxu0 0.0
      %2973 = vmatpush1.xpose.msra.mxu0 0.0
      %2974 = vmatprep.subr.mxu0 0.0
      %2975 = vmatpush1.xpose.msra.mxu0 0.0
      %2976 = vmatprep.subr.mxu0 0.0
      %2977 = vmatpush1.xpose.msra.mxu0 0.0
      %2978 = vmatprep.subr.mxu0 0.0
      %2979 = vmatpush1.xpose.msra.mxu0 0.0
      %2980 = vmatprep.subr.mxu0 0.0
      %2981 = vmatpush1.xpose.msra.mxu0 0.0
      %2982 = vmatprep.subr.mxu0 0.0
      %2983 = vmatpush1.xpose.msra.mxu0 0.0
      %2984 = vmatprep.subr.mxu0 0.0
      %2985 = vmatpush1.xpose.msra.mxu0 0.0
      %2986 = vmatprep.subr.mxu0 0.0
      %2987 = vmatpush1.xpose.msra.mxu0 0.0
      %2988 = vmatprep.subr.mxu0 0.0
      %2989 = vmatpush1.xpose.msra.mxu0 0.0
      %2990 = vmatprep.subr.mxu0 0.0
      %2991 = vmatpush1.xpose.msra.mxu0 0.0
      %2992 = vmatprep.subr.mxu0 0.0
      %2993 = vmatpush1.xpose.msra.mxu0 0.0
      %2994 = vmatprep.subr.mxu0 0.0
      %2995 = vmatpush1.xpose.msra.mxu0 0.0
      %2996 = vmatprep.subr.mxu0 0.0
      %2997 = vmatpush1.xpose.msra.mxu0 0.0
      %2998 = vmatprep.subr.mxu0 0.0
      %2999 = vmatpush1.xpose.msra.mxu0 0.0
      %3000 = vmatprep.subr.mxu0 0.0
      %3001 = vmatpush1.xpose.msra.mxu0 0.0
      %3002 = vmatprep.subr.mxu0 0.0
      %3003 = vmatpush1.xpose.msra.mxu0 0.0
      %3004 = vmatprep.subr.mxu0 0.0
      %3005 = vmatpush1.xpose.msra.mxu0 0.0
      %3006 = vmatprep.mubr.f32.mxu0 0.0
      %3007 = vmatmul.mubr.f32.gmra.mrb[0].mxu0 %v2934
      %v3008 = vpop.f32.mrb[0].mxu0
      %v3009 = vadd.f32 0.0, %v3008
      %v3010 = vpop.f32.mrb[0].mxu0
      %3011 = vmatprep.mubr.f32.mxu0 0.0
      %3012 = vmatmul.mubr.f32.gmra.mrb[0].mxu0 %v2936
      %v3013 = vpop.f32.mrb[0].mxu0
      %v3014 = vadd.f32 0.0, %v3013
      %v3015 = vpop.f32.mrb[0].mxu0
      %3016 = vdwg.mxu0
      %v3017 = vmul.f32 %v3009, 0.35355338
      %v3018 = vmul.f32 %v3014, 0.35355338
      %v3019 = vadd.f32 %v3017, %v890
      %v3020 = vadd.f32 %v3018, %v890
      %v3021 = vsel %vm894, %v3019, -inf
      %3022 = vmax.xlane.f32.xlu0 %v3021
      %v3023 = vpop.xlane.xlu0 %3022
      %v3024 = vsel %vm894, %v3020, -inf
      %3025 = vmax.xlane.f32.xlu0 %v3024
      %v3026 = vpop.xlane.xlu0 %3025
      %v3027 = vsub.f32 %v3019, %v3023
      %v3028 = vsub.f32 %v3020, %v3026
      %v3029 = vmul.f32 %v3027, 1.442695
      %v3030 = vpow.pop %v3029
      %v3031 = vmul.f32 %v3028, 1.442695
      %v3032 = vpow.pop %v3031
      %v3033 = vsel %vm894, %v3030, 0.0
      %3034 = vadd.xlane.f32.xlu0 %v3033
      %v3035 = vpop.xlane.xlu0 %3034
      %v3036 = vsel %vm894, %v3032, 0.0
      %3037 = vadd.xlane.f32.xlu0 %v3036
      %v3038 = vpop.xlane.xlu0 %3037
      %v3039 = vrcp.pop %v3035
      %v3040 = vrcp.pop %v3038
      %v3041 = vmul.f32 %v3030, %v3039
      %v3042 = vmul.f32 %v3032, %v3040
      %3043 = vrot.lane.b32.xlu0 %v2333, 48
      %v3044 = vpop.permute.xlu0 %3043
      %3045 = vrot.lane.b32.xlu0 %v2338, 48
      %v3046 = vpop.permute.xlu0 %3045
      %v3050 = vsel %vm894, %v3041, 0
      %v3053 = vsel %vm894, %v3042, 0
      %3055 = vmatprep.subr.mxu0 0.0
      %3056 = vmatpush1.msra.mxu0 %v3044
      %3057 = vmatprep.subr.mxu0 0.0
      %3058 = vmatpush1.msra.mxu0 %v3046
      %3059 = vmatprep.subr.mxu0 0.0
      %3060 = vmatpush1.msra.mxu0 0.0
      %3061 = vmatprep.subr.mxu0 0.0
      %3062 = vmatpush1.msra.mxu0 0.0
      %3063 = vmatprep.subr.mxu0 0.0
      %3064 = vmatpush1.msra.mxu0 0.0
      %3065 = vmatprep.subr.mxu0 0.0
      %3066 = vmatpush1.msra.mxu0 0.0
      %3067 = vmatprep.subr.mxu0 0.0
      %3068 = vmatpush1.msra.mxu0 0.0
      %3069 = vmatprep.subr.mxu0 0.0
      %3070 = vmatpush1.msra.mxu0 0.0
      %3071 = vmatprep.subr.mxu0 0.0
      %3072 = vmatpush1.msra.mxu0 0.0
      %3073 = vmatprep.subr.mxu0 0.0
      %3074 = vmatpush1.msra.mxu0 0.0
      %3075 = vmatprep.subr.mxu0 0.0
      %3076 = vmatpush1.msra.mxu0 0.0
      %3077 = vmatprep.subr.mxu0 0.0
      %3078 = vmatpush1.msra.mxu0 0.0
      %3079 = vmatprep.subr.mxu0 0.0
      %3080 = vmatpush1.msra.mxu0 0.0
      %3081 = vmatprep.subr.mxu0 0.0
      %3082 = vmatpush1.msra.mxu0 0.0
      %3083 = vmatprep.subr.mxu0 0.0
      %3084 = vmatpush1.msra.mxu0 0.0
      %3085 = vmatprep.subr.mxu0 0.0
      %3086 = vmatpush1.msra.mxu0 0.0
      %3087 = vmatprep.subr.mxu0 0.0
      %3088 = vmatpush1.msra.mxu0 0.0
      %3089 = vmatprep.subr.mxu0 0.0
      %3090 = vmatpush1.msra.mxu0 0.0
      %3091 = vmatprep.subr.mxu0 0.0
      %3092 = vmatpush1.msra.mxu0 0.0
      %3093 = vmatprep.subr.mxu0 0.0
      %3094 = vmatpush1.msra.mxu0 0.0
      %3095 = vmatprep.subr.mxu0 0.0
      %3096 = vmatpush1.msra.mxu0 0.0
      %3097 = vmatprep.subr.mxu0 0.0
      %3098 = vmatpush1.msra.mxu0 0.0
      %3099 = vmatprep.subr.mxu0 0.0
      %3100 = vmatpush1.msra.mxu0 0.0
      %3101 = vmatprep.subr.mxu0 0.0
      %3102 = vmatpush1.msra.mxu0 0.0
      %3103 = vmatprep.subr.mxu0 0.0
      %3104 = vmatpush1.msra.mxu0 0.0
      %3105 = vmatprep.subr.mxu0 0.0
      %3106 = vmatpush1.msra.mxu0 0.0
      %3107 = vmatprep.subr.mxu0 0.0
      %3108 = vmatpush1.msra.mxu0 0.0
      %3109 = vmatprep.subr.mxu0 0.0
      %3110 = vmatpush1.msra.mxu0 0.0
      %3111 = vmatprep.subr.mxu0 0.0
      %3112 = vmatpush1.msra.mxu0 0.0
      %3113 = vmatprep.subr.mxu0 0.0
      %3114 = vmatpush1.msra.mxu0 0.0
      %3115 = vmatprep.subr.mxu0 0.0
      %3116 = vmatpush1.msra.mxu0 0.0
      %3117 = vmatprep.subr.mxu0 0.0
      %3118 = vmatpush1.msra.mxu0 0.0
      %3119 = vmatprep.mubr.f32.mxu0 0.0
      %3120 = vmatmul.mubr.f32.gmra.mrb[0].mxu0 %v3050
      %v3121 = vpop.f32.mrb[0].mxu0
      %v3122 = vadd.f32 0.0, %v3121
      %v3123 = vpop.f32.mrb[0].mxu0
      %3124 = vmatprep.mubr.f32.mxu0 0.0
      %3125 = vmatmul.mubr.f32.gmra.mrb[0].mxu0 %v3053
      %v3126 = vpop.f32.mrb[0].mxu0
      %v3127 = vadd.f32 0.0, %v3126
      %v3128 = vpop.f32.mrb[0].mxu0
      %3129 = vdwg.mxu0
      %v3131 = vsel %vm800, %v3122, 0
      %v3134 = vsel %vm800, %v3127, 0
      %3136 = vmatprep.subr.mxu0 0.0
      %3137 = vmatpush1.msra.mxu0 %v2344
      %3138 = vmatprep.subr.mxu0 0.0
      %3139 = vmatpush1.msra.mxu0 0.0
      %3140 = vmatprep.subr.mxu0 0.0
      %3141 = vmatpush1.msra.mxu0 0.0
      %3142 = vmatprep.subr.mxu0 0.0
      %3143 = vmatpush1.msra.mxu0 0.0
      %3144 = vmatprep.subr.mxu0 0.0
      %3145 = vmatpush1.msra.mxu0 0.0
      %3146 = vmatprep.subr.mxu0 0.0
      %3147 = vmatpush1.msra.mxu0 0.0
      %3148 = vmatprep.subr.mxu0 0.0
      %3149 = vmatpush1.msra.mxu0 0.0
      %3150 = vmatprep.subr.mxu0 0.0
      %3151 = vmatpush1.msra.mxu0 0.0
      %3152 = vmatprep.subr.mxu0 0.0
      %3153 = vmatpush1.msra.mxu0 0.0
      %3154 = vmatprep.subr.mxu0 0.0
      %3155 = vmatpush1.msra.mxu0 0.0
      %3156 = vmatprep.subr.mxu0 0.0
      %3157 = vmatpush1.msra.mxu0 0.0
      %3158 = vmatprep.subr.mxu0 0.0
      %3159 = vmatpush1.msra.mxu0 0.0
      %3160 = vmatprep.subr.mxu0 0.0
      %3161 = vmatpush1.msra.mxu0 0.0
      %3162 = vmatprep.subr.mxu0 0.0
      %3163 = vmatpush1.msra.mxu0 0.0
      %3164 = vmatprep.subr.mxu0 0.0
      %3165 = vmatpush1.msra.mxu0 0.0
      %3166 = vmatprep.subr.mxu0 0.0
      %3167 = vmatpush1.msra.mxu0 0.0
      %3168 = vmatprep.subr.mxu0 0.0
      %3169 = vmatpush1.msra.mxu0 0.0
      %3170 = vmatprep.subr.mxu0 0.0
      %3171 = vmatpush1.msra.mxu0 0.0
      %3172 = vmatprep.subr.mxu0 0.0
      %3173 = vmatpush1.msra.mxu0 0.0
      %3174 = vmatprep.subr.mxu0 0.0
      %3175 = vmatpush1.msra.mxu0 0.0
      %3176 = vmatprep.subr.mxu0 0.0
      %3177 = vmatpush1.msra.mxu0 0.0
      %3178 = vmatprep.subr.mxu0 0.0
      %3179 = vmatpush1.msra.mxu0 0.0
      %3180 = vmatprep.subr.mxu0 0.0
      %3181 = vmatpush1.msra.mxu0 0.0
      %3182 = vmatprep.subr.mxu0 0.0
      %3183 = vmatpush1.msra.mxu0 0.0
      %3184 = vmatprep.subr.mxu0 0.0
      %3185 = vmatpush1.msra.mxu0 0.0
      %3186 = vmatprep.subr.mxu0 0.0
      %3187 = vmatpush1.msra.mxu0 0.0
      %3188 = vmatprep.subr.mxu0 0.0
      %3189 = vmatpush1.msra.mxu0 0.0
      %3190 = vmatprep.subr.mxu0 0.0
      %3191 = vmatpush1.msra.mxu0 0.0
      %3192 = vmatprep.subr.mxu0 0.0
      %3193 = vmatpush1.msra.mxu0 0.0
      %3194 = vmatprep.subr.mxu0 0.0
      %3195 = vmatpush1.msra.mxu0 0.0
      %3196 = vmatprep.subr.mxu0 0.0
      %3197 = vmatpush1.msra.mxu0 0.0
      %3198 = vmatprep.subr.mxu0 0.0
      %3199 = vmatpush1.msra.mxu0 0.0
      %3200 = vmatprep.mubr.f32.mxu0 0.0
      %3201 = vmatmul.mubr.f32.gmra.mrb[0].mxu0 %v3131
      %v3202 = vpop.f32.mrb[0].mxu0
      %v3203 = vadd.f32 0.0, %v3202
      %v3204 = vpop.f32.mrb[0].mxu0
      %3205 = vmatprep.mubr.f32.mxu0 0.0
      %3206 = vmatmul.mubr.f32.gmra.mrb[0].mxu0 %v3134
      %v3207 = vpop.f32.mrb[0].mxu0
      %v3208 = vadd.f32 0.0, %v3207
      %v3209 = vpop.f32.mrb[0].mxu0
      %3210 = vdwg.mxu0
      %v3211 = vadd.f32 %v2924, %v3203
      %v3212 = vadd.f32 %v2925, %v3208
      %3213 = vrot.lane.b32.xlu0 %v2333, 104
      %v3214 = vpop.permute.xlu0 %3213
      %3215 = vrot.lane.b32.xlu0 %v2338, 104
      %v3216 = vpop.permute.xlu0 %3215
      %3217 = vrot.lane.b32.xlu0 %v2333, 72
      %v3218 = vpop.permute.xlu0 %3217
      %3219 = vrot.lane.b32.xlu0 %v2338, 72
      %v3220 = vpop.permute.xlu0 %3219
      %v3221 = vsel %vm800, %v3214, 0
      %v3223 = vsel %vm800, %v3216, 0
      %v3225 = vsel %vm800, %v3218, 0
      %v3227 = vsel %vm800, %v3220, 0
      %3229 = vmatprep.subr.mxu0 0.0
      %3230 = vmatpush1.xpose.msra.mxu0 %v3225
      %3231 = vmatprep.subr.mxu0 0.0
      %3232 = vmatpush1.xpose.msra.mxu0 %v3227
      %3233 = vmatprep.subr.mxu0 0.0
      %3234 = vmatpush1.xpose.msra.mxu0 0.0
      %3235 = vmatprep.subr.mxu0 0.0
      %3236 = vmatpush1.xpose.msra.mxu0 0.0
      %3237 = vmatprep.subr.mxu0 0.0
      %3238 = vmatpush1.xpose.msra.mxu0 0.0
      %3239 = vmatprep.subr.mxu0 0.0
      %3240 = vmatpush1.xpose.msra.mxu0 0.0
      %3241 = vmatprep.subr.mxu0 0.0
      %3242 = vmatpush1.xpose.msra.mxu0 0.0
      %3243 = vmatprep.subr.mxu0 0.0
      %3244 = vmatpush1.xpose.msra.mxu0 0.0
      %3245 = vmatprep.subr.mxu0 0.0
      %3246 = vmatpush1.xpose.msra.mxu0 0.0
      %3247 = vmatprep.subr.mxu0 0.0
      %3248 = vmatpush1.xpose.msra.mxu0 0.0
      %3249 = vmatprep.subr.mxu0 0.0
      %3250 = vmatpush1.xpose.msra.mxu0 0.0
      %3251 = vmatprep.subr.mxu0 0.0
      %3252 = vmatpush1.xpose.msra.mxu0 0.0
      %3253 = vmatprep.subr.mxu0 0.0
      %3254 = vmatpush1.xpose.msra.mxu0 0.0
      %3255 = vmatprep.subr.mxu0 0.0
      %3256 = vmatpush1.xpose.msra.mxu0 0.0
      %3257 = vmatprep.subr.mxu0 0.0
      %3258 = vmatpush1.xpose.msra.mxu0 0.0
      %3259 = vmatprep.subr.mxu0 0.0
      %3260 = vmatpush1.xpose.msra.mxu0 0.0
      %3261 = vmatprep.subr.mxu0 0.0
      %3262 = vmatpush1.xpose.msra.mxu0 0.0
      %3263 = vmatprep.subr.mxu0 0.0
      %3264 = vmatpush1.xpose.msra.mxu0 0.0
      %3265 = vmatprep.subr.mxu0 0.0
      %3266 = vmatpush1.xpose.msra.mxu0 0.0
      %3267 = vmatprep.subr.mxu0 0.0
      %3268 = vmatpush1.xpose.msra.mxu0 0.0
      %3269 = vmatprep.subr.mxu0 0.0
      %3270 = vmatpush1.xpose.msra.mxu0 0.0
      %3271 = vmatprep.subr.mxu0 0.0
      %3272 = vmatpush1.xpose.msra.mxu0 0.0
      %3273 = vmatprep.subr.mxu0 0.0
      %3274 = vmatpush1.xpose.msra.mxu0 0.0
      %3275 = vmatprep.subr.mxu0 0.0
      %3276 = vmatpush1.xpose.msra.mxu0 0.0
      %3277 = vmatprep.subr.mxu0 0.0
      %3278 = vmatpush1.xpose.msra.mxu0 0.0
      %3279 = vmatprep.subr.mxu0 0.0
      %3280 = vmatpush1.xpose.msra.mxu0 0.0
      %3281 = vmatprep.subr.mxu0 0.0
      %3282 = vmatpush1.xpose.msra.mxu0 0.0
      %3283 = vmatprep.subr.mxu0 0.0
      %3284 = vmatpush1.xpose.msra.mxu0 0.0
      %3285 = vmatprep.subr.mxu0 0.0
      %3286 = vmatpush1.xpose.msra.mxu0 0.0
      %3287 = vmatprep.subr.mxu0 0.0
      %3288 = vmatpush1.xpose.msra.mxu0 0.0
      %3289 = vmatprep.subr.mxu0 0.0
      %3290 = vmatpush1.xpose.msra.mxu0 0.0
      %3291 = vmatprep.subr.mxu0 0.0
      %3292 = vmatpush1.xpose.msra.mxu0 0.0
      %3293 = vmatprep.mubr.f32.mxu0 0.0
      %3294 = vmatmul.mubr.f32.gmra.mrb[0].mxu0 %v3221
      %v3295 = vpop.f32.mrb[0].mxu0
      %v3296 = vadd.f32 0.0, %v3295
      %v3297 = vpop.f32.mrb[0].mxu0
      %3298 = vmatprep.mubr.f32.mxu0 0.0
      %3299 = vmatmul.mubr.f32.gmra.mrb[0].mxu0 %v3223
      %v3300 = vpop.f32.mrb[0].mxu0
      %v3301 = vadd.f32 0.0, %v3300
      %v3302 = vpop.f32.mrb[0].mxu0
      %3303 = vdwg.mxu0
      %v3304 = vmul.f32 %v3296, 0.35355338
      %v3305 = vmul.f32 %v3301, 0.35355338
      %v3306 = vadd.f32 %v3304, %v890
      %v3307 = vadd.f32 %v3305, %v890
      %v3308 = vsel %vm894, %v3306, -inf
      %3309 = vmax.xlane.f32.xlu0 %v3308
      %v3310 = vpop.xlane.xlu0 %3309
      %v3311 = vsel %vm894, %v3307, -inf
      %3312 = vmax.xlane.f32.xlu0 %v3311
      %v3313 = vpop.xlane.xlu0 %3312
      %v3314 = vsub.f32 %v3306, %v3310
      %v3315 = vsub.f32 %v3307, %v3313
      %v3316 = vmul.f32 %v3314, 1.442695
      %v3317 = vpow.pop %v3316
      %v3318 = vmul.f32 %v3315, 1.442695
      %v3319 = vpow.pop %v3318
      %v3320 = vsel %vm894, %v3317, 0.0
      %3321 = vadd.xlane.f32.xlu0 %v3320
      %v3322 = vpop.xlane.xlu0 %3321
      %v3323 = vsel %vm894, %v3319, 0.0
      %3324 = vadd.xlane.f32.xlu0 %v3323
      %v3325 = vpop.xlane.xlu0 %3324
      %v3326 = vrcp.pop %v3322
      %v3327 = vrcp.pop %v3325
      %v3328 = vmul.f32 %v3317, %v3326
      %v3329 = vmul.f32 %v3319, %v3327
      %3330 = vrot.lane.b32.xlu0 %v2333, 40
      %v3331 = vpop.permute.xlu0 %3330
      %3332 = vrot.lane.b32.xlu0 %v2338, 40
      %v3333 = vpop.permute.xlu0 %3332
      %v3337 = vsel %vm894, %v3328, 0
      %v3340 = vsel %vm894, %v3329, 0
      %3342 = vmatprep.subr.mxu0 0.0
      %3343 = vmatpush1.msra.mxu0 %v3331
      %3344 = vmatprep.subr.mxu0 0.0
      %3345 = vmatpush1.msra.mxu0 %v3333
      %3346 = vmatprep.subr.mxu0 0.0
      %3347 = vmatpush1.msra.mxu0 0.0
      %3348 = vmatprep.subr.mxu0 0.0
      %3349 = vmatpush1.msra.mxu0 0.0
      %3350 = vmatprep.subr.mxu0 0.0
      %3351 = vmatpush1.msra.mxu0 0.0
      %3352 = vmatprep.subr.mxu0 0.0
      %3353 = vmatpush1.msra.mxu0 0.0
      %3354 = vmatprep.subr.mxu0 0.0
      %3355 = vmatpush1.msra.mxu0 0.0
      %3356 = vmatprep.subr.mxu0 0.0
      %3357 = vmatpush1.msra.mxu0 0.0
      %3358 = vmatprep.subr.mxu0 0.0
      %3359 = vmatpush1.msra.mxu0 0.0
      %3360 = vmatprep.subr.mxu0 0.0
      %3361 = vmatpush1.msra.mxu0 0.0
      %3362 = vmatprep.subr.mxu0 0.0
      %3363 = vmatpush1.msra.mxu0 0.0
      %3364 = vmatprep.subr.mxu0 0.0
      %3365 = vmatpush1.msra.mxu0 0.0
      %3366 = vmatprep.subr.mxu0 0.0
      %3367 = vmatpush1.msra.mxu0 0.0
      %3368 = vmatprep.subr.mxu0 0.0
      %3369 = vmatpush1.msra.mxu0 0.0
      %3370 = vmatprep.subr.mxu0 0.0
      %3371 = vmatpush1.msra.mxu0 0.0
      %3372 = vmatprep.subr.mxu0 0.0
      %3373 = vmatpush1.msra.mxu0 0.0
      %3374 = vmatprep.subr.mxu0 0.0
      %3375 = vmatpush1.msra.mxu0 0.0
      %3376 = vmatprep.subr.mxu0 0.0
      %3377 = vmatpush1.msra.mxu0 0.0
      %3378 = vmatprep.subr.mxu0 0.0
      %3379 = vmatpush1.msra.mxu0 0.0
      %3380 = vmatprep.subr.mxu0 0.0
      %3381 = vmatpush1.msra.mxu0 0.0
      %3382 = vmatprep.subr.mxu0 0.0
      %3383 = vmatpush1.msra.mxu0 0.0
      %3384 = vmatprep.subr.mxu0 0.0
      %3385 = vmatpush1.msra.mxu0 0.0
      %3386 = vmatprep.subr.mxu0 0.0
      %3387 = vmatpush1.msra.mxu0 0.0
      %3388 = vmatprep.subr.mxu0 0.0
      %3389 = vmatpush1.msra.mxu0 0.0
      %3390 = vmatprep.subr.mxu0 0.0
      %3391 = vmatpush1.msra.mxu0 0.0
      %3392 = vmatprep.subr.mxu0 0.0
      %3393 = vmatpush1.msra.mxu0 0.0
      %3394 = vmatprep.subr.mxu0 0.0
      %3395 = vmatpush1.msra.mxu0 0.0
      %3396 = vmatprep.subr.mxu0 0.0
      %3397 = vmatpush1.msra.mxu0 0.0
      %3398 = vmatprep.subr.mxu0 0.0
      %3399 = vmatpush1.msra.mxu0 0.0
      %3400 = vmatprep.subr.mxu0 0.0
      %3401 = vmatpush1.msra.mxu0 0.0
      %3402 = vmatprep.subr.mxu0 0.0
      %3403 = vmatpush1.msra.mxu0 0.0
      %3404 = vmatprep.subr.mxu0 0.0
      %3405 = vmatpush1.msra.mxu0 0.0
      %3406 = vmatprep.mubr.f32.mxu0 0.0
      %3407 = vmatmul.mubr.f32.gmra.mrb[0].mxu0 %v3337
      %v3408 = vpop.f32.mrb[0].mxu0
      %v3409 = vadd.f32 0.0, %v3408
      %v3410 = vpop.f32.mrb[0].mxu0
      %3411 = vmatprep.mubr.f32.mxu0 0.0
      %3412 = vmatmul.mubr.f32.gmra.mrb[0].mxu0 %v3340
      %v3413 = vpop.f32.mrb[0].mxu0
      %v3414 = vadd.f32 0.0, %v3413
      %v3415 = vpop.f32.mrb[0].mxu0
      %3416 = vdwg.mxu0
      %v3418 = vsel %vm800, %v3409, 0
      %v3421 = vsel %vm800, %v3414, 0
      %3423 = vmatprep.subr.mxu0 0.0
      %3424 = vmatpush1.msra.mxu0 %v2345
      %3425 = vmatprep.subr.mxu0 0.0
      %3426 = vmatpush1.msra.mxu0 0.0
      %3427 = vmatprep.subr.mxu0 0.0
      %3428 = vmatpush1.msra.mxu0 0.0
      %3429 = vmatprep.subr.mxu0 0.0
      %3430 = vmatpush1.msra.mxu0 0.0
      %3431 = vmatprep.subr.mxu0 0.0
      %3432 = vmatpush1.msra.mxu0 0.0
      %3433 = vmatprep.subr.mxu0 0.0
      %3434 = vmatpush1.msra.mxu0 0.0
      %3435 = vmatprep.subr.mxu0 0.0
      %3436 = vmatpush1.msra.mxu0 0.0
      %3437 = vmatprep.subr.mxu0 0.0
      %3438 = vmatpush1.msra.mxu0 0.0
      %3439 = vmatprep.subr.mxu0 0.0
      %3440 = vmatpush1.msra.mxu0 0.0
      %3441 = vmatprep.subr.mxu0 0.0
      %3442 = vmatpush1.msra.mxu0 0.0
      %3443 = vmatprep.subr.mxu0 0.0
      %3444 = vmatpush1.msra.mxu0 0.0
      %3445 = vmatprep.subr.mxu0 0.0
      %3446 = vmatpush1.msra.mxu0 0.0
      %3447 = vmatprep.subr.mxu0 0.0
      %3448 = vmatpush1.msra.mxu0 0.0
      %3449 = vmatprep.subr.mxu0 0.0
      %3450 = vmatpush1.msra.mxu0 0.0
      %3451 = vmatprep.subr.mxu0 0.0
      %3452 = vmatpush1.msra.mxu0 0.0
      %3453 = vmatprep.subr.mxu0 0.0
      %3454 = vmatpush1.msra.mxu0 0.0
      %3455 = vmatprep.subr.mxu0 0.0
      %3456 = vmatpush1.msra.mxu0 0.0
      %3457 = vmatprep.subr.mxu0 0.0
      %3458 = vmatpush1.msra.mxu0 0.0
      %3459 = vmatprep.subr.mxu0 0.0
      %3460 = vmatpush1.msra.mxu0 0.0
      %3461 = vmatprep.subr.mxu0 0.0
      %3462 = vmatpush1.msra.mxu0 0.0
      %3463 = vmatprep.subr.mxu0 0.0
      %3464 = vmatpush1.msra.mxu0 0.0
      %3465 = vmatprep.subr.mxu0 0.0
      %3466 = vmatpush1.msra.mxu0 0.0
      %3467 = vmatprep.subr.mxu0 0.0
      %3468 = vmatpush1.msra.mxu0 0.0
      %3469 = vmatprep.subr.mxu0 0.0
      %3470 = vmatpush1.msra.mxu0 0.0
      %3471 = vmatprep.subr.mxu0 0.0
      %3472 = vmatpush1.msra.mxu0 0.0
      %3473 = vmatprep.subr.mxu0 0.0
      %3474 = vmatpush1.msra.mxu0 0.0
      %3475 = vmatprep.subr.mxu0 0.0
      %3476 = vmatpush1.msra.mxu0 0.0
      %3477 = vmatprep.subr.mxu0 0.0
      %3478 = vmatpush1.msra.mxu0 0.0
      %3479 = vmatprep.subr.mxu0 0.0
      %3480 = vmatpush1.msra.mxu0 0.0
      %3481 = vmatprep.subr.mxu0 0.0
      %3482 = vmatpush1.msra.mxu0 0.0
      %3483 = vmatprep.subr.mxu0 0.0
      %3484 = vmatpush1.msra.mxu0 0.0
      %3485 = vmatprep.subr.mxu0 0.0
      %3486 = vmatpush1.msra.mxu0 0.0
      %3487 = vmatprep.mubr.f32.mxu0 0.0
      %3488 = vmatmul.mubr.f32.gmra.mrb[0].mxu0 %v3418
      %v3489 = vpop.f32.mrb[0].mxu0
      %v3490 = vadd.f32 0.0, %v3489
      %v3491 = vpop.f32.mrb[0].mxu0
      %3492 = vmatprep.mubr.f32.mxu0 0.0
      %3493 = vmatmul.mubr.f32.gmra.mrb[0].mxu0 %v3421
      %v3494 = vpop.f32.mrb[0].mxu0
      %v3495 = vadd.f32 0.0, %v3494
      %v3496 = vpop.f32.mrb[0].mxu0
      %3497 = vdwg.mxu0
      %v3498 = vadd.f32 %v3211, %v3490
      %v3499 = vadd.f32 %v3212, %v3495
      %v3500 = vadd.f32 %v2245, %v3498
      %v3501 = vadd.f32 %v2246, %v3499
      %s3502 = scalar_lea.vmem %s8, 1
      %v3503 = vld [vmem:[%s3502] sm:$0x1]
      %s3504 = scalar_lea.vmem %s9, 1
      %v3505 = vld [vmem:[%s3504] sm:$0x1]
      %v3506 = vsel %vm647, %v3500, 0.0
      %3507 = vadd.xlane.f32.xlu0 %v3506
      %v3508 = vpop.xlane.xlu0 %3507
      %v3509 = vsel %vm647, %v3501, 0.0
      %3510 = vadd.xlane.f32.xlu0 %v3509
      %v3511 = vpop.xlane.xlu0 %3510
      %v3512 = vmul.f32 %v3508, %v654
      %v3513 = vmul.f32 %v3511, %v654
      %v3514 = vsub.f32 %v3500, %v3512
      %v3515 = vsub.f32 %v3501, %v3513
      %v3516 = vmul.f32 %v3514, %v3514
      %v3517 = vmul.f32 %v3515, %v3515
      %v3518 = vsel %vm647, %v3516, 0.0
      %3519 = vadd.xlane.f32.xlu0 %v3518
      %v3520 = vpop.xlane.xlu0 %3519
      %v3521 = vsel %vm647, %v3517, 0.0
      %3522 = vadd.xlane.f32.xlu0 %v3521
      %v3523 = vpop.xlane.xlu0 %3522
      %v3524 = vmul.f32 %v3520, %v654
      %v3525 = vmul.f32 %v3523, %v654
      %v3526 = vadd.f32 %v3524, 1e-12
      %v3527 = vadd.f32 %v3525, 1e-12
      %v3528 = vrsqrt.pop %v3526
      %v3529 = vrsqrt.pop %v3527
      %v3530 = vmul.f32 %v3514, %v3528
      %v3531 = vmul.f32 %v3515, %v3529
      %v3533 = vlaneseq
      %v3534 = vshrl.u32 %v3533, 7
      %v3535 = vsub.s32 0, %v3534
      %v3536 = vrot.slane %v3503, %v3535
      %v3538 = vmul.f32 %v3530, %v3536
      %v3539 = vmul.f32 %v3531, %v3536
      %v3541 = vlaneseq
      %v3542 = vshrl.u32 %v3541, 7
      %v3543 = vsub.s32 0, %v3542
      %v3544 = vrot.slane %v3505, %v3543
      %v3546 = vadd.f32 %v3538, %v3544
      %v3547 = vadd.f32 %v3539, %v3544
      %s3548 = scalar_lea.vmem %s10, 32
      %v3549 = vld [vmem:[%s3548] sm:$0xff]
      %v3550 = vld [vmem:[%s3548 + $0x8] sm:$0xff]
      %v3551 = vld [vmem:[%s3548 + $0x10] sm:$0xff]
      %v3552 = vld [vmem:[%s3548 + $0x18] sm:$0xff]
      %s3553 = scalar_lea.vmem %s11, 1
      %v3554 = vld [vmem:[%s3553] sm:$0x1]
      %v3556 = vlaneseq
      %v3557 = vshrl.u32 %v3556, 7
      %v3558 = vsub.s32 0, %v3557
      %v3559 = vrot.slane %v3554, %v3558
      %v3562 = vsel %vm647, %v3546, 0
      %v3565 = vsel %vm647, %v3547, 0
      %3567 = vmatprep.subr.mxu0 0.0
      %3568 = vmatpush1.msra.mxu0 %v3549
      %3569 = vmatprep.subr.mxu0 0.0
      %3570 = vmatpush1.msra.mxu0 %v3550
      %3571 = vmatprep.subr.mxu0 0.0
      %3572 = vmatpush1.msra.mxu0 %v3551
      %3573 = vmatprep.subr.mxu0 0.0
      %3574 = vmatpush1.msra.mxu0 %v3552
      %3575 = vmatprep.subr.mxu0 0.0
      %3576 = vmatpush1.msra.mxu0 0.0
      %3577 = vmatprep.subr.mxu0 0.0
      %3578 = vmatpush1.msra.mxu0 0.0
      %3579 = vmatprep.subr.mxu0 0.0
      %3580 = vmatpush1.msra.mxu0 0.0
      %3581 = vmatprep.subr.mxu0 0.0
      %3582 = vmatpush1.msra.mxu0 0.0
      %3583 = vmatprep.subr.mxu0 0.0
      %3584 = vmatpush1.msra.mxu0 0.0
      %3585 = vmatprep.subr.mxu0 0.0
      %3586 = vmatpush1.msra.mxu0 0.0
      %3587 = vmatprep.subr.mxu0 0.0
      %3588 = vmatpush1.msra.mxu0 0.0
      %3589 = vmatprep.subr.mxu0 0.0
      %3590 = vmatpush1.msra.mxu0 0.0
      %3591 = vmatprep.subr.mxu0 0.0
      %3592 = vmatpush1.msra.mxu0 0.0
      %3593 = vmatprep.subr.mxu0 0.0
      %3594 = vmatpush1.msra.mxu0 0.0
      %3595 = vmatprep.subr.mxu0 0.0
      %3596 = vmatpush1.msra.mxu0 0.0
      %3597 = vmatprep.subr.mxu0 0.0
      %3598 = vmatpush1.msra.mxu0 0.0
      %3599 = vmatprep.subr.mxu0 0.0
      %3600 = vmatpush1.msra.mxu0 0.0
      %3601 = vmatprep.subr.mxu0 0.0
      %3602 = vmatpush1.msra.mxu0 0.0
      %3603 = vmatprep.subr.mxu0 0.0
      %3604 = vmatpush1.msra.mxu0 0.0
      %3605 = vmatprep.subr.mxu0 0.0
      %3606 = vmatpush1.msra.mxu0 0.0
      %3607 = vmatprep.subr.mxu0 0.0
      %3608 = vmatpush1.msra.mxu0 0.0
      %3609 = vmatprep.subr.mxu0 0.0
      %3610 = vmatpush1.msra.mxu0 0.0
      %3611 = vmatprep.subr.mxu0 0.0
      %3612 = vmatpush1.msra.mxu0 0.0
      %3613 = vmatprep.subr.mxu0 0.0
      %3614 = vmatpush1.msra.mxu0 0.0
      %3615 = vmatprep.subr.mxu0 0.0
      %3616 = vmatpush1.msra.mxu0 0.0
      %3617 = vmatprep.subr.mxu0 0.0
      %3618 = vmatpush1.msra.mxu0 0.0
      %3619 = vmatprep.subr.mxu0 0.0
      %3620 = vmatpush1.msra.mxu0 0.0
      %3621 = vmatprep.subr.mxu0 0.0
      %3622 = vmatpush1.msra.mxu0 0.0
      %3623 = vmatprep.subr.mxu0 0.0
      %3624 = vmatpush1.msra.mxu0 0.0
      %3625 = vmatprep.subr.mxu0 0.0
      %3626 = vmatpush1.msra.mxu0 0.0
      %3627 = vmatprep.subr.mxu0 0.0
      %3628 = vmatpush1.msra.mxu0 0.0
      %3629 = vmatprep.subr.mxu0 0.0
      %3630 = vmatpush1.msra.mxu0 0.0
      %3631 = vmatprep.mubr.f32.mxu0 0.0
      %3632 = vmatmul.mubr.f32.gmra.mrb[0].mxu0 %v3562
      %v3633 = vpop.f32.mrb[0].mxu0
      %v3634 = vadd.f32 %v3559, %v3633
      %v3635 = vpop.f32.mrb[0].mxu0
      %3636 = vmatprep.mubr.f32.mxu0 0.0
      %3637 = vmatmul.mubr.f32.gmra.mrb[0].mxu0 %v3565
      %v3638 = vpop.f32.mrb[0].mxu0
      %v3639 = vadd.f32 %v3559, %v3638
      %v3640 = vpop.f32.mrb[0].mxu0
      %3641 = vdwg.mxu0
      %v3642 = vmul.f32 %v3634, 0.5
      %v3643 = vmul.f32 %v3639, 0.5
      %v3644 = vmul.f32 %v3634, 0.044715
      %v3645 = vmul.f32 %v3639, 0.044715
      %v3646 = vmul.f32 %v3644, %v3634
      %v3647 = vmul.f32 %v3645, %v3639
      %v3648 = vmul.f32 %v3646, %v3634
      %v3649 = vmul.f32 %v3647, %v3639
      %v3650 = vadd.f32 %v3634, %v3648
      %v3651 = vadd.f32 %v3639, %v3649
      %v3652 = vmul.f32 %v3650, 0.7978846
      %v3653 = vmul.f32 %v3651, 0.7978846
      %v3654 = vtanh.pop %v3652
      %v3655 = vtanh.pop %v3653
      %v3656 = vadd.f32 %v3654, 1.0
      %v3657 = vadd.f32 %v3655, 1.0
      %v3658 = vmul.f32 %v3642, %v3656
      %v3659 = vmul.f32 %v3643, %v3657
      %s3660 = scalar_lea.vmem %s12, 64
      %v3661 = vld [vmem:[%s3660] sm:$0xff]
      %v3662 = vld [vmem:[%s3660 + $0x8] sm:$0xff]
      %v3663 = vld [vmem:[%s3660 + $0x10] sm:$0xff]
      %v3664 = vld [vmem:[%s3660 + $0x18] sm:$0xff]
      %v3665 = vld [vmem:[%s3660 + $0x20] sm:$0xff]
      %v3666 = vld [vmem:[%s3660 + $0x28] sm:$0xff]
      %v3667 = vld [vmem:[%s3660 + $0x30] sm:$0xff]
      %v3668 = vld [vmem:[%s3660 + $0x38] sm:$0xff]
      %s3669 = scalar_lea.vmem %s13, 1
      %v3670 = vld [vmem:[%s3669] sm:$0x1]
      %v3672 = vlaneseq
      %v3673 = vshrl.u32 %v3672, 7
      %v3674 = vsub.s32 0, %v3673
      %v3675 = vrot.slane %v3670, %v3674
      %v3678 = vsel %vm2119, %v3658, 0
      %v3681 = vsel %vm2119, %v3659, 0
      %3683 = vmatprep.subr.mxu0 0.0
      %3684 = vmatpush1.msra.mxu0 %v3661
      %3685 = vmatprep.subr.mxu0 0.0
      %3686 = vmatpush1.msra.mxu0 %v3662
      %3687 = vmatprep.subr.mxu0 0.0
      %3688 = vmatpush1.msra.mxu0 %v3663
      %3689 = vmatprep.subr.mxu0 0.0
      %3690 = vmatpush1.msra.mxu0 %v3664
      %3691 = vmatprep.subr.mxu0 0.0
      %3692 = vmatpush1.msra.mxu0 %v3665
      %3693 = vmatprep.subr.mxu0 0.0
      %3694 = vmatpush1.msra.mxu0 %v3666
      %3695 = vmatprep.subr.mxu0 0.0
      %3696 = vmatpush1.msra.mxu0 %v3667
      %3697 = vmatprep.subr.mxu0 0.0
      %3698 = vmatpush1.msra.mxu0 %v3668
      %3699 = vmatprep.subr.mxu0 0.0
      %3700 = vmatpush1.msra.mxu0 0.0
      %3701 = vmatprep.subr.mxu0 0.0
      %3702 = vmatpush1.msra.mxu0 0.0
      %3703 = vmatprep.subr.mxu0 0.0
      %3704 = vmatpush1.msra.mxu0 0.0
      %3705 = vmatprep.subr.mxu0 0.0
      %3706 = vmatpush1.msra.mxu0 0.0
      %3707 = vmatprep.subr.mxu0 0.0
      %3708 = vmatpush1.msra.mxu0 0.0
      %3709 = vmatprep.subr.mxu0 0.0
      %3710 = vmatpush1.msra.mxu0 0.0
      %3711 = vmatprep.subr.mxu0 0.0
      %3712 = vmatpush1.msra.mxu0 0.0
      %3713 = vmatprep.subr.mxu0 0.0
      %3714 = vmatpush1.msra.mxu0 0.0
      %3715 = vmatprep.subr.mxu0 0.0
      %3716 = vmatpush1.msra.mxu0 0.0
      %3717 = vmatprep.subr.mxu0 0.0
      %3718 = vmatpush1.msra.mxu0 0.0
      %3719 = vmatprep.subr.mxu0 0.0
      %3720 = vmatpush1.msra.mxu0 0.0
      %3721 = vmatprep.subr.mxu0 0.0
      %3722 = vmatpush1.msra.mxu0 0.0
      %3723 = vmatprep.subr.mxu0 0.0
      %3724 = vmatpush1.msra.mxu0 0.0
      %3725 = vmatprep.subr.mxu0 0.0
      %3726 = vmatpush1.msra.mxu0 0.0
      %3727 = vmatprep.subr.mxu0 0.0
      %3728 = vmatpush1.msra.mxu0 0.0
      %3729 = vmatprep.subr.mxu0 0.0
      %3730 = vmatpush1.msra.mxu0 0.0
      %3731 = vmatprep.subr.mxu0 0.0
      %3732 = vmatpush1.msra.mxu0 0.0
      %3733 = vmatprep.subr.mxu0 0.0
      %3734 = vmatpush1.msra.mxu0 0.0
      %3735 = vmatprep.subr.mxu0 0.0
      %3736 = vmatpush1.msra.mxu0 0.0
      %3737 = vmatprep.subr.mxu0 0.0
      %3738 = vmatpush1.msra.mxu0 0.0
      %3739 = vmatprep.subr.mxu0 0.0
      %3740 = vmatpush1.msra.mxu0 0.0
      %3741 = vmatprep.subr.mxu0 0.0
      %3742 = vmatpush1.msra.mxu0 0.0
      %3743 = vmatprep.subr.mxu0 0.0
      %3744 = vmatpush1.msra.mxu0 0.0
      %3745 = vmatprep.subr.mxu0 0.0
      %3746 = vmatpush1.msra.mxu0 0.0
      %3747 = vmatprep.mubr.f32.mxu0 0.0
      %3748 = vmatmul.mubr.f32.gmra.mrb[0].mxu0 %v3678
      %v3749 = vpop.f32.mrb[0].mxu0
      %v3750 = vadd.f32 %v3675, %v3749
      %v3751 = vpop.f32.mrb[0].mxu0
      %3752 = vmatprep.mubr.f32.mxu0 0.0
      %3753 = vmatmul.mubr.f32.gmra.mrb[0].mxu0 %v3681
      %v3754 = vpop.f32.mrb[0].mxu0
      %v3755 = vpop.f32.mrb[0].mxu0
      %3756 = vdwg.mxu0
      %v3757 = vadd.f32 %v3546, %v3750
      %s3758 = scalar_lea.vmem %s14, 1
      %v3759 = vld [vmem:[%s3758] sm:$0x1]
      %s3760 = scalar_lea.vmem %s15, 1
      %v3761 = vld [vmem:[%s3760] sm:$0x1]
      %v3762 = vsel %vm647, %v3757, 0.0
      %3763 = vadd.xlane.f32.xlu0 %v3762
      %v3764 = vpop.xlane.xlu0 %3763
      %v3765 = vmul.f32 %v3764, %v654
      %v3766 = vsub.f32 %v3757, %v3765
      %v3767 = vmul.f32 %v3766, %v3766
      %v3768 = vsel %vm647, %v3767, 0.0
      %3769 = vadd.xlane.f32.xlu0 %v3768
      %v3770 = vpop.xlane.xlu0 %3769
      %v3771 = vmul.f32 %v3770, %v654
      %v3772 = vadd.f32 %v3771, 1e-12
      %v3773 = vrsqrt.pop %v3772
      %v3774 = vmul.f32 %v3766, %v3773
      %v3776 = vlaneseq
      %v3777 = vshrl.u32 %v3776, 7
      %v3778 = vsub.s32 0, %v3777
      %v3779 = vrot.slane %v3759, %v3778
      %v3781 = vmul.f32 %v3774, %v3779
      %v3783 = vlaneseq
      %v3784 = vshrl.u32 %v3783, 7
      %v3785 = vsub.s32 0, %v3784
      %v3786 = vrot.slane %v3761, %v3785
      %v3788 = vadd.f32 %v3781, %v3786
      %v3789 = vld [vmem:[%s16] sm:$0xff]
      %v3790 = vld [vmem:[%s16 + $0x8] sm:$0xff]
      %v3791 = vld [vmem:[%s16 + $0x10] sm:$0xff]
      %v3792 = vld [vmem:[%s16 + $0x18] sm:$0xff]
      %v3793 = vld [vmem:[%s17] sm:$0x1]
      %v3795 = vsel %vm647, %v3788, 0
      %3797 = vmatprep.subr.mxu0 0.0
      %3798 = vmatpush1.msra.mxu0 %v3789
      %3799 = vmatprep.subr.mxu0 0.0
      %3800 = vmatpush1.msra.mxu0 %v3790
      %3801 = vmatprep.subr.mxu0 0.0
      %3802 = vmatpush1.msra.mxu0 %v3791
      %3803 = vmatprep.subr.mxu0 0.0
      %3804 = vmatpush1.msra.mxu0 %v3792
      %3805 = vmatprep.subr.mxu0 0.0
      %3806 = vmatpush1.msra.mxu0 0.0
      %3807 = vmatprep.subr.mxu0 0.0
      %3808 = vmatpush1.msra.mxu0 0.0
      %3809 = vmatprep.subr.mxu0 0.0
      %3810 = vmatpush1.msra.mxu0 0.0
      %3811 = vmatprep.subr.mxu0 0.0
      %3812 = vmatpush1.msra.mxu0 0.0
      %3813 = vmatprep.subr.mxu0 0.0
      %3814 = vmatpush1.msra.mxu0 0.0
      %3815 = vmatprep.subr.mxu0 0.0
      %3816 = vmatpush1.msra.mxu0 0.0
      %3817 = vmatprep.subr.mxu0 0.0
      %3818 = vmatpush1.msra.mxu0 0.0
      %3819 = vmatprep.subr.mxu0 0.0
      %3820 = vmatpush1.msra.mxu0 0.0
      %3821 = vmatprep.subr.mxu0 0.0
      %3822 = vmatpush1.msra.mxu0 0.0
      %3823 = vmatprep.subr.mxu0 0.0
      %3824 = vmatpush1.msra.mxu0 0.0
      %3825 = vmatprep.subr.mxu0 0.0
      %3826 = vmatpush1.msra.mxu0 0.0
      %3827 = vmatprep.subr.mxu0 0.0
      %3828 = vmatpush1.msra.mxu0 0.0
      %3829 = vmatprep.subr.mxu0 0.0
      %3830 = vmatpush1.msra.mxu0 0.0
      %3831 = vmatprep.subr.mxu0 0.0
      %3832 = vmatpush1.msra.mxu0 0.0
      %3833 = vmatprep.subr.mxu0 0.0
      %3834 = vmatpush1.msra.mxu0 0.0
      %3835 = vmatprep.subr.mxu0 0.0
      %3836 = vmatpush1.msra.mxu0 0.0
      %3837 = vmatprep.subr.mxu0 0.0
      %3838 = vmatpush1.msra.mxu0 0.0
      %3839 = vmatprep.subr.mxu0 0.0
      %3840 = vmatpush1.msra.mxu0 0.0
      %3841 = vmatprep.subr.mxu0 0.0
      %3842 = vmatpush1.msra.mxu0 0.0
      %3843 = vmatprep.subr.mxu0 0.0
      %3844 = vmatpush1.msra.mxu0 0.0
      %3845 = vmatprep.subr.mxu0 0.0
      %3846 = vmatpush1.msra.mxu0 0.0
      %3847 = vmatprep.subr.mxu0 0.0
      %3848 = vmatpush1.msra.mxu0 0.0
      %3849 = vmatprep.subr.mxu0 0.0
      %3850 = vmatpush1.msra.mxu0 0.0
      %3851 = vmatprep.subr.mxu0 0.0
      %3852 = vmatpush1.msra.mxu0 0.0
      %3853 = vmatprep.subr.mxu0 0.0
      %3854 = vmatpush1.msra.mxu0 0.0
      %3855 = vmatprep.subr.mxu0 0.0
      %3856 = vmatpush1.msra.mxu0 0.0
      %3857 = vmatprep.subr.mxu0 0.0
      %3858 = vmatpush1.msra.mxu0 0.0
      %3859 = vmatprep.subr.mxu0 0.0
      %3860 = vmatpush1.msra.mxu0 0.0
      %3861 = vmatprep.mubr.f32.mxu0 0.0
      %3862 = vmatmul.mubr.f32.gmra.mrb[0].mxu0 %v3795
      %v3863 = vpop.f32.mrb[0].mxu0
      %v3864 = vadd.f32 %v3793, %v3863
      %v3865 = vpop.f32.mrb[0].mxu0
      %3866 = vdwg.mxu0
      %v3867 = vtanh.pop %v3864
      %v3868 = vld [vmem:[%s18] sm:$0xff]
      %v3869 = vld [vmem:[%s18 + $0x8] sm:$0xff]
      %v3870 = vld [vmem:[%s18 + $0x10] sm:$0xff]
      %v3871 = vld [vmem:[%s18 + $0x18] sm:$0xff]
      %v3872 = vld [vmem:[#allocation2] sm:$0x1]
      %v3874 = vsel %vm647, %v3867, 0
      %3876 = vmatprep.subr.mxu0 0.0
      %3877 = vmatpush1.msra.mxu0 %v3868
      %3878 = vmatprep.subr.mxu0 0.0
      %3879 = vmatpush1.msra.mxu0 %v3869
      %3880 = vmatprep.subr.mxu0 0.0
      %3881 = vmatpush1.msra.mxu0 %v3870
      %3882 = vmatprep.subr.mxu0 0.0
      %3883 = vmatpush1.msra.mxu0 %v3871
      %3884 = vmatprep.subr.mxu0 0.0
      %3885 = vmatpush1.msra.mxu0 0.0
      %3886 = vmatprep.subr.mxu0 0.0
      %3887 = vmatpush1.msra.mxu0 0.0
      %3888 = vmatprep.subr.mxu0 0.0
      %3889 = vmatpush1.msra.mxu0 0.0
      %3890 = vmatprep.subr.mxu0 0.0
      %3891 = vmatpush1.msra.mxu0 0.0
      %3892 = vmatprep.subr.mxu0 0.0
      %3893 = vmatpush1.msra.mxu0 0.0
      %3894 = vmatprep.subr.mxu0 0.0
      %3895 = vmatpush1.msra.mxu0 0.0
      %3896 = vmatprep.subr.mxu0 0.0
      %3897 = vmatpush1.msra.mxu0 0.0
      %3898 = vmatprep.subr.mxu0 0.0
      %3899 = vmatpush1.msra.mxu0 0.0
      %3900 = vmatprep.subr.mxu0 0.0
      %3901 = vmatpush1.msra.mxu0 0.0
      %3902 = vmatprep.subr.mxu0 0.0
      %3903 = vmatpush1.msra.mxu0 0.0
      %3904 = vmatprep.subr.mxu0 0.0
      %3905 = vmatpush1.msra.mxu0 0.0
      %3906 = vmatprep.subr.mxu0 0.0
      %3907 = vmatpush1.msra.mxu0 0.0
      %3908 = vmatprep.subr.mxu0 0.0
      %3909 = vmatpush1.msra.mxu0 0.0
      %3910 = vmatprep.subr.mxu0 0.0
      %3911 = vmatpush1.msra.mxu0 0.0
      %3912 = vmatprep.subr.mxu0 0.0
      %3913 = vmatpush1.msra.mxu0 0.0
      %3914 = vmatprep.subr.mxu0 0.0
      %3915 = vmatpush1.msra.mxu0 0.0
      %3916 = vmatprep.subr.mxu0 0.0
      %3917 = vmatpush1.msra.mxu0 0.0
      %3918 = vmatprep.subr.mxu0 0.0
      %3919 = vmatpush1.msra.mxu0 0.0
      %3920 = vmatprep.subr.mxu0 0.0
      %3921 = vmatpush1.msra.mxu0 0.0
      %3922 = vmatprep.subr.mxu0 0.0
      %3923 = vmatpush1.msra.mxu0 0.0
      %3924 = vmatprep.subr.mxu0 0.0
      %3925 = vmatpush1.msra.mxu0 0.0
      %3926 = vmatprep.subr.mxu0 0.0
      %3927 = vmatpush1.msra.mxu0 0.0
      %3928 = vmatprep.subr.mxu0 0.0
      %3929 = vmatpush1.msra.mxu0 0.0
      %3930 = vmatprep.subr.mxu0 0.0
      %3931 = vmatpush1.msra.mxu0 0.0
      %3932 = vmatprep.subr.mxu0 0.0
      %3933 = vmatpush1.msra.mxu0 0.0
      %3934 = vmatprep.subr.mxu0 0.0
      %3935 = vmatpush1.msra.mxu0 0.0
      %3936 = vmatprep.subr.mxu0 0.0
      %3937 = vmatpush1.msra.mxu0 0.0
      %3938 = vmatprep.subr.mxu0 0.0
      %3939 = vmatpush1.msra.mxu0 0.0
      %3940 = vmatprep.mubr.f32.mxu0 0.0
      %3941 = vmatmul.mubr.f32.gmra.mrb[0].mxu0 %v3874
      %v3942 = vpop.f32.mrb[0].mxu0
      %v3943 = vadd.f32 %v3872, %v3942
      %v3944 = vpop.f32.mrb[0].mxu0
      %3945 = vdwg.mxu0
      %vm3946 = vcmask 0
      %3947 = vst.msk [vmem:[%s641] sm:$0x1] %vm3946, %v3943
      %p3948 = scmp.lt.s32.totalorder %s33, 1
      %s3949 = scalar_select %p3948, %s33, 1
      %s3950 = scalar_lea.vmem %s20, %s3949
      // Predicated region
      $region101: #{_device_forward.1} parent=99 // pred_check
        %p3951 = pneg %p481
      $region102: #{_device_forward.1} parent=99 // pred_check_branch
        %3953 = sbr.rel (%p3951) target = $region104
      $region103: #{_device_forward.1} parent=99 // pred_region
        _
      $region104: #{_device_forward.1} parent=99 // pred_fallthru
        _
    $region100: #{_device_forward.1} parent=5 // pred_fallthru
      _
    %p3954 = scmp.le.s32.totalorder 2, %s28
    // Predicated region
    $region105: #{_device_forward.1} parent=5 // pred_check
      %p3955 = pneg %p3954
    $region106: #{_device_forward.1} parent=5 // pred_check_branch
      %3957 = sbr.rel (%p3955) target = $region108
    $region107: #{_device_forward.1} parent=5 // pred_region
      %s3958 = ssub.s32 %s28, 2
      // Predicated region
      $region109: #{_device_forward.1} parent=107 // pred_check
        %p3959 = pneg %p487
      $region110: #{_device_forward.1} parent=107 // pred_check_branch
        %3961 = sbr.rel (%p3959) target = $region112
      $region111: #{_device_forward.1} parent=107 // pred_region
        %p3962 = scmp.lt.s32.totalorder %s34, 1
        %s3963 = scalar_select %p3962, %s34, 1
        %s3964 = scalar_lea.vmem %s20, %s3963
      $region112: #{_device_forward.1} parent=107 // pred_fallthru
        _
    $region108: #{_device_forward.1} parent=5 // pred_fallthru
      _
  $region6: #{_device_forward.1} parent=0 // loop_footer
    %s32 = sadd.s32 1, %s28
  $region7: #{_device_forward.1} parent=0 // loop_footer_branch
    %27 = sbr.rel target = $region3
  $region8: #{_device_forward.1} parent=0 // loop_exit
    _

</llo_original>
